<compile_context>
chip_gen: v7x
topology: tpu7x:2x2x1
jax: 0.10.0
libtpu: 0.0.40
codegen_flags: <defaults>
</compile_context>

<pallas_src>
import jax
import jax.numpy as jnp
from jax import lax
from jax.experimental import pallas as pl
from jax.experimental.pallas import tpu as pltpu

_EXPANSION = 4
_EPS = 1e-5
_LANE = 128


def _round_up(x, m):
    return (x + m - 1) // m * m


# ------------------------------ fused kernel ---------------------------------

def _bottleneck_kernel(x_ref, w1_ref, w2_ref, w3_ref,
                       s1_ref, b1_ref, s2_ref, b2_ref, s3_ref, b3_ref,
                       o_ref, h1_ref):
    """One batch element per grid step; all intermediates stay in VMEM."""
    _, H, W, Cin = x_ref.shape
    Cmid = w1_ref.shape[-1]          # planes, zero-padded to a multiple of 128
    Cout = o_ref.shape[-1]
    M = H * W

    x2d = x_ref[0].reshape(M, Cin)                         # bf16 (M, Cin)

    # ---- conv1 (1x1) + bn1 + relu (f32 epilogue) ----
    y1 = jnp.dot(x2d, w1_ref[...], preferred_element_type=jnp.float32)
    y1 = jnp.maximum(y1 * s1_ref[...] + b1_ref[...], 0.0).reshape(H, W, Cmid)

    # ---- in-kernel halo: assemble zero-padded h1 and park it in VMEM ----
    zc = jnp.zeros((H, 1, Cmid), jnp.float32)
    zr = jnp.zeros((1, W + 2, Cmid), jnp.float32)
    h1_ref[...] = jnp.concatenate(
        [zr, jnp.concatenate([zc, y1, zc], axis=1), zr], axis=0)

    # ---- conv2 (3x3, stride 1, pad 1): im2col + single K=9*Cmid matmul ----
    taps = [h1_ref[ky:ky + H, kx:kx + W, :]
            .reshape(M, Cmid).astype(jnp.bfloat16)
            for ky in range(3) for kx in range(3)]
    patch = jnp.concatenate(taps, axis=-1)                 # (M, 9*Cmid) bf16
    y2 = jnp.dot(patch, w2_ref[...], preferred_element_type=jnp.float32)
    y2 = jnp.maximum(y2 * s2_ref[...] + b2_ref[...], 0.0)

    # ---- conv3 (1x1) + bn3 + residual add + relu ----
    y3 = jnp.dot(y2.astype(jnp.bfloat16), w3_ref[...],
                 preferred_element_type=jnp.float32)
    out = y3 * s3_ref[...] + b3_ref[...] + x2d.astype(jnp.float32)
    o_ref[0] = jnp.maximum(out, 0.0).reshape(H, W, Cout).astype(o_ref.dtype)


# ------------------------------- wrapper --------------------------------------

def _fold_bn(gamma, beta, mean, var):
    scale = gamma / jnp.sqrt(var + _EPS)
    bias = beta - mean * scale
    return (scale.reshape(1, -1).astype(jnp.float32),
            bias.reshape(1, -1).astype(jnp.float32))


def _pad_last(a, target):
    pad = target - a.shape[-1]
    if pad == 0:
        return a
    widths = [(0, 0)] * (a.ndim - 1) + [(0, pad)]
    return jnp.pad(a, widths)


def bottleneck_forward(x_nchw, params):
    """Bottleneck forward (stride=1, downsample=None). NCHW in -> NCHW out."""
    N, Cin, H, W = x_nchw.shape
    planes = params["w1"].shape[1]
    Cout = planes * _EXPANSION
    assert Cin == Cout, "downsample=None requires inplanes == planes*expansion"

    Cmid = _round_up(planes, _LANE)   # lane-dense intermediate channel dim

    # NCHW -> NHWC once, bf16 for the MXU (residual is re-widened in-kernel).
    x = jnp.transpose(x_nchw, (0, 2, 3, 1)).astype(jnp.bfloat16)

    # Fold eval-mode BN into per-channel scale/bias (f32); pad planes -> Cmid.
    s1, b1 = _fold_bn(*params["bn1"])
    s2, b2 = _fold_bn(*params["bn2"])
    s3, b3 = _fold_bn(*params["bn3"])
    s1, b1 = _pad_last(s1, Cmid), _pad_last(b1, Cmid)
    s2, b2 = _pad_last(s2, Cmid), _pad_last(b2, Cmid)

    # Weights: 1x1 convs as matmul matrices; 3x3 as (9*Cmid, Cmid) for one
    # im2col matmul.  Padded channels carry zero weights (no effect on result).
    w1 = _pad_last(params["w1"], Cmid).astype(jnp.bfloat16)          # (Cin, Cmid)
    w2 = jnp.pad(params["w2"],
                 ((0, 0), (0, Cmid - planes), (0, Cmid - planes)))
    w2 = w2.reshape(9 * Cmid, Cmid).astype(jnp.bfloat16)             # (9*Cmid, Cmid)
    w3 = jnp.pad(params["w3"],
                 ((0, Cmid - planes), (0, 0))).astype(jnp.bfloat16)  # (Cmid, Cout)

    flops = 2 * N * H * W * (Cin * Cmid + 9 * Cmid * Cmid + Cmid * Cout)
    bytes_accessed = (x.size * 2 + N * H * W * Cout * 4
                      + (w1.size + w2.size + w3.size) * 2
                      + (s1.size + b1.size + s2.size + b2.size
                         + s3.size + b3.size) * 4)

    zero2 = lambda n: (0, 0)

    out_nhwc = pl.pallas_call(
        _bottleneck_kernel,
        out_shape=jax.ShapeDtypeStruct((N, H, W, Cout), jnp.float32),
        grid_spec=pltpu.PrefetchScalarGridSpec(
            num_scalar_prefetch=0,
            grid=(N,),
            in_specs=[
                pl.BlockSpec((1, H, W, Cin), lambda n: (n, 0, 0, 0)),   # x
                pl.BlockSpec((Cin, Cmid), zero2),                        # w1
                pl.BlockSpec((9 * Cmid, Cmid), zero2),                   # w2
                pl.BlockSpec((Cmid, Cout), zero2),                       # w3
                pl.BlockSpec((1, Cmid), zero2),                          # s1
                pl.BlockSpec((1, Cmid), zero2),                          # b1
                pl.BlockSpec((1, Cmid), zero2),                          # s2
                pl.BlockSpec((1, Cmid), zero2),                          # b2
                pl.BlockSpec((1, Cout), zero2),                          # s3
                pl.BlockSpec((1, Cout), zero2),                          # b3
            ],
            out_specs=pl.BlockSpec((1, H, W, Cout), lambda n: (n, 0, 0, 0)),
            scratch_shapes=[pltpu.VMEM((H + 2, W + 2, Cmid), jnp.float32)],
        ),
        compiler_params=pltpu.CompilerParams(
            dimension_semantics=("parallel",),
            vmem_limit_bytes=32 * 1024 * 1024,
        ),
        cost_estimate=pl.CostEstimate(
            flops=flops, transcendentals=0, bytes_accessed=bytes_accessed),
    )(x, w1, w2, w3, s1, b1, s2, b2, s3, b3)

    return jnp.transpose(out_nhwc, (0, 3, 1, 2))            # back to NCHW


# ----------------------------- parameter setup --------------------------------

def init_params(key, inplanes, planes):
    ks = jax.random.split(key, 6)
    Cout = planes * _EXPANSION

    def bn(k, c):
        kg, kb, km, kv = jax.random.split(k, 4)
        gamma = 1.0 + 0.1 * jax.random.normal(kg, (c,), jnp.float32)
        beta = 0.1 * jax.random.normal(kb, (c,), jnp.float32)
        mean = 0.1 * jax.random.normal(km, (c,), jnp.float32)
        var = jax.random.uniform(kv, (c,), jnp.float32, 0.5, 1.5)
        return gamma, beta, mean, var

    return {
        # 1x1 conv weights stored as (Cin, Cout) matmul matrices
        "w1": 0.1 * jax.random.normal(ks[0], (inplanes, planes), jnp.float32),
        # 3x3 conv weights stored as (9, Cin, Cout)  (tap index = ky*3+kx)
        "w2": 0.1 * jax.random.normal(ks[1], (9, planes, planes), jnp.float32),
        "w3": 0.1 * jax.random.normal(ks[2], (planes, Cout), jnp.float32),
        "bn1": bn(ks[3], planes),
        "bn2": bn(ks[4], planes),
        "bn3": bn(ks[5], Cout),
    }


# ---------------------------- pure-JAX reference -------------------------------

def reference_forward(x_nchw, params):
    x = jnp.transpose(x_nchw, (0, 2, 3, 1)).astype(jnp.float32)  # NHWC

    def bn_relu(y, bnp, relu=True):
        g, b, m, v = bnp
        y = (y - m) / jnp.sqrt(v + _EPS) * g + b
        return jnp.maximum(y, 0.0) if relu else y

    h = jnp.einsum("nhwc,cd->nhwd", x, params["w1"])
    h = bn_relu(h, params["bn1"])
    w_hwio = params["w2"].reshape(3, 3, *params["w2"].shape[1:])
    h = lax.conv_general_dilated(h, w_hwio, (1, 1), "SAME",
                                 dimension_numbers=("NHWC", "HWIO", "NHWC"))
    h = bn_relu(h, params["bn2"])
    h = jnp.einsum("nhwc,cd->nhwd", h, params["w3"])
    h = bn_relu(h, params["bn3"], relu=False)
    out = jnp.maximum(h + x, 0.0)
    return jnp.transpose(out, (0, 3, 1, 2))


# ----------------------------------- main --------------------------------------

if __name__ == "__main__":
    N, H, W = 2, 16, 16
    planes = 4
    inplanes = planes * _EXPANSION   # 16 -> residual add works (downsample=None)

    key = jax.random.PRNGKey(0)
    kx, kp = jax.random.split(key)
    x = jax.random.normal(kx, (N, inplanes, H, W), jnp.float32)   # NCHW input
    params = init_params(kp, inplanes, planes)

    out = jax.block_until_ready(jax.jit(bottleneck_forward)(x, params))
    ref = jax.block_until_ready(reference_forward(x, params))

    assert out.shape == (N, inplanes, H, W)
    # bf16 matmul inputs (f32 accumulation) -> loosened tolerance vs f32 ref.
    assert jnp.allclose(out, ref, atol=5e-2, rtol=5e-2), \
        f"max abs diff {jnp.max(jnp.abs(out - ref))}"

    print("KERNEL_OK")
</pallas_src>

<mosaic_0001>
module attributes {stable_mosaic.version = 11 : i64} {
  func.func @_bottleneck_kernel(%arg0: i32, %arg1: memref<1x16x16x16xbf16, #tpu.memory_space<vmem>>, %arg2: memref<16x128xbf16, #tpu.memory_space<vmem>>, %arg3: memref<1152x128xbf16, #tpu.memory_space<vmem>>, %arg4: memref<128x16xbf16, #tpu.memory_space<vmem>>, %arg5: memref<1x128xf32, #tpu.memory_space<vmem>>, %arg6: memref<1x128xf32, #tpu.memory_space<vmem>>, %arg7: memref<1x128xf32, #tpu.memory_space<vmem>>, %arg8: memref<1x128xf32, #tpu.memory_space<vmem>>, %arg9: memref<1x16xf32, #tpu.memory_space<vmem>>, %arg10: memref<1x16xf32, #tpu.memory_space<vmem>>, %arg11: memref<1x16x16x16xf32, #tpu.memory_space<vmem>>, %arg12: memref<18x18x128xf32, #tpu.memory_space<vmem>>) attributes {dimension_semantics = [#tpu.dimension_semantics<parallel>], iteration_bounds = array<i64: 2>, scalar_prefetch = 0 : i64, scratch_operands = 1 : i64, tpu.core_type = #tpu.core_type<tc>, window_params = [{transform_indices = @transform_0, window_bounds = array<i64: 1, 16, 16, 16>}, {pipeline_mode = #tpu.pipeline_mode<synchronous>, transform_indices = @transform_1, window_bounds = array<i64: 16, 128>}, {pipeline_mode = #tpu.pipeline_mode<synchronous>, transform_indices = @transform_2, window_bounds = array<i64: 1152, 128>}, {pipeline_mode = #tpu.pipeline_mode<synchronous>, transform_indices = @transform_3, window_bounds = array<i64: 128, 16>}, {pipeline_mode = #tpu.pipeline_mode<synchronous>, transform_indices = @transform_4, window_bounds = array<i64: 1, 128>}, {pipeline_mode = #tpu.pipeline_mode<synchronous>, transform_indices = @transform_5, window_bounds = array<i64: 1, 128>}, {pipeline_mode = #tpu.pipeline_mode<synchronous>, transform_indices = @transform_6, window_bounds = array<i64: 1, 128>}, {pipeline_mode = #tpu.pipeline_mode<synchronous>, transform_indices = @transform_7, window_bounds = array<i64: 1, 128>}, {pipeline_mode = #tpu.pipeline_mode<synchronous>, transform_indices = @transform_8, window_bounds = array<i64: 1, 16>}, {pipeline_mode = #tpu.pipeline_mode<synchronous>, transform_indices = @transform_9, window_bounds = array<i64: 1, 16>}, {transform_indices = @transform_10, window_bounds = array<i64: 1, 16, 16, 16>}]} {
    %c0 = arith.constant 0 : index
    %c0_0 = arith.constant 0 : index
    %c0_1 = arith.constant 0 : index
    %c0_2 = arith.constant 0 : index
    %0 = vector.load %arg1[%c0, %c0_0, %c0_1, %c0_2] : memref<1x16x16x16xbf16, #tpu.memory_space<vmem>>, vector<1x16x16x16xbf16>
    %1 = vector.shape_cast %0 : vector<1x16x16x16xbf16> to vector<16x16x16xbf16>
    %2 = vector.shape_cast %1 : vector<16x16x16xbf16> to vector<256x16xbf16>
    %c0_3 = arith.constant 0 : index
    %c0_4 = arith.constant 0 : index
    %3 = vector.load %arg2[%c0_3, %c0_4] : memref<16x128xbf16, #tpu.memory_space<vmem>>, vector<16x128xbf16>
    %cst = arith.constant dense<0.000000e+00> : vector<256x128xf32>
    %4 = tpu.matmul %2, %3, %cst {dimension_numbers = #tpu.dot_dimension_numbers<[1], [0], [0], [1], [0, 0, 1, 1], [], []>} : vector<256x16xbf16>, vector<16x128xbf16>, vector<256x128xf32> -> vector<256x128xf32>
    %c0_5 = arith.constant 0 : index
    %c0_6 = arith.constant 0 : index
    %5 = vector.load %arg5[%c0_5, %c0_6] : memref<1x128xf32, #tpu.memory_space<vmem>>, vector<1x128xf32>
    %6 = vector.broadcast %5 : vector<1x128xf32> to vector<256x128xf32>
    %7 = arith.mulf %4, %6 : vector<256x128xf32>
    %c0_7 = arith.constant 0 : index
    %c0_8 = arith.constant 0 : index
    %8 = vector.load %arg6[%c0_7, %c0_8] : memref<1x128xf32, #tpu.memory_space<vmem>>, vector<1x128xf32>
    %9 = vector.broadcast %8 : vector<1x128xf32> to vector<256x128xf32>
    %10 = arith.addf %7, %9 : vector<256x128xf32>
    %cst_9 = arith.constant 0.000000e+00 : f32
    %11 = vector.broadcast %cst_9 : f32 to vector<256x128xf32>
    %12 = arith.maximumf %10, %11 : vector<256x128xf32>
    %13 = vector.shape_cast %12 : vector<256x128xf32> to vector<16x16x128xf32>
    %cst_10 = arith.constant 0.000000e+00 : f32
    %14 = vector.broadcast %cst_10 : f32 to vector<16x1x128xf32>
    %cst_11 = arith.constant 0.000000e+00 : f32
    %15 = vector.broadcast %cst_11 : f32 to vector<1x18x128xf32>
    %16 = tpu.concatenate %14, %13, %14 in 1 : vector<16x1x128xf32>, vector<16x16x128xf32>, vector<16x1x128xf32> -> vector<16x18x128xf32>
    %17 = tpu.concatenate %15, %16, %15 in 0 : vector<1x18x128xf32>, vector<16x18x128xf32>, vector<1x18x128xf32> -> vector<18x18x128xf32>
    %c0_12 = arith.constant 0 : index
    %c0_13 = arith.constant 0 : index
    %c0_14 = arith.constant 0 : index
    %18 = vector.load %arg12[%c0_12, %c0_13, %c0_14] : memref<18x18x128xf32, #tpu.memory_space<vmem>>, vector<18x18x128xf32>
    tpu.vector_store %arg12[%c0_12, %c0_13, %c0_14], %17 {strides = array<i32>} : memref<18x18x128xf32, #tpu.memory_space<vmem>>, vector<18x18x128xf32>,
    %c0_15 = arith.constant 0 : index
    %c0_16 = arith.constant 0 : index
    %c0_17 = arith.constant 0 : index
    %19 = vector.load %arg12[%c0_15, %c0_16, %c0_17] : memref<18x18x128xf32, #tpu.memory_space<vmem>>, vector<16x16x128xf32>
    %20 = vector.shape_cast %19 : vector<16x16x128xf32> to vector<256x128xf32>
    %21 = arith.truncf %20 : vector<256x128xf32> to vector<256x128xbf16>
    %c0_18 = arith.constant 0 : index
    %c1 = arith.constant 1 : index
    %c0_19 = arith.constant 0 : index
    %22 = vector.load %arg12[%c0_18, %c1, %c0_19] : memref<18x18x128xf32, #tpu.memory_space<vmem>>, vector<16x16x128xf32>
    %23 = vector.shape_cast %22 : vector<16x16x128xf32> to vector<256x128xf32>
    %24 = arith.truncf %23 : vector<256x128xf32> to vector<256x128xbf16>
    %c0_20 = arith.constant 0 : index
    %c2 = arith.constant 2 : index
    %c0_21 = arith.constant 0 : index
    %25 = vector.load %arg12[%c0_20, %c2, %c0_21] : memref<18x18x128xf32, #tpu.memory_space<vmem>>, vector<16x16x128xf32>
    %26 = vector.shape_cast %25 : vector<16x16x128xf32> to vector<256x128xf32>
    %27 = arith.truncf %26 : vector<256x128xf32> to vector<256x128xbf16>
    %c1_22 = arith.constant 1 : index
    %c0_23 = arith.constant 0 : index
    %c0_24 = arith.constant 0 : index
    %28 = vector.load %arg12[%c1_22, %c0_23, %c0_24] : memref<18x18x128xf32, #tpu.memory_space<vmem>>, vector<16x16x128xf32>
    %29 = vector.shape_cast %28 : vector<16x16x128xf32> to vector<256x128xf32>
    %30 = arith.truncf %29 : vector<256x128xf32> to vector<256x128xbf16>
    %c1_25 = arith.constant 1 : index
    %c1_26 = arith.constant 1 : index
    %c0_27 = arith.constant 0 : index
    %31 = vector.load %arg12[%c1_25, %c1_26, %c0_27] : memref<18x18x128xf32, #tpu.memory_space<vmem>>, vector<16x16x128xf32>
    %32 = vector.shape_cast %31 : vector<16x16x128xf32> to vector<256x128xf32>
    %33 = arith.truncf %32 : vector<256x128xf32> to vector<256x128xbf16>
    %c1_28 = arith.constant 1 : index
    %c2_29 = arith.constant 2 : index
    %c0_30 = arith.constant 0 : index
    %34 = vector.load %arg12[%c1_28, %c2_29, %c0_30] : memref<18x18x128xf32, #tpu.memory_space<vmem>>, vector<16x16x128xf32>
    %35 = vector.shape_cast %34 : vector<16x16x128xf32> to vector<256x128xf32>
    %36 = arith.truncf %35 : vector<256x128xf32> to vector<256x128xbf16>
    %c2_31 = arith.constant 2 : index
    %c0_32 = arith.constant 0 : index
    %c0_33 = arith.constant 0 : index
    %37 = vector.load %arg12[%c2_31, %c0_32, %c0_33] : memref<18x18x128xf32, #tpu.memory_space<vmem>>, vector<16x16x128xf32>
    %38 = vector.shape_cast %37 : vector<16x16x128xf32> to vector<256x128xf32>
    %39 = arith.truncf %38 : vector<256x128xf32> to vector<256x128xbf16>
    %c2_34 = arith.constant 2 : index
    %c1_35 = arith.constant 1 : index
    %c0_36 = arith.constant 0 : index
    %40 = vector.load %arg12[%c2_34, %c1_35, %c0_36] : memref<18x18x128xf32, #tpu.memory_space<vmem>>, vector<16x16x128xf32>
    %41 = vector.shape_cast %40 : vector<16x16x128xf32> to vector<256x128xf32>
    %42 = arith.truncf %41 : vector<256x128xf32> to vector<256x128xbf16>
    %c2_37 = arith.constant 2 : index
    %c2_38 = arith.constant 2 : index
    %c0_39 = arith.constant 0 : index
    %43 = vector.load %arg12[%c2_37, %c2_38, %c0_39] : memref<18x18x128xf32, #tpu.memory_space<vmem>>, vector<16x16x128xf32>
    %44 = vector.shape_cast %43 : vector<16x16x128xf32> to vector<256x128xf32>
    %45 = arith.truncf %44 : vector<256x128xf32> to vector<256x128xbf16>
    %46 = tpu.concatenate %21, %24, %27, %30, %33, %36, %39, %42, %45 in 1 : vector<256x128xbf16>, vector<256x128xbf16>, vector<256x128xbf16>, vector<256x128xbf16>, vector<256x128xbf16>, vector<256x128xbf16>, vector<256x128xbf16>, vector<256x128xbf16>, vector<256x128xbf16> -> vector<256x1152xbf16>
    %c0_40 = arith.constant 0 : index
    %c0_41 = arith.constant 0 : index
    %47 = vector.load %arg3[%c0_40, %c0_41] : memref<1152x128xbf16, #tpu.memory_space<vmem>>, vector<1152x128xbf16>
    %cst_42 = arith.constant dense<0.000000e+00> : vector<256x128xf32>
    %48 = tpu.matmul %46, %47, %cst_42 {dimension_numbers = #tpu.dot_dimension_numbers<[1], [0], [0], [1], [0, 0, 1, 1], [], []>} : vector<256x1152xbf16>, vector<1152x128xbf16>, vector<256x128xf32> -> vector<256x128xf32>
    %c0_43 = arith.constant 0 : index
    %c0_44 = arith.constant 0 : index
    %49 = vector.load %arg7[%c0_43, %c0_44] : memref<1x128xf32, #tpu.memory_space<vmem>>, vector<1x128xf32>
    %50 = vector.broadcast %49 : vector<1x128xf32> to vector<256x128xf32>
    %51 = arith.mulf %48, %50 : vector<256x128xf32>
    %c0_45 = arith.constant 0 : index
    %c0_46 = arith.constant 0 : index
    %52 = vector.load %arg8[%c0_45, %c0_46] : memref<1x128xf32, #tpu.memory_space<vmem>>, vector<1x128xf32>
    %53 = vector.broadcast %52 : vector<1x128xf32> to vector<256x128xf32>
    %54 = arith.addf %51, %53 : vector<256x128xf32>
    %cst_47 = arith.constant 0.000000e+00 : f32
    %55 = vector.broadcast %cst_47 : f32 to vector<256x128xf32>
    %56 = arith.maximumf %54, %55 : vector<256x128xf32>
    %57 = arith.truncf %56 : vector<256x128xf32> to vector<256x128xbf16>
    %c0_48 = arith.constant 0 : index
    %c0_49 = arith.constant 0 : index
    %58 = vector.load %arg4[%c0_48, %c0_49] : memref<128x16xbf16, #tpu.memory_space<vmem>>, vector<128x16xbf16>
    %cst_50 = arith.constant dense<0.000000e+00> : vector<256x16xf32>
    %59 = tpu.matmul %57, %58, %cst_50 {dimension_numbers = #tpu.dot_dimension_numbers<[1], [0], [0], [1], [0, 0, 1, 1], [], []>} : vector<256x128xbf16>, vector<128x16xbf16>, vector<256x16xf32> -> vector<256x16xf32>
    %c0_51 = arith.constant 0 : index
    %c0_52 = arith.constant 0 : index
    %60 = vector.load %arg9[%c0_51, %c0_52] : memref<1x16xf32, #tpu.memory_space<vmem>>, vector<1x16xf32>
    %61 = vector.broadcast %60 : vector<1x16xf32> to vector<256x16xf32>
    %62 = arith.mulf %59, %61 : vector<256x16xf32>
    %c0_53 = arith.constant 0 : index
    %c0_54 = arith.constant 0 : index
    %63 = vector.load %arg10[%c0_53, %c0_54] : memref<1x16xf32, #tpu.memory_space<vmem>>, vector<1x16xf32>
    %64 = vector.broadcast %63 : vector<1x16xf32> to vector<256x16xf32>
    %65 = arith.addf %62, %64 : vector<256x16xf32>
    %66 = arith.extf %2 : vector<256x16xbf16> to vector<256x16xf32>
    %67 = arith.addf %65, %66 : vector<256x16xf32>
    %cst_55 = arith.constant 0.000000e+00 : f32
    %68 = vector.broadcast %cst_55 : f32 to vector<256x16xf32>
    %69 = arith.maximumf %67, %68 : vector<256x16xf32>
    %70 = vector.shape_cast %69 : vector<256x16xf32> to vector<16x16x16xf32>
    %c0_56 = arith.constant 0 : index
    %c0_57 = arith.constant 0 : index
    %c0_58 = arith.constant 0 : index
    %c0_59 = arith.constant 0 : index
    %71 = vector.load %arg11[%c0_56, %c0_57, %c0_58, %c0_59] : memref<1x16x16x16xf32, #tpu.memory_space<vmem>>, vector<1x16x16x16xf32>
    %72 = vector.shape_cast %71 : vector<1x16x16x16xf32> to vector<16x16x16xf32>
    %73 = vector.shape_cast %70 : vector<16x16x16xf32> to vector<1x16x16x16xf32>
    tpu.vector_store %arg11[%c0_56, %c0_57, %c0_58, %c0_59], %73 {strides = array<i32>} : memref<1x16x16x16xf32, #tpu.memory_space<vmem>>, vector<1x16x16x16xf32>,
    return
  }
  func.func @transform_0(%arg0: i32) -> (i32, i32, i32, i32) {
    %c0_i32 = arith.constant 0 : i32
    %c0_i32_0 = arith.constant 0 : i32
    %c0_i32_1 = arith.constant 0 : i32
    %c0_i32_2 = arith.constant 0 : i32
    return %arg0, %c0_i32, %c0_i32_0, %c0_i32_1 : i32, i32, i32, i32
  }
  func.func @transform_1(%arg0: i32) -> (i32, i32) {
    %c0_i32 = arith.constant 0 : i32
    %c0_i32_0 = arith.constant 0 : i32
    %c0_i32_1 = arith.constant 0 : i32
    return %c0_i32, %c0_i32_0 : i32, i32
  }
  func.func @transform_2(%arg0: i32) -> (i32, i32) {
    %c0_i32 = arith.constant 0 : i32
    %c0_i32_0 = arith.constant 0 : i32
    %c0_i32_1 = arith.constant 0 : i32
    return %c0_i32, %c0_i32_0 : i32, i32
  }
  func.func @transform_3(%arg0: i32) -> (i32, i32) {
    %c0_i32 = arith.constant 0 : i32
    %c0_i32_0 = arith.constant 0 : i32
    %c0_i32_1 = arith.constant 0 : i32
    return %c0_i32, %c0_i32_0 : i32, i32
  }
  func.func @transform_4(%arg0: i32) -> (i32, i32) {
    %c0_i32 = arith.constant 0 : i32
    %c0_i32_0 = arith.constant 0 : i32
    %c0_i32_1 = arith.constant 0 : i32
    return %c0_i32, %c0_i32_0 : i32, i32
  }
  func.func @transform_5(%arg0: i32) -> (i32, i32) {
    %c0_i32 = arith.constant 0 : i32
    %c0_i32_0 = arith.constant 0 : i32
    %c0_i32_1 = arith.constant 0 : i32
    return %c0_i32, %c0_i32_0 : i32, i32
  }
  func.func @transform_6(%arg0: i32) -> (i32, i32) {
    %c0_i32 = arith.constant 0 : i32
    %c0_i32_0 = arith.constant 0 : i32
    %c0_i32_1 = arith.constant 0 : i32
    return %c0_i32, %c0_i32_0 : i32, i32
  }
  func.func @transform_7(%arg0: i32) -> (i32, i32) {
    %c0_i32 = arith.constant 0 : i32
    %c0_i32_0 = arith.constant 0 : i32
    %c0_i32_1 = arith.constant 0 : i32
    return %c0_i32, %c0_i32_0 : i32, i32
  }
  func.func @transform_8(%arg0: i32) -> (i32, i32) {
    %c0_i32 = arith.constant 0 : i32
    %c0_i32_0 = arith.constant 0 : i32
    %c0_i32_1 = arith.constant 0 : i32
    return %c0_i32, %c0_i32_0 : i32, i32
  }
  func.func @transform_9(%arg0: i32) -> (i32, i32) {
    %c0_i32 = arith.constant 0 : i32
    %c0_i32_0 = arith.constant 0 : i32
    %c0_i32_1 = arith.constant 0 : i32
    return %c0_i32, %c0_i32_0 : i32, i32
  }
  func.func @transform_10(%arg0: i32) -> (i32, i32, i32, i32) {
    %c0_i32 = arith.constant 0 : i32
    %c0_i32_0 = arith.constant 0 : i32
    %c0_i32_1 = arith.constant 0 : i32
    %c0_i32_2 = arith.constant 0 : i32
    return %arg0, %c0_i32, %c0_i32_0, %c0_i32_1 : i32, i32, i32, i32
  }
}

</mosaic_0001>

<llo_original>
// kernel: bottleneck_forward.1
$region0: #{bottleneck_forward.1}
  #allocation0 [shape = 'u32[]', space=smem, size = 0x4, offset = 0x4, fixed_abs, tag = 'smem constant byte address 0x4 - core index']
  #allocation1 [shape = 'u32[144,128]{1,0:T(1,128)}', space=vmem, size = 0x12000, scoped, tag = 'internal scratch']
  #allocation2 [shape = 'f32[18,18,128]{2,1,0:T(8,128)}', space=vmem, size = 0x36000, scoped, tag = 'scratch operand']
  %s0 = inlined_call_operand.vmem [shape: bf16[2,16,16,16], index: 0, kind: input, shape index: {}]
  %s1 = inlined_call_operand.vmem [shape: bf16[16,128], index: 1, kind: input, shape index: {}]
  %s2 = inlined_call_operand.vmem [shape: bf16[1152,128], index: 2, kind: input, shape index: {}]
  %s3 = inlined_call_operand.vmem [shape: bf16[128,16], index: 3, kind: input, shape index: {}]
  %s4 = inlined_call_operand.vmem [shape: f32[1,128], index: 4, kind: input, shape index: {}]
  %s5 = inlined_call_operand.vmem [shape: f32[1,128], index: 5, kind: input, shape index: {}]
  %s6 = inlined_call_operand.vmem [shape: f32[1,128], index: 6, kind: input, shape index: {}]
  %s7 = inlined_call_operand.vmem [shape: f32[1,128], index: 7, kind: input, shape index: {}]
  %s8 = inlined_call_operand.vmem [shape: f32[1,16], index: 8, kind: input, shape index: {}]
  %s9 = inlined_call_operand.vmem [shape: f32[1,16], index: 9, kind: input, shape index: {}]
  %s10 = inlined_call_operand.vmem [shape: f32[2,16,16,16], index: 10, kind: output, shape index: {}]
  %s11 = sld [smem:[#allocation0]]
  $region73: #{bottleneck_forward.1} parent=0
    _
  %s13 = ssub.s32 1, %s11
  %s14 = scalar_select 0, %s13, %s11
  loop: start=0, step=1, limit=4
  $region2: #{bottleneck_forward.1} parent=0 // loop_pre_header
    _
  $region3: #{bottleneck_forward.1} parent=0 // loop_header
    %s16 = sphi 0, %s20
    %p17 = scmp.ge.s32.totalorder %s16, 4
    %s26 = sphi 0, %s28
    %s29 = sphi 0, %s26
    %s30 = sphi 0, %s29
    %s46 = sphi 0, %s30
    %s50 = sphi 0, %s50
    %s52 = sphi 0, %s50
    %s53 = sphi 0, %s52
    %s67 = sphi 0, %s53
    %s71 = sphi 0, %s71
    %s73 = sphi 0, %s71
    %s74 = sphi 0, %s73
    %s88 = sphi 0, %s74
    %s92 = sphi 0, %s92
    %s94 = sphi 0, %s92
    %s95 = sphi 0, %s94
    %s109 = sphi 0, %s95
    %s113 = sphi 0, %s113
    %s115 = sphi 0, %s113
    %s116 = sphi 0, %s115
    %s130 = sphi 0, %s116
    %s134 = sphi 0, %s134
    %s136 = sphi 0, %s134
    %s137 = sphi 0, %s136
    %s151 = sphi 0, %s137
    %s155 = sphi 0, %s155
    %s157 = sphi 0, %s155
    %s158 = sphi 0, %s157
    %s172 = sphi 0, %s158
    %s176 = sphi 0, %s176
    %s178 = sphi 0, %s176
    %s179 = sphi 0, %s178
    %s193 = sphi 0, %s179
    %s197 = sphi 0, %s197
    %s199 = sphi 0, %s197
    %s200 = sphi 0, %s199
    %s214 = sphi 0, %s200
    %s218 = sphi 0, %s218
    %s220 = sphi 0, %s218
    %s221 = sphi 0, %s220
    %s235 = sphi 0, %s221
    %s241 = sphi 0, %s243
    %s244 = sphi 0, %s241
    %s245 = sphi 0, %s244
    %s261 = sphi 0, %s245
  $region4: #{bottleneck_forward.1} parent=0 // loop_header_branch
    %19 = sbr.rel (%p17) target = $region8
  $region5: #{bottleneck_forward.1} parent=0 // loop_body
    %s21 = ssub.s32 %s16, 1
    %s22 = ssub.s32 %s16, 2
    %s23 = sadd.s32 %s16, 1
    %s24 = ssub.s32 %s16, %s23
    %p25 = scmp.eq.s32.totalorder %s24, 0
    %s27 = sadd.s32 %s26, 1
    %s28 = scalar_select %p25, %s26, %s27
    %p31 = pneg %p25
    %p32 = scmp.eq.s32.totalorder %s16, 1
    %p33 = por %p31, %p32
    %p34 = scmp.ne.s32.totalorder %s26, %s29
    %p35 = scmp.eq.s32.totalorder %s16, 0
    %p36 = por %p34, %p35
    %p37 = scmp.ne.s32.totalorder %s26, %s29
    %p38 = scmp.eq.s32.totalorder %s21, 1
    %p39 = por %p37, %p38
    %p40 = scmp.ne.s32.totalorder %s29, %s30
    %p41 = scmp.eq.s32.totalorder %s21, 0
    %p42 = por %p40, %p41
    %p43 = scmp.ne.s32.totalorder %s29, %s30
    %p44 = scmp.eq.s32.totalorder %s22, 1
    %p45 = por %p43, %p44
    %p47 = scmp.ne.s32.totalorder %s30, %s46
    %p48 = scmp.eq.s32.totalorder %s22, 0
    %p49 = por %p47, %p48
    %s51 = sadd.s32 %s50, 1
    %p54 = scmp.eq.s32.totalorder %s16, 1
    %p55 = scmp.ne.s32.totalorder %s50, %s52
    %p56 = scmp.eq.s32.totalorder %s16, 0
    %p57 = por %p55, %p56
    %p58 = scmp.ne.s32.totalorder %s50, %s52
    %p59 = scmp.eq.s32.totalorder %s21, 1
    %p60 = por %p58, %p59
    %p61 = scmp.ne.s32.totalorder %s52, %s53
    %p62 = scmp.eq.s32.totalorder %s21, 0
    %p63 = por %p61, %p62
    %p64 = scmp.ne.s32.totalorder %s52, %s53
    %p65 = scmp.eq.s32.totalorder %s22, 1
    %p66 = por %p64, %p65
    %p68 = scmp.ne.s32.totalorder %s53, %s67
    %p69 = scmp.eq.s32.totalorder %s22, 0
    %p70 = por %p68, %p69
    %s72 = sadd.s32 %s71, 1
    %p75 = scmp.eq.s32.totalorder %s16, 1
    %p76 = scmp.ne.s32.totalorder %s71, %s73
    %p77 = scmp.eq.s32.totalorder %s16, 0
    %p78 = por %p76, %p77
    %p79 = scmp.ne.s32.totalorder %s71, %s73
    %p80 = scmp.eq.s32.totalorder %s21, 1
    %p81 = por %p79, %p80
    %p82 = scmp.ne.s32.totalorder %s73, %s74
    %p83 = scmp.eq.s32.totalorder %s21, 0
    %p84 = por %p82, %p83
    %p85 = scmp.ne.s32.totalorder %s73, %s74
    %p86 = scmp.eq.s32.totalorder %s22, 1
    %p87 = por %p85, %p86
    %p89 = scmp.ne.s32.totalorder %s74, %s88
    %p90 = scmp.eq.s32.totalorder %s22, 0
    %p91 = por %p89, %p90
    %s93 = sadd.s32 %s92, 1
    %p96 = scmp.eq.s32.totalorder %s16, 1
    %p97 = scmp.ne.s32.totalorder %s92, %s94
    %p98 = scmp.eq.s32.totalorder %s16, 0
    %p99 = por %p97, %p98
    %p100 = scmp.ne.s32.totalorder %s92, %s94
    %p101 = scmp.eq.s32.totalorder %s21, 1
    %p102 = por %p100, %p101
    %p103 = scmp.ne.s32.totalorder %s94, %s95
    %p104 = scmp.eq.s32.totalorder %s21, 0
    %p105 = por %p103, %p104
    %p106 = scmp.ne.s32.totalorder %s94, %s95
    %p107 = scmp.eq.s32.totalorder %s22, 1
    %p108 = por %p106, %p107
    %p110 = scmp.ne.s32.totalorder %s95, %s109
    %p111 = scmp.eq.s32.totalorder %s22, 0
    %p112 = por %p110, %p111
    %s114 = sadd.s32 %s113, 1
    %p117 = scmp.eq.s32.totalorder %s16, 1
    %p118 = scmp.ne.s32.totalorder %s113, %s115
    %p119 = scmp.eq.s32.totalorder %s16, 0
    %p120 = por %p118, %p119
    %p121 = scmp.ne.s32.totalorder %s113, %s115
    %p122 = scmp.eq.s32.totalorder %s21, 1
    %p123 = por %p121, %p122
    %p124 = scmp.ne.s32.totalorder %s115, %s116
    %p125 = scmp.eq.s32.totalorder %s21, 0
    %p126 = por %p124, %p125
    %p127 = scmp.ne.s32.totalorder %s115, %s116
    %p128 = scmp.eq.s32.totalorder %s22, 1
    %p129 = por %p127, %p128
    %p131 = scmp.ne.s32.totalorder %s116, %s130
    %p132 = scmp.eq.s32.totalorder %s22, 0
    %p133 = por %p131, %p132
    %s135 = sadd.s32 %s134, 1
    %p138 = scmp.eq.s32.totalorder %s16, 1
    %p139 = scmp.ne.s32.totalorder %s134, %s136
    %p140 = scmp.eq.s32.totalorder %s16, 0
    %p141 = por %p139, %p140
    %p142 = scmp.ne.s32.totalorder %s134, %s136
    %p143 = scmp.eq.s32.totalorder %s21, 1
    %p144 = por %p142, %p143
    %p145 = scmp.ne.s32.totalorder %s136, %s137
    %p146 = scmp.eq.s32.totalorder %s21, 0
    %p147 = por %p145, %p146
    %p148 = scmp.ne.s32.totalorder %s136, %s137
    %p149 = scmp.eq.s32.totalorder %s22, 1
    %p150 = por %p148, %p149
    %p152 = scmp.ne.s32.totalorder %s137, %s151
    %p153 = scmp.eq.s32.totalorder %s22, 0
    %p154 = por %p152, %p153
    %s156 = sadd.s32 %s155, 1
    %p159 = scmp.eq.s32.totalorder %s16, 1
    %p160 = scmp.ne.s32.totalorder %s155, %s157
    %p161 = scmp.eq.s32.totalorder %s16, 0
    %p162 = por %p160, %p161
    %p163 = scmp.ne.s32.totalorder %s155, %s157
    %p164 = scmp.eq.s32.totalorder %s21, 1
    %p165 = por %p163, %p164
    %p166 = scmp.ne.s32.totalorder %s157, %s158
    %p167 = scmp.eq.s32.totalorder %s21, 0
    %p168 = por %p166, %p167
    %p169 = scmp.ne.s32.totalorder %s157, %s158
    %p170 = scmp.eq.s32.totalorder %s22, 1
    %p171 = por %p169, %p170
    %p173 = scmp.ne.s32.totalorder %s158, %s172
    %p174 = scmp.eq.s32.totalorder %s22, 0
    %p175 = por %p173, %p174
    %s177 = sadd.s32 %s176, 1
    %p180 = scmp.eq.s32.totalorder %s16, 1
    %p181 = scmp.ne.s32.totalorder %s176, %s178
    %p182 = scmp.eq.s32.totalorder %s16, 0
    %p183 = por %p181, %p182
    %p184 = scmp.ne.s32.totalorder %s176, %s178
    %p185 = scmp.eq.s32.totalorder %s21, 1
    %p186 = por %p184, %p185
    %p187 = scmp.ne.s32.totalorder %s178, %s179
    %p188 = scmp.eq.s32.totalorder %s21, 0
    %p189 = por %p187, %p188
    %p190 = scmp.ne.s32.totalorder %s178, %s179
    %p191 = scmp.eq.s32.totalorder %s22, 1
    %p192 = por %p190, %p191
    %p194 = scmp.ne.s32.totalorder %s179, %s193
    %p195 = scmp.eq.s32.totalorder %s22, 0
    %p196 = por %p194, %p195
    %s198 = sadd.s32 %s197, 1
    %p201 = scmp.eq.s32.totalorder %s16, 1
    %p202 = scmp.ne.s32.totalorder %s197, %s199
    %p203 = scmp.eq.s32.totalorder %s16, 0
    %p204 = por %p202, %p203
    %p205 = scmp.ne.s32.totalorder %s197, %s199
    %p206 = scmp.eq.s32.totalorder %s21, 1
    %p207 = por %p205, %p206
    %p208 = scmp.ne.s32.totalorder %s199, %s200
    %p209 = scmp.eq.s32.totalorder %s21, 0
    %p210 = por %p208, %p209
    %p211 = scmp.ne.s32.totalorder %s199, %s200
    %p212 = scmp.eq.s32.totalorder %s22, 1
    %p213 = por %p211, %p212
    %p215 = scmp.ne.s32.totalorder %s200, %s214
    %p216 = scmp.eq.s32.totalorder %s22, 0
    %p217 = por %p215, %p216
    %s219 = sadd.s32 %s218, 1
    %p222 = scmp.eq.s32.totalorder %s16, 1
    %p223 = scmp.ne.s32.totalorder %s218, %s220
    %p224 = scmp.eq.s32.totalorder %s16, 0
    %p225 = por %p223, %p224
    %p226 = scmp.ne.s32.totalorder %s218, %s220
    %p227 = scmp.eq.s32.totalorder %s21, 1
    %p228 = por %p226, %p227
    %p229 = scmp.ne.s32.totalorder %s220, %s221
    %p230 = scmp.eq.s32.totalorder %s21, 0
    %p231 = por %p229, %p230
    %p232 = scmp.ne.s32.totalorder %s220, %s221
    %p233 = scmp.eq.s32.totalorder %s22, 1
    %p234 = por %p232, %p233
    %p236 = scmp.ne.s32.totalorder %s221, %s235
    %p237 = scmp.eq.s32.totalorder %s22, 0
    %p238 = por %p236, %p237
    %s239 = ssub.s32 %s16, %s23
    %p240 = scmp.eq.s32.totalorder %s239, 0
    %s242 = sadd.s32 %s241, 1
    %s243 = scalar_select %p240, %s241, %s242
    %p246 = pneg %p240
    %p247 = scmp.eq.s32.totalorder %s16, 1
    %p248 = por %p246, %p247
    %p249 = scmp.ne.s32.totalorder %s241, %s244
    %p250 = scmp.eq.s32.totalorder %s16, 0
    %p251 = por %p249, %p250
    %p252 = scmp.ne.s32.totalorder %s241, %s244
    %p253 = scmp.eq.s32.totalorder %s21, 1
    %p254 = por %p252, %p253
    %p255 = scmp.ne.s32.totalorder %s244, %s245
    %p256 = scmp.eq.s32.totalorder %s21, 0
    %p257 = por %p255, %p256
    %p258 = scmp.ne.s32.totalorder %s244, %s245
    %p259 = scmp.eq.s32.totalorder %s22, 1
    %p260 = por %p258, %p259
    %p262 = scmp.ne.s32.totalorder %s245, %s261
    %p263 = scmp.eq.s32.totalorder %s22, 0
    %p264 = por %p262, %p263
    %p265 = scmp.le.s32.totalorder 1, %s16
    %p266 = scmp.lt.s32.totalorder %s16, 3
    %p267 = pnand %p265, %p266
    %p268 = pneg %p267
    // Predicated region
    $region9: #{bottleneck_forward.1} parent=5 // pred_check
      _
    $region10: #{bottleneck_forward.1} parent=5 // pred_check_branch
      %270 = sbr.rel (%p267) target = $region12
    $region11: #{bottleneck_forward.1} parent=5 // pred_region
      %s271 = ssub.s32 %s16, 1
      // Predicated region
      $region13: #{bottleneck_forward.1} parent=11 // pred_check
        %p272 = pneg %p63
      $region14: #{bottleneck_forward.1} parent=11 // pred_check_branch
        %274 = sbr.rel (%p272) target = $region16
      $region15: #{bottleneck_forward.1} parent=11 // pred_region
        _
      $region16: #{bottleneck_forward.1} parent=11 // pred_fallthru
        _
      // Predicated region
      $region17: #{bottleneck_forward.1} parent=11 // pred_check
        %p275 = pneg %p84
      $region18: #{bottleneck_forward.1} parent=11 // pred_check_branch
        %277 = sbr.rel (%p275) target = $region20
      $region19: #{bottleneck_forward.1} parent=11 // pred_region
        _
      $region20: #{bottleneck_forward.1} parent=11 // pred_fallthru
        _
      // Predicated region
      $region21: #{bottleneck_forward.1} parent=11 // pred_check
        %p278 = pneg %p105
      $region22: #{bottleneck_forward.1} parent=11 // pred_check_branch
        %280 = sbr.rel (%p278) target = $region24
      $region23: #{bottleneck_forward.1} parent=11 // pred_region
        _
      $region24: #{bottleneck_forward.1} parent=11 // pred_fallthru
        _
      // Predicated region
      $region25: #{bottleneck_forward.1} parent=11 // pred_check
        %p281 = pneg %p126
      $region26: #{bottleneck_forward.1} parent=11 // pred_check_branch
        %283 = sbr.rel (%p281) target = $region28
      $region27: #{bottleneck_forward.1} parent=11 // pred_region
        _
      $region28: #{bottleneck_forward.1} parent=11 // pred_fallthru
        _
      // Predicated region
      $region29: #{bottleneck_forward.1} parent=11 // pred_check
        %p284 = pneg %p147
      $region30: #{bottleneck_forward.1} parent=11 // pred_check_branch
        %286 = sbr.rel (%p284) target = $region32
      $region31: #{bottleneck_forward.1} parent=11 // pred_region
        _
      $region32: #{bottleneck_forward.1} parent=11 // pred_fallthru
        _
      // Predicated region
      $region33: #{bottleneck_forward.1} parent=11 // pred_check
        %p287 = pneg %p168
      $region34: #{bottleneck_forward.1} parent=11 // pred_check_branch
        %289 = sbr.rel (%p287) target = $region36
      $region35: #{bottleneck_forward.1} parent=11 // pred_region
        _
      $region36: #{bottleneck_forward.1} parent=11 // pred_fallthru
        _
      // Predicated region
      $region37: #{bottleneck_forward.1} parent=11 // pred_check
        %p290 = pneg %p189
      $region38: #{bottleneck_forward.1} parent=11 // pred_check_branch
        %292 = sbr.rel (%p290) target = $region40
      $region39: #{bottleneck_forward.1} parent=11 // pred_region
        _
      $region40: #{bottleneck_forward.1} parent=11 // pred_fallthru
        _
      // Predicated region
      $region41: #{bottleneck_forward.1} parent=11 // pred_check
        %p293 = pneg %p210
      $region42: #{bottleneck_forward.1} parent=11 // pred_check_branch
        %295 = sbr.rel (%p293) target = $region44
      $region43: #{bottleneck_forward.1} parent=11 // pred_region
        _
      $region44: #{bottleneck_forward.1} parent=11 // pred_fallthru
        _
      // Predicated region
      $region45: #{bottleneck_forward.1} parent=11 // pred_check
        %p296 = pneg %p231
      $region46: #{bottleneck_forward.1} parent=11 // pred_check_branch
        %298 = sbr.rel (%p296) target = $region48
      $region47: #{bottleneck_forward.1} parent=11 // pred_region
        _
      $region48: #{bottleneck_forward.1} parent=11 // pred_fallthru
        _
    $region12: #{bottleneck_forward.1} parent=5 // pred_fallthru
      _
    %p299 = scmp.lt.s32.totalorder %s16, 2
    // Predicated region
    $region49: #{bottleneck_forward.1} parent=5 // pred_check
      %p300 = pneg %p299
    $region50: #{bottleneck_forward.1} parent=5 // pred_check_branch
      %302 = sbr.rel (%p300) target = $region52
    $region51: #{bottleneck_forward.1} parent=5 // pred_region
      // Predicated region
      $region53: #{bottleneck_forward.1} parent=51 // pred_check
        %p303 = pneg %p36
      $region54: #{bottleneck_forward.1} parent=51 // pred_check_branch
        %305 = sbr.rel (%p303) target = $region56
      $region55: #{bottleneck_forward.1} parent=51 // pred_region
        %p306 = scmp.lt.s32.totalorder %s16, 1
        %s307 = scalar_select %p306, %s16, 1
        %s308 = smul.addr %s307, 32
        %s309 = smul.addr %s308, 4
        %s310 = scalar_lea.vmem %s0, %s309
      $region56: #{bottleneck_forward.1} parent=51 // pred_fallthru
        _
    $region52: #{bottleneck_forward.1} parent=5 // pred_fallthru
      _
    %p311 = scmp.le.s32.totalorder 1, %s16
    %p312 = scmp.lt.s32.totalorder %s16, 3
    %p313 = pnand %p311, %p312
    %p314 = pneg %p313
    // Predicated region
    $region57: #{bottleneck_forward.1} parent=5 // pred_check
      _
    $region58: #{bottleneck_forward.1} parent=5 // pred_check_branch
      %316 = sbr.rel (%p313) target = $region60
    $region59: #{bottleneck_forward.1} parent=5 // pred_region
      %s317 = ssub.s32 %s16, 1
      %p318 = scmp.lt.s32.totalorder %s21, 1
      %s319 = scalar_select %p318, %s21, 1
      %s320 = smul.addr %s319, 32
      %s321 = smul.addr %s320, 4
      %s322 = scalar_lea.vmem %s0, %s321
      %p323 = pneg %p42
      %p324 = pneg %p39
      %p325 = pneg %p63
      %p326 = pneg %p60
      %p327 = pneg %p84
      %p328 = pneg %p81
      %p329 = pneg %p105
      %p330 = pneg %p102
      %p331 = pneg %p126
      %p332 = pneg %p123
      %p333 = pneg %p147
      %p334 = pneg %p144
      %p335 = pneg %p168
      %p336 = pneg %p165
      %p337 = pneg %p189
      %p338 = pneg %p186
      %p339 = pneg %p210
      %p340 = pneg %p207
      %p341 = pneg %p231
      %p342 = pneg %p228
      %p343 = pneg %p257
      %p344 = pneg %p254
      %p345 = scmp.lt.s32.totalorder %s21, 1
      %s346 = scalar_select %p345, %s21, 1
      %s347 = smul.addr %s346, 32
      %s348 = smul.addr %s347, 8
      %s349 = scalar_lea.vmem %s10, %s348
      %p350 = scmp.lt.s32.totalorder %s21, 1
      %s351 = scalar_select %p350, %s21, 1
      %s352 = smul.addr %s351, 32
      %s353 = smul.addr %s352, 4
      %s354 = scalar_lea.vmem %s0, %s353
      %p355 = scmp.lt.s32.totalorder %s21, 1
      %s356 = scalar_select %p355, %s21, 1
      %s357 = smul.addr %s356, 32
      %s358 = smul.addr %s357, 8
      %s359 = scalar_lea.vmem %s10, %s358
      %v361 = vld [vmem:[%s354] sm:$0xf]
      %v362 = vld [vmem:[%s354 + $0x4] sm:$0xf]
      %v363 = vld [vmem:[%s354 + $0x8] sm:$0xf]
      %v364 = vld [vmem:[%s354 + $0xc] sm:$0xf]
      %v365 = vld [vmem:[%s354 + $0x10] sm:$0xf]
      %v366 = vld [vmem:[%s354 + $0x14] sm:$0xf]
      %v367 = vld [vmem:[%s354 + $0x18] sm:$0xf]
      %v368 = vld [vmem:[%s354 + $0x1c] sm:$0xf]
      %v369 = vld [vmem:[%s354 + $0x20] sm:$0xf]
      %v370 = vld [vmem:[%s354 + $0x24] sm:$0xf]
      %v371 = vld [vmem:[%s354 + $0x28] sm:$0xf]
      %v372 = vld [vmem:[%s354 + $0x2c] sm:$0xf]
      %v373 = vld [vmem:[%s354 + $0x30] sm:$0xf]
      %v374 = vld [vmem:[%s354 + $0x34] sm:$0xf]
      %v375 = vld [vmem:[%s354 + $0x38] sm:$0xf]
      %v376 = vld [vmem:[%s354 + $0x3c] sm:$0xf]
      %v377 = vld [vmem:[%s354 + $0x40] sm:$0xf]
      %v378 = vld [vmem:[%s354 + $0x44] sm:$0xf]
      %v379 = vld [vmem:[%s354 + $0x48] sm:$0xf]
      %v380 = vld [vmem:[%s354 + $0x4c] sm:$0xf]
      %v381 = vld [vmem:[%s354 + $0x50] sm:$0xf]
      %v382 = vld [vmem:[%s354 + $0x54] sm:$0xf]
      %v383 = vld [vmem:[%s354 + $0x58] sm:$0xf]
      %v384 = vld [vmem:[%s354 + $0x5c] sm:$0xf]
      %v385 = vld [vmem:[%s354 + $0x60] sm:$0xf]
      %v386 = vld [vmem:[%s354 + $0x64] sm:$0xf]
      %v387 = vld [vmem:[%s354 + $0x68] sm:$0xf]
      %v388 = vld [vmem:[%s354 + $0x6c] sm:$0xf]
      %v389 = vld [vmem:[%s354 + $0x70] sm:$0xf]
      %v390 = vld [vmem:[%s354 + $0x74] sm:$0xf]
      %v391 = vld [vmem:[%s354 + $0x78] sm:$0xf]
      %v392 = vld [vmem:[%s354 + $0x7c] sm:$0xf]
      %v393 = vld [vmem:[%s1] sm:$0xf]
      %v394 = vld [vmem:[%s1 + $0x4] sm:$0xf]
      %v427 = vunpack.c.l.b16 %v361
      %v428 = vunpack.c.l.b16 %v362
      %v429 = vunpack.c.l.b16 %v363
      %v430 = vunpack.c.l.b16 %v364
      %v431 = vunpack.c.l.b16 %v365
      %v432 = vunpack.c.l.b16 %v366
      %v433 = vunpack.c.l.b16 %v367
      %v434 = vunpack.c.l.b16 %v368
      %v435 = vunpack.c.l.b16 %v369
      %v436 = vunpack.c.l.b16 %v370
      %v437 = vunpack.c.l.b16 %v371
      %v438 = vunpack.c.l.b16 %v372
      %v439 = vunpack.c.l.b16 %v373
      %v440 = vunpack.c.l.b16 %v374
      %v441 = vunpack.c.l.b16 %v375
      %v442 = vunpack.c.l.b16 %v376
      %v443 = vunpack.c.l.b16 %v377
      %v444 = vunpack.c.l.b16 %v378
      %v445 = vunpack.c.l.b16 %v379
      %v446 = vunpack.c.l.b16 %v380
      %v447 = vunpack.c.l.b16 %v381
      %v448 = vunpack.c.l.b16 %v382
      %v449 = vunpack.c.l.b16 %v383
      %v450 = vunpack.c.l.b16 %v384
      %v451 = vunpack.c.l.b16 %v385
      %v452 = vunpack.c.l.b16 %v386
      %v453 = vunpack.c.l.b16 %v387
      %v454 = vunpack.c.l.b16 %v388
      %v455 = vunpack.c.l.b16 %v389
      %v456 = vunpack.c.l.b16 %v390
      %v457 = vunpack.c.l.b16 %v391
      %v458 = vunpack.c.l.b16 %v392
      %v459 = vpack.c.b16 %v428, %v427
      %v460 = vpack.c.b16 %v430, %v429
      %v461 = vpack.c.b16 %v432, %v431
      %v462 = vpack.c.b16 %v434, %v433
      %v463 = vpack.c.b16 %v436, %v435
      %v464 = vpack.c.b16 %v438, %v437
      %v465 = vpack.c.b16 %v440, %v439
      %v466 = vpack.c.b16 %v442, %v441
      %v467 = vpack.c.b16 %v444, %v443
      %v468 = vpack.c.b16 %v446, %v445
      %v469 = vpack.c.b16 %v448, %v447
      %v470 = vpack.c.b16 %v450, %v449
      %v471 = vpack.c.b16 %v452, %v451
      %v472 = vpack.c.b16 %v454, %v453
      %v473 = vpack.c.b16 %v456, %v455
      %v474 = vpack.c.b16 %v458, %v457
      %v477 = vunpack.c.l.b16 %v393
      %v478 = vunpack.c.l.b16 %v394
      %v479 = vpack.c.b16 %v478, %v477
      %vm481 = vcmask 130048
      %v483 = vsel %vm481, %v459, 0
      %v486 = vsel %vm481, %v460, 0
      %v489 = vsel %vm481, %v461, 0
      %v492 = vsel %vm481, %v462, 0
      %v495 = vsel %vm481, %v463, 0
      %v498 = vsel %vm481, %v464, 0
      %v501 = vsel %vm481, %v465, 0
      %v504 = vsel %vm481, %v466, 0
      %v507 = vsel %vm481, %v467, 0
      %v510 = vsel %vm481, %v468, 0
      %v513 = vsel %vm481, %v469, 0
      %v516 = vsel %vm481, %v470, 0
      %v519 = vsel %vm481, %v471, 0
      %v522 = vsel %vm481, %v472, 0
      %v525 = vsel %vm481, %v473, 0
      %v528 = vsel %vm481, %v474, 0
      %530 = vmatprep.subr.bf16.mxu0 0
      %531 = vmatpush1.bf16.msra.mxu0 %v479
      %532 = vmatprep.subr.bf16.mxu0 0
      %533 = vmatpush1.bf16.msra.mxu0 0
      %534 = vmatprep.subr.bf16.mxu0 0
      %535 = vmatpush1.bf16.msra.mxu0 0
      %536 = vmatprep.subr.bf16.mxu0 0
      %537 = vmatpush1.bf16.msra.mxu0 0
      %538 = vmatprep.subr.bf16.mxu0 0
      %539 = vmatpush1.bf16.msra.mxu0 0
      %540 = vmatprep.subr.bf16.mxu0 0
      %541 = vmatpush1.bf16.msra.mxu0 0
      %542 = vmatprep.subr.bf16.mxu0 0
      %543 = vmatpush1.bf16.msra.mxu0 0
      %544 = vmatprep.subr.bf16.mxu0 0
      %545 = vmatpush1.bf16.msra.mxu0 0
      %546 = vmatprep.subr.bf16.mxu0 0
      %547 = vmatpush1.bf16.msra.mxu0 0
      %548 = vmatprep.subr.bf16.mxu0 0
      %549 = vmatpush1.bf16.msra.mxu0 0
      %550 = vmatprep.subr.bf16.mxu0 0
      %551 = vmatpush1.bf16.msra.mxu0 0
      %552 = vmatprep.subr.bf16.mxu0 0
      %553 = vmatpush1.bf16.msra.mxu0 0
      %554 = vmatprep.subr.bf16.mxu0 0
      %555 = vmatpush1.bf16.msra.mxu0 0
      %556 = vmatprep.subr.bf16.mxu0 0
      %557 = vmatpush1.bf16.msra.mxu0 0
      %558 = vmatprep.subr.bf16.mxu0 0
      %559 = vmatpush1.bf16.msra.mxu0 0
      %560 = vmatprep.subr.bf16.mxu0 0
      %561 = vmatpush1.bf16.msra.mxu0 0
      %562 = vmatprep.mubr.bf16.mxu0 0
      %563 = vmatmul.mubr.bf16.gmra.mrb[0].mxu0 %v483
      %v564 = vpop.f32.mrb[0].mxu0
      %v565 = vadd.f32 0.0, %v564
      %v566 = vpop.f32.mrb[0].mxu0
      %v567 = vpop.f32.mrb[0].mxu0
      %v568 = vadd.f32 0.0, %v567
      %v569 = vpop.f32.mrb[0].mxu0
      %570 = vmatprep.mubr.bf16.mxu0 0
      %571 = vmatmul.mubr.bf16.gmra.mrb[0].mxu0 %v486
      %v572 = vpop.f32.mrb[0].mxu0
      %v573 = vadd.f32 0.0, %v572
      %v574 = vpop.f32.mrb[0].mxu0
      %v575 = vpop.f32.mrb[0].mxu0
      %v576 = vadd.f32 0.0, %v575
      %v577 = vpop.f32.mrb[0].mxu0
      %578 = vmatprep.mubr.bf16.mxu0 0
      %579 = vmatmul.mubr.bf16.gmra.mrb[0].mxu0 %v489
      %v580 = vpop.f32.mrb[0].mxu0
      %v581 = vadd.f32 0.0, %v580
      %v582 = vpop.f32.mrb[0].mxu0
      %v583 = vpop.f32.mrb[0].mxu0
      %v584 = vadd.f32 0.0, %v583
      %v585 = vpop.f32.mrb[0].mxu0
      %586 = vmatprep.mubr.bf16.mxu0 0
      %587 = vmatmul.mubr.bf16.gmra.mrb[0].mxu0 %v492
      %v588 = vpop.f32.mrb[0].mxu0
      %v589 = vadd.f32 0.0, %v588
      %v590 = vpop.f32.mrb[0].mxu0
      %v591 = vpop.f32.mrb[0].mxu0
      %v592 = vadd.f32 0.0, %v591
      %v593 = vpop.f32.mrb[0].mxu0
      %594 = vmatprep.mubr.bf16.mxu0 0
      %595 = vmatmul.mubr.bf16.gmra.mrb[0].mxu0 %v495
      %v596 = vpop.f32.mrb[0].mxu0
      %v597 = vadd.f32 0.0, %v596
      %v598 = vpop.f32.mrb[0].mxu0
      %v599 = vpop.f32.mrb[0].mxu0
      %v600 = vadd.f32 0.0, %v599
      %v601 = vpop.f32.mrb[0].mxu0
      %602 = vmatprep.mubr.bf16.mxu0 0
      %603 = vmatmul.mubr.bf16.gmra.mrb[0].mxu0 %v498
      %v604 = vpop.f32.mrb[0].mxu0
      %v605 = vadd.f32 0.0, %v604
      %v606 = vpop.f32.mrb[0].mxu0
      %v607 = vpop.f32.mrb[0].mxu0
      %v608 = vadd.f32 0.0, %v607
      %v609 = vpop.f32.mrb[0].mxu0
      %610 = vmatprep.mubr.bf16.mxu0 0
      %611 = vmatmul.mubr.bf16.gmra.mrb[0].mxu0 %v501
      %v612 = vpop.f32.mrb[0].mxu0
      %v613 = vadd.f32 0.0, %v612
      %v614 = vpop.f32.mrb[0].mxu0
      %v615 = vpop.f32.mrb[0].mxu0
      %v616 = vadd.f32 0.0, %v615
      %v617 = vpop.f32.mrb[0].mxu0
      %618 = vmatprep.mubr.bf16.mxu0 0
      %619 = vmatmul.mubr.bf16.gmra.mrb[0].mxu0 %v504
      %v620 = vpop.f32.mrb[0].mxu0
      %v621 = vadd.f32 0.0, %v620
      %v622 = vpop.f32.mrb[0].mxu0
      %v623 = vpop.f32.mrb[0].mxu0
      %v624 = vadd.f32 0.0, %v623
      %v625 = vpop.f32.mrb[0].mxu0
      %626 = vmatprep.mubr.bf16.mxu0 0
      %627 = vmatmul.mubr.bf16.gmra.mrb[0].mxu0 %v507
      %v628 = vpop.f32.mrb[0].mxu0
      %v629 = vadd.f32 0.0, %v628
      %v630 = vpop.f32.mrb[0].mxu0
      %v631 = vpop.f32.mrb[0].mxu0
      %v632 = vadd.f32 0.0, %v631
      %v633 = vpop.f32.mrb[0].mxu0
      %634 = vmatprep.mubr.bf16.mxu0 0
      %635 = vmatmul.mubr.bf16.gmra.mrb[0].mxu0 %v510
      %v636 = vpop.f32.mrb[0].mxu0
      %v637 = vadd.f32 0.0, %v636
      %v638 = vpop.f32.mrb[0].mxu0
      %v639 = vpop.f32.mrb[0].mxu0
      %v640 = vadd.f32 0.0, %v639
      %v641 = vpop.f32.mrb[0].mxu0
      %642 = vmatprep.mubr.bf16.mxu0 0
      %643 = vmatmul.mubr.bf16.gmra.mrb[0].mxu0 %v513
      %v644 = vpop.f32.mrb[0].mxu0
      %v645 = vadd.f32 0.0, %v644
      %v646 = vpop.f32.mrb[0].mxu0
      %v647 = vpop.f32.mrb[0].mxu0
      %v648 = vadd.f32 0.0, %v647
      %v649 = vpop.f32.mrb[0].mxu0
      %650 = vmatprep.mubr.bf16.mxu0 0
      %651 = vmatmul.mubr.bf16.gmra.mrb[0].mxu0 %v516
      %v652 = vpop.f32.mrb[0].mxu0
      %v653 = vadd.f32 0.0, %v652
      %v654 = vpop.f32.mrb[0].mxu0
      %v655 = vpop.f32.mrb[0].mxu0
      %v656 = vadd.f32 0.0, %v655
      %v657 = vpop.f32.mrb[0].mxu0
      %658 = vmatprep.mubr.bf16.mxu0 0
      %659 = vmatmul.mubr.bf16.gmra.mrb[0].mxu0 %v519
      %v660 = vpop.f32.mrb[0].mxu0
      %v661 = vadd.f32 0.0, %v660
      %v662 = vpop.f32.mrb[0].mxu0
      %v663 = vpop.f32.mrb[0].mxu0
      %v664 = vadd.f32 0.0, %v663
      %v665 = vpop.f32.mrb[0].mxu0
      %666 = vmatprep.mubr.bf16.mxu0 0
      %667 = vmatmul.mubr.bf16.gmra.mrb[0].mxu0 %v522
      %v668 = vpop.f32.mrb[0].mxu0
      %v669 = vadd.f32 0.0, %v668
      %v670 = vpop.f32.mrb[0].mxu0
      %v671 = vpop.f32.mrb[0].mxu0
      %v672 = vadd.f32 0.0, %v671
      %v673 = vpop.f32.mrb[0].mxu0
      %674 = vmatprep.mubr.bf16.mxu0 0
      %675 = vmatmul.mubr.bf16.gmra.mrb[0].mxu0 %v525
      %v676 = vpop.f32.mrb[0].mxu0
      %v677 = vadd.f32 0.0, %v676
      %v678 = vpop.f32.mrb[0].mxu0
      %v679 = vpop.f32.mrb[0].mxu0
      %v680 = vadd.f32 0.0, %v679
      %v681 = vpop.f32.mrb[0].mxu0
      %682 = vmatprep.mubr.bf16.mxu0 0
      %683 = vmatmul.mubr.bf16.gmra.mrb[0].mxu0 %v528
      %v684 = vpop.f32.mrb[0].mxu0
      %v685 = vadd.f32 0.0, %v684
      %v686 = vpop.f32.mrb[0].mxu0
      %v687 = vpop.f32.mrb[0].mxu0
      %v688 = vadd.f32 0.0, %v687
      %v689 = vpop.f32.mrb[0].mxu0
      %690 = vdwg.mxu0
      %v691 = vld [vmem:[%s4] sm:$0x1]
      %v693 = vlaneseq
      %v694 = vshrl.u32 %v693, 7
      %v695 = vsub.s32 0, %v694
      %v696 = vrot.slane %v691, %v695
      %v698 = vmul.f32 %v565, %v696
      %v699 = vmul.f32 %v568, %v696
      %v700 = vmul.f32 %v573, %v696
      %v701 = vmul.f32 %v576, %v696
      %v702 = vmul.f32 %v581, %v696
      %v703 = vmul.f32 %v584, %v696
      %v704 = vmul.f32 %v589, %v696
      %v705 = vmul.f32 %v592, %v696
      %v706 = vmul.f32 %v597, %v696
      %v707 = vmul.f32 %v600, %v696
      %v708 = vmul.f32 %v605, %v696
      %v709 = vmul.f32 %v608, %v696
      %v710 = vmul.f32 %v613, %v696
      %v711 = vmul.f32 %v616, %v696
      %v712 = vmul.f32 %v621, %v696
      %v713 = vmul.f32 %v624, %v696
      %v714 = vmul.f32 %v629, %v696
      %v715 = vmul.f32 %v632, %v696
      %v716 = vmul.f32 %v637, %v696
      %v717 = vmul.f32 %v640, %v696
      %v718 = vmul.f32 %v645, %v696
      %v719 = vmul.f32 %v648, %v696
      %v720 = vmul.f32 %v653, %v696
      %v721 = vmul.f32 %v656, %v696
      %v722 = vmul.f32 %v661, %v696
      %v723 = vmul.f32 %v664, %v696
      %v724 = vmul.f32 %v669, %v696
      %v725 = vmul.f32 %v672, %v696
      %v726 = vmul.f32 %v677, %v696
      %v727 = vmul.f32 %v680, %v696
      %v728 = vmul.f32 %v685, %v696
      %v729 = vmul.f32 %v688, %v696
      %v730 = vld [vmem:[%s5] sm:$0x1]
      %v732 = vlaneseq
      %v733 = vshrl.u32 %v732, 7
      %v734 = vsub.s32 0, %v733
      %v735 = vrot.slane %v730, %v734
      %v737 = vadd.f32 %v698, %v735
      %v738 = vadd.f32 %v699, %v735
      %v739 = vadd.f32 %v700, %v735
      %v740 = vadd.f32 %v701, %v735
      %v741 = vadd.f32 %v702, %v735
      %v742 = vadd.f32 %v703, %v735
      %v743 = vadd.f32 %v704, %v735
      %v744 = vadd.f32 %v705, %v735
      %v745 = vadd.f32 %v706, %v735
      %v746 = vadd.f32 %v707, %v735
      %v747 = vadd.f32 %v708, %v735
      %v748 = vadd.f32 %v709, %v735
      %v749 = vadd.f32 %v710, %v735
      %v750 = vadd.f32 %v711, %v735
      %v751 = vadd.f32 %v712, %v735
      %v752 = vadd.f32 %v713, %v735
      %v753 = vadd.f32 %v714, %v735
      %v754 = vadd.f32 %v715, %v735
      %v755 = vadd.f32 %v716, %v735
      %v756 = vadd.f32 %v717, %v735
      %v757 = vadd.f32 %v718, %v735
      %v758 = vadd.f32 %v719, %v735
      %v759 = vadd.f32 %v720, %v735
      %v760 = vadd.f32 %v721, %v735
      %v761 = vadd.f32 %v722, %v735
      %v762 = vadd.f32 %v723, %v735
      %v763 = vadd.f32 %v724, %v735
      %v764 = vadd.f32 %v725, %v735
      %v765 = vadd.f32 %v726, %v735
      %v766 = vadd.f32 %v727, %v735
      %v767 = vadd.f32 %v728, %v735
      %v768 = vadd.f32 %v729, %v735
      %v769 = vmax.f32 %v737, 0.0
      %v770 = vmax.f32 %v738, 0.0
      %v771 = vmax.f32 %v739, 0.0
      %v772 = vmax.f32 %v740, 0.0
      %v773 = vmax.f32 %v741, 0.0
      %v774 = vmax.f32 %v742, 0.0
      %v775 = vmax.f32 %v743, 0.0
      %v776 = vmax.f32 %v744, 0.0
      %v777 = vmax.f32 %v745, 0.0
      %v778 = vmax.f32 %v746, 0.0
      %v779 = vmax.f32 %v747, 0.0
      %v780 = vmax.f32 %v748, 0.0
      %v781 = vmax.f32 %v749, 0.0
      %v782 = vmax.f32 %v750, 0.0
      %v783 = vmax.f32 %v751, 0.0
      %v784 = vmax.f32 %v752, 0.0
      %v785 = vmax.f32 %v753, 0.0
      %v786 = vmax.f32 %v754, 0.0
      %v787 = vmax.f32 %v755, 0.0
      %v788 = vmax.f32 %v756, 0.0
      %v789 = vmax.f32 %v757, 0.0
      %v790 = vmax.f32 %v758, 0.0
      %v791 = vmax.f32 %v759, 0.0
      %v792 = vmax.f32 %v760, 0.0
      %v793 = vmax.f32 %v761, 0.0
      %v794 = vmax.f32 %v762, 0.0
      %v795 = vmax.f32 %v763, 0.0
      %v796 = vmax.f32 %v764, 0.0
      %v797 = vmax.f32 %v765, 0.0
      %v798 = vmax.f32 %v766, 0.0
      %v799 = vmax.f32 %v767, 0.0
      %v800 = vmax.f32 %v768, 0.0
      %vm833 = vcmask 1040384
      %v834 = vrot.slane %v769, 7
      %v835 = vrot.slane %v770, 7
      %v836 = vsel %vm833, %v834, %v835
      %v837 = vrot.slane %v771, 7
      %v838 = vrot.slane %v772, 7
      %v839 = vsel %vm833, %v837, %v838
      %v840 = vrot.slane %v773, 7
      %v841 = vrot.slane %v774, 7
      %v842 = vsel %vm833, %v840, %v841
      %v843 = vrot.slane %v775, 7
      %v844 = vrot.slane %v776, 7
      %v845 = vsel %vm833, %v843, %v844
      %v846 = vrot.slane %v777, 7
      %v847 = vrot.slane %v778, 7
      %v848 = vsel %vm833, %v846, %v847
      %v849 = vrot.slane %v779, 7
      %v850 = vrot.slane %v780, 7
      %v851 = vsel %vm833, %v849, %v850
      %v852 = vrot.slane %v781, 7
      %v853 = vrot.slane %v782, 7
      %v854 = vsel %vm833, %v852, %v853
      %v855 = vrot.slane %v783, 7
      %v856 = vrot.slane %v784, 7
      %v857 = vsel %vm833, %v855, %v856
      %v858 = vrot.slane %v785, 7
      %v859 = vrot.slane %v786, 7
      %v860 = vsel %vm833, %v858, %v859
      %v861 = vrot.slane %v787, 7
      %v862 = vrot.slane %v788, 7
      %v863 = vsel %vm833, %v861, %v862
      %v864 = vrot.slane %v789, 7
      %v865 = vrot.slane %v790, 7
      %v866 = vsel %vm833, %v864, %v865
      %v867 = vrot.slane %v791, 7
      %v868 = vrot.slane %v792, 7
      %v869 = vsel %vm833, %v867, %v868
      %v870 = vrot.slane %v793, 7
      %v871 = vrot.slane %v794, 7
      %v872 = vsel %vm833, %v870, %v871
      %v873 = vrot.slane %v795, 7
      %v874 = vrot.slane %v796, 7
      %v875 = vsel %vm833, %v873, %v874
      %v876 = vrot.slane %v797, 7
      %v877 = vrot.slane %v798, 7
      %v878 = vsel %vm833, %v876, %v877
      %v879 = vrot.slane %v799, 7
      %v880 = vrot.slane %v800, 7
      %v881 = vsel %vm833, %v879, %v880
      %v930 = vsel %vm833, 0.0, %v834
      %v931 = vsel %vm833, 0.0, %v837
      %v932 = vsel %vm833, 0.0, %v840
      %v933 = vsel %vm833, 0.0, %v843
      %v934 = vsel %vm833, 0.0, %v846
      %v935 = vsel %vm833, 0.0, %v849
      %v936 = vsel %vm833, 0.0, %v852
      %v937 = vsel %vm833, 0.0, %v855
      %v938 = vsel %vm833, 0.0, %v858
      %v939 = vsel %vm833, 0.0, %v861
      %v940 = vsel %vm833, 0.0, %v864
      %v941 = vsel %vm833, 0.0, %v867
      %v942 = vsel %vm833, 0.0, %v870
      %v943 = vsel %vm833, 0.0, %v873
      %v944 = vsel %vm833, 0.0, %v876
      %v945 = vsel %vm833, 0.0, %v879
      %v946 = vsel %vm833, %v835, 0.0
      %v947 = vsel %vm833, %v838, 0.0
      %v948 = vsel %vm833, %v841, 0.0
      %v949 = vsel %vm833, %v844, 0.0
      %v950 = vsel %vm833, %v847, 0.0
      %v951 = vsel %vm833, %v850, 0.0
      %v952 = vsel %vm833, %v853, 0.0
      %v953 = vsel %vm833, %v856, 0.0
      %v954 = vsel %vm833, %v859, 0.0
      %v955 = vsel %vm833, %v862, 0.0
      %v956 = vsel %vm833, %v865, 0.0
      %v957 = vsel %vm833, %v868, 0.0
      %v958 = vsel %vm833, %v871, 0.0
      %v959 = vsel %vm833, %v874, 0.0
      %v960 = vsel %vm833, %v877, 0.0
      %v961 = vsel %vm833, %v880, 0.0
      %962 = vst [vmem:[#allocation2] sm:$0xff] 0.0
      %963 = vst [vmem:[#allocation2 + $0x8] sm:$0xff] 0.0
      %964 = vst [vmem:[#allocation2 + $0x10] sm:$0x3] 0.0
      %965 = vst [vmem:[#allocation2 + $0x18] sm:$0xff] %v930
      %966 = vst [vmem:[#allocation2 + $0x20] sm:$0xff] %v836
      %967 = vst [vmem:[#allocation2 + $0x28] sm:$0x3] %v946
      %968 = vst [vmem:[#allocation2 + $0x30] sm:$0xff] %v931
      %969 = vst [vmem:[#allocation2 + $0x38] sm:$0xff] %v839
      %970 = vst [vmem:[#allocation2 + $0x40] sm:$0x3] %v947
      %971 = vst [vmem:[#allocation2 + $0x48] sm:$0xff] %v932
      %972 = vst [vmem:[#allocation2 + $0x50] sm:$0xff] %v842
      %973 = vst [vmem:[#allocation2 + $0x58] sm:$0x3] %v948
      %974 = vst [vmem:[#allocation2 + $0x60] sm:$0xff] %v933
      %975 = vst [vmem:[#allocation2 + $0x68] sm:$0xff] %v845
      %976 = vst [vmem:[#allocation2 + $0x70] sm:$0x3] %v949
      %977 = vst [vmem:[#allocation2 + $0x78] sm:$0xff] %v934
      %978 = vst [vmem:[#allocation2 + $0x80] sm:$0xff] %v848
      %979 = vst [vmem:[#allocation2 + $0x88] sm:$0x3] %v950
      %980 = vst [vmem:[#allocation2 + $0x90] sm:$0xff] %v935
      %981 = vst [vmem:[#allocation2 + $0x98] sm:$0xff] %v851
      %982 = vst [vmem:[#allocation2 + $0xa0] sm:$0x3] %v951
      %983 = vst [vmem:[#allocation2 + $0xa8] sm:$0xff] %v936
      %984 = vst [vmem:[#allocation2 + $0xb0] sm:$0xff] %v854
      %985 = vst [vmem:[#allocation2 + $0xb8] sm:$0x3] %v952
      %986 = vst [vmem:[#allocation2 + $0xc0] sm:$0xff] %v937
      %987 = vst [vmem:[#allocation2 + $0xc8] sm:$0xff] %v857
      %988 = vst [vmem:[#allocation2 + $0xd0] sm:$0x3] %v953
      %989 = vst [vmem:[#allocation2 + $0xd8] sm:$0xff] %v938
      %990 = vst [vmem:[#allocation2 + $0xe0] sm:$0xff] %v860
      %991 = vst [vmem:[#allocation2 + $0xe8] sm:$0x3] %v954
      %992 = vst [vmem:[#allocation2 + $0xf0] sm:$0xff] %v939
      %993 = vst [vmem:[#allocation2 + $0xf8] sm:$0xff] %v863
      %994 = vst [vmem:[#allocation2 + $0x100] sm:$0x3] %v955
      %995 = vst [vmem:[#allocation2 + $0x108] sm:$0xff] %v940
      %996 = vst [vmem:[#allocation2 + $0x110] sm:$0xff] %v866
      %997 = vst [vmem:[#allocation2 + $0x118] sm:$0x3] %v956
      %998 = vst [vmem:[#allocation2 + $0x120] sm:$0xff] %v941
      %999 = vst [vmem:[#allocation2 + $0x128] sm:$0xff] %v869
      %1000 = vst [vmem:[#allocation2 + $0x130] sm:$0x3] %v957
      %1001 = vst [vmem:[#allocation2 + $0x138] sm:$0xff] %v942
      %1002 = vst [vmem:[#allocation2 + $0x140] sm:$0xff] %v872
      %1003 = vst [vmem:[#allocation2 + $0x148] sm:$0x3] %v958
      %1004 = vst [vmem:[#allocation2 + $0x150] sm:$0xff] %v943
      %1005 = vst [vmem:[#allocation2 + $0x158] sm:$0xff] %v875
      %1006 = vst [vmem:[#allocation2 + $0x160] sm:$0x3] %v959
      %1007 = vst [vmem:[#allocation2 + $0x168] sm:$0xff] %v944
      %1008 = vst [vmem:[#allocation2 + $0x170] sm:$0xff] %v878
      %1009 = vst [vmem:[#allocation2 + $0x178] sm:$0x3] %v960
      %1010 = vst [vmem:[#allocation2 + $0x180] sm:$0xff] %v945
      %1011 = vst [vmem:[#allocation2 + $0x188] sm:$0xff] %v881
      %1012 = vst [vmem:[#allocation2 + $0x190] sm:$0x3] %v961
      %1013 = vst [vmem:[#allocation2 + $0x198] sm:$0xff] 0.0
      %1014 = vst [vmem:[#allocation2 + $0x1a0] sm:$0xff] 0.0
      %1015 = vst [vmem:[#allocation2 + $0x1a8] sm:$0x3] 0.0
      %v1016 = vld [vmem:[#allocation2] sm:$0xff]
      %v1017 = vld [vmem:[#allocation2 + $0x8] sm:$0xff]
      %v1018 = vld [vmem:[#allocation2 + $0x18] sm:$0xff]
      %v1019 = vld [vmem:[#allocation2 + $0x20] sm:$0xff]
      %v1020 = vld [vmem:[#allocation2 + $0x30] sm:$0xff]
      %v1021 = vld [vmem:[#allocation2 + $0x38] sm:$0xff]
      %v1022 = vld [vmem:[#allocation2 + $0x48] sm:$0xff]
      %v1023 = vld [vmem:[#allocation2 + $0x50] sm:$0xff]
      %v1024 = vld [vmem:[#allocation2 + $0x60] sm:$0xff]
      %v1025 = vld [vmem:[#allocation2 + $0x68] sm:$0xff]
      %v1026 = vld [vmem:[#allocation2 + $0x78] sm:$0xff]
      %v1027 = vld [vmem:[#allocation2 + $0x80] sm:$0xff]
      %v1028 = vld [vmem:[#allocation2 + $0x90] sm:$0xff]
      %v1029 = vld [vmem:[#allocation2 + $0x98] sm:$0xff]
      %v1030 = vld [vmem:[#allocation2 + $0xa8] sm:$0xff]
      %v1031 = vld [vmem:[#allocation2 + $0xb0] sm:$0xff]
      %v1032 = vld [vmem:[#allocation2 + $0xc0] sm:$0xff]
      %v1033 = vld [vmem:[#allocation2 + $0xc8] sm:$0xff]
      %v1034 = vld [vmem:[#allocation2 + $0xd8] sm:$0xff]
      %v1035 = vld [vmem:[#allocation2 + $0xe0] sm:$0xff]
      %v1036 = vld [vmem:[#allocation2 + $0xf0] sm:$0xff]
      %v1037 = vld [vmem:[#allocation2 + $0xf8] sm:$0xff]
      %v1038 = vld [vmem:[#allocation2 + $0x108] sm:$0xff]
      %v1039 = vld [vmem:[#allocation2 + $0x110] sm:$0xff]
      %v1040 = vld [vmem:[#allocation2 + $0x120] sm:$0xff]
      %v1041 = vld [vmem:[#allocation2 + $0x128] sm:$0xff]
      %v1042 = vld [vmem:[#allocation2 + $0x138] sm:$0xff]
      %v1043 = vld [vmem:[#allocation2 + $0x140] sm:$0xff]
      %v1044 = vld [vmem:[#allocation2 + $0x150] sm:$0xff]
      %v1045 = vld [vmem:[#allocation2 + $0x158] sm:$0xff]
      %v1046 = vld [vmem:[#allocation2 + $0x168] sm:$0xff]
      %v1047 = vld [vmem:[#allocation2 + $0x170] sm:$0xff]
      %v1048 = vpack.c.bf16 %v1017, %v1016
      %v1049 = vpack.c.bf16 %v1019, %v1018
      %v1050 = vpack.c.bf16 %v1021, %v1020
      %v1051 = vpack.c.bf16 %v1023, %v1022
      %v1052 = vpack.c.bf16 %v1025, %v1024
      %v1053 = vpack.c.bf16 %v1027, %v1026
      %v1054 = vpack.c.bf16 %v1029, %v1028
      %v1055 = vpack.c.bf16 %v1031, %v1030
      %v1056 = vpack.c.bf16 %v1033, %v1032
      %v1057 = vpack.c.bf16 %v1035, %v1034
      %v1058 = vpack.c.bf16 %v1037, %v1036
      %v1059 = vpack.c.bf16 %v1039, %v1038
      %v1060 = vpack.c.bf16 %v1041, %v1040
      %v1061 = vpack.c.bf16 %v1043, %v1042
      %v1062 = vpack.c.bf16 %v1045, %v1044
      %v1063 = vpack.c.bf16 %v1047, %v1046
      %v1064 = vld [vmem:[#allocation2 + $0x1] sm:$0xff]
      %v1065 = vld [vmem:[#allocation2 + $0x9] sm:$0xff]
      %v1066 = vld [vmem:[#allocation2 + $0x19] sm:$0xff]
      %v1067 = vld [vmem:[#allocation2 + $0x21] sm:$0xff]
      %v1068 = vld [vmem:[#allocation2 + $0x31] sm:$0xff]
      %v1069 = vld [vmem:[#allocation2 + $0x39] sm:$0xff]
      %v1070 = vld [vmem:[#allocation2 + $0x49] sm:$0xff]
      %v1071 = vld [vmem:[#allocation2 + $0x51] sm:$0xff]
      %v1072 = vld [vmem:[#allocation2 + $0x61] sm:$0xff]
      %v1073 = vld [vmem:[#allocation2 + $0x69] sm:$0xff]
      %v1074 = vld [vmem:[#allocation2 + $0x79] sm:$0xff]
      %v1075 = vld [vmem:[#allocation2 + $0x81] sm:$0xff]
      %v1076 = vld [vmem:[#allocation2 + $0x91] sm:$0xff]
      %v1077 = vld [vmem:[#allocation2 + $0x99] sm:$0xff]
      %v1078 = vld [vmem:[#allocation2 + $0xa9] sm:$0xff]
      %v1079 = vld [vmem:[#allocation2 + $0xb1] sm:$0xff]
      %v1080 = vld [vmem:[#allocation2 + $0xc1] sm:$0xff]
      %v1081 = vld [vmem:[#allocation2 + $0xc9] sm:$0xff]
      %v1082 = vld [vmem:[#allocation2 + $0xd9] sm:$0xff]
      %v1083 = vld [vmem:[#allocation2 + $0xe1] sm:$0xff]
      %v1084 = vld [vmem:[#allocation2 + $0xf1] sm:$0xff]
      %v1085 = vld [vmem:[#allocation2 + $0xf9] sm:$0xff]
      %v1086 = vld [vmem:[#allocation2 + $0x109] sm:$0xff]
      %v1087 = vld [vmem:[#allocation2 + $0x111] sm:$0xff]
      %v1088 = vld [vmem:[#allocation2 + $0x121] sm:$0xff]
      %v1089 = vld [vmem:[#allocation2 + $0x129] sm:$0xff]
      %v1090 = vld [vmem:[#allocation2 + $0x139] sm:$0xff]
      %v1091 = vld [vmem:[#allocation2 + $0x141] sm:$0xff]
      %v1092 = vld [vmem:[#allocation2 + $0x151] sm:$0xff]
      %v1093 = vld [vmem:[#allocation2 + $0x159] sm:$0xff]
      %v1094 = vld [vmem:[#allocation2 + $0x169] sm:$0xff]
      %v1095 = vld [vmem:[#allocation2 + $0x171] sm:$0xff]
      %v1096 = vpack.c.bf16 %v1065, %v1064
      %v1097 = vpack.c.bf16 %v1067, %v1066
      %v1098 = vpack.c.bf16 %v1069, %v1068
      %v1099 = vpack.c.bf16 %v1071, %v1070
      %v1100 = vpack.c.bf16 %v1073, %v1072
      %v1101 = vpack.c.bf16 %v1075, %v1074
      %v1102 = vpack.c.bf16 %v1077, %v1076
      %v1103 = vpack.c.bf16 %v1079, %v1078
      %v1104 = vpack.c.bf16 %v1081, %v1080
      %v1105 = vpack.c.bf16 %v1083, %v1082
      %v1106 = vpack.c.bf16 %v1085, %v1084
      %v1107 = vpack.c.bf16 %v1087, %v1086
      %v1108 = vpack.c.bf16 %v1089, %v1088
      %v1109 = vpack.c.bf16 %v1091, %v1090
      %v1110 = vpack.c.bf16 %v1093, %v1092
      %v1111 = vpack.c.bf16 %v1095, %v1094
      %v1112 = vld [vmem:[#allocation2 + $0x2] sm:$0xff]
      %v1113 = vld [vmem:[#allocation2 + $0xa] sm:$0xff]
      %v1114 = vld [vmem:[#allocation2 + $0x1a] sm:$0xff]
      %v1115 = vld [vmem:[#allocation2 + $0x22] sm:$0xff]
      %v1116 = vld [vmem:[#allocation2 + $0x32] sm:$0xff]
      %v1117 = vld [vmem:[#allocation2 + $0x3a] sm:$0xff]
      %v1118 = vld [vmem:[#allocation2 + $0x4a] sm:$0xff]
      %v1119 = vld [vmem:[#allocation2 + $0x52] sm:$0xff]
      %v1120 = vld [vmem:[#allocation2 + $0x62] sm:$0xff]
      %v1121 = vld [vmem:[#allocation2 + $0x6a] sm:$0xff]
      %v1122 = vld [vmem:[#allocation2 + $0x7a] sm:$0xff]
      %v1123 = vld [vmem:[#allocation2 + $0x82] sm:$0xff]
      %v1124 = vld [vmem:[#allocation2 + $0x92] sm:$0xff]
      %v1125 = vld [vmem:[#allocation2 + $0x9a] sm:$0xff]
      %v1126 = vld [vmem:[#allocation2 + $0xaa] sm:$0xff]
      %v1127 = vld [vmem:[#allocation2 + $0xb2] sm:$0xff]
      %v1128 = vld [vmem:[#allocation2 + $0xc2] sm:$0xff]
      %v1129 = vld [vmem:[#allocation2 + $0xca] sm:$0xff]
      %v1130 = vld [vmem:[#allocation2 + $0xda] sm:$0xff]
      %v1131 = vld [vmem:[#allocation2 + $0xe2] sm:$0xff]
      %v1132 = vld [vmem:[#allocation2 + $0xf2] sm:$0xff]
      %v1133 = vld [vmem:[#allocation2 + $0xfa] sm:$0xff]
      %v1134 = vld [vmem:[#allocation2 + $0x10a] sm:$0xff]
      %v1135 = vld [vmem:[#allocation2 + $0x112] sm:$0xff]
      %v1136 = vld [vmem:[#allocation2 + $0x122] sm:$0xff]
      %v1137 = vld [vmem:[#allocation2 + $0x12a] sm:$0xff]
      %v1138 = vld [vmem:[#allocation2 + $0x13a] sm:$0xff]
      %v1139 = vld [vmem:[#allocation2 + $0x142] sm:$0xff]
      %v1140 = vld [vmem:[#allocation2 + $0x152] sm:$0xff]
      %v1141 = vld [vmem:[#allocation2 + $0x15a] sm:$0xff]
      %v1142 = vld [vmem:[#allocation2 + $0x16a] sm:$0xff]
      %v1143 = vld [vmem:[#allocation2 + $0x172] sm:$0xff]
      %v1144 = vpack.c.bf16 %v1113, %v1112
      %v1145 = vpack.c.bf16 %v1115, %v1114
      %v1146 = vpack.c.bf16 %v1117, %v1116
      %v1147 = vpack.c.bf16 %v1119, %v1118
      %v1148 = vpack.c.bf16 %v1121, %v1120
      %v1149 = vpack.c.bf16 %v1123, %v1122
      %v1150 = vpack.c.bf16 %v1125, %v1124
      %v1151 = vpack.c.bf16 %v1127, %v1126
      %v1152 = vpack.c.bf16 %v1129, %v1128
      %v1153 = vpack.c.bf16 %v1131, %v1130
      %v1154 = vpack.c.bf16 %v1133, %v1132
      %v1155 = vpack.c.bf16 %v1135, %v1134
      %v1156 = vpack.c.bf16 %v1137, %v1136
      %v1157 = vpack.c.bf16 %v1139, %v1138
      %v1158 = vpack.c.bf16 %v1141, %v1140
      %v1159 = vpack.c.bf16 %v1143, %v1142
      %s1160 = scalar_lea.vmem [#allocation2], 24
      %v1161 = vld [vmem:[%s1160] sm:$0xff]
      %v1162 = vld [vmem:[%s1160 + $0x8] sm:$0xff]
      %v1163 = vld [vmem:[%s1160 + $0x18] sm:$0xff]
      %v1164 = vld [vmem:[%s1160 + $0x20] sm:$0xff]
      %v1165 = vld [vmem:[%s1160 + $0x30] sm:$0xff]
      %v1166 = vld [vmem:[%s1160 + $0x38] sm:$0xff]
      %v1167 = vld [vmem:[%s1160 + $0x48] sm:$0xff]
      %v1168 = vld [vmem:[%s1160 + $0x50] sm:$0xff]
      %v1169 = vld [vmem:[%s1160 + $0x60] sm:$0xff]
      %v1170 = vld [vmem:[%s1160 + $0x68] sm:$0xff]
      %v1171 = vld [vmem:[%s1160 + $0x78] sm:$0xff]
      %v1172 = vld [vmem:[%s1160 + $0x80] sm:$0xff]
      %v1173 = vld [vmem:[%s1160 + $0x90] sm:$0xff]
      %v1174 = vld [vmem:[%s1160 + $0x98] sm:$0xff]
      %v1175 = vld [vmem:[%s1160 + $0xa8] sm:$0xff]
      %v1176 = vld [vmem:[%s1160 + $0xb0] sm:$0xff]
      %v1177 = vld [vmem:[%s1160 + $0xc0] sm:$0xff]
      %v1178 = vld [vmem:[%s1160 + $0xc8] sm:$0xff]
      %v1179 = vld [vmem:[%s1160 + $0xd8] sm:$0xff]
      %v1180 = vld [vmem:[%s1160 + $0xe0] sm:$0xff]
      %v1181 = vld [vmem:[%s1160 + $0xf0] sm:$0xff]
      %v1182 = vld [vmem:[%s1160 + $0xf8] sm:$0xff]
      %v1183 = vld [vmem:[%s1160 + $0x108] sm:$0xff]
      %v1184 = vld [vmem:[%s1160 + $0x110] sm:$0xff]
      %v1185 = vld [vmem:[%s1160 + $0x120] sm:$0xff]
      %v1186 = vld [vmem:[%s1160 + $0x128] sm:$0xff]
      %v1187 = vld [vmem:[%s1160 + $0x138] sm:$0xff]
      %v1188 = vld [vmem:[%s1160 + $0x140] sm:$0xff]
      %v1189 = vld [vmem:[%s1160 + $0x150] sm:$0xff]
      %v1190 = vld [vmem:[%s1160 + $0x158] sm:$0xff]
      %v1191 = vld [vmem:[%s1160 + $0x168] sm:$0xff]
      %v1192 = vld [vmem:[%s1160 + $0x170] sm:$0xff]
      %v1193 = vpack.c.bf16 %v1162, %v1161
      %v1194 = vpack.c.bf16 %v1164, %v1163
      %v1195 = vpack.c.bf16 %v1166, %v1165
      %v1196 = vpack.c.bf16 %v1168, %v1167
      %v1197 = vpack.c.bf16 %v1170, %v1169
      %v1198 = vpack.c.bf16 %v1172, %v1171
      %v1199 = vpack.c.bf16 %v1174, %v1173
      %v1200 = vpack.c.bf16 %v1176, %v1175
      %v1201 = vpack.c.bf16 %v1178, %v1177
      %v1202 = vpack.c.bf16 %v1180, %v1179
      %v1203 = vpack.c.bf16 %v1182, %v1181
      %v1204 = vpack.c.bf16 %v1184, %v1183
      %v1205 = vpack.c.bf16 %v1186, %v1185
      %v1206 = vpack.c.bf16 %v1188, %v1187
      %v1207 = vpack.c.bf16 %v1190, %v1189
      %v1208 = vpack.c.bf16 %v1192, %v1191
      %v1209 = vld [vmem:[%s1160 + $0x1] sm:$0xff]
      %v1210 = vld [vmem:[%s1160 + $0x9] sm:$0xff]
      %v1211 = vld [vmem:[%s1160 + $0x19] sm:$0xff]
      %v1212 = vld [vmem:[%s1160 + $0x21] sm:$0xff]
      %v1213 = vld [vmem:[%s1160 + $0x31] sm:$0xff]
      %v1214 = vld [vmem:[%s1160 + $0x39] sm:$0xff]
      %v1215 = vld [vmem:[%s1160 + $0x49] sm:$0xff]
      %v1216 = vld [vmem:[%s1160 + $0x51] sm:$0xff]
      %v1217 = vld [vmem:[%s1160 + $0x61] sm:$0xff]
      %v1218 = vld [vmem:[%s1160 + $0x69] sm:$0xff]
      %v1219 = vld [vmem:[%s1160 + $0x79] sm:$0xff]
      %v1220 = vld [vmem:[%s1160 + $0x81] sm:$0xff]
      %v1221 = vld [vmem:[%s1160 + $0x91] sm:$0xff]
      %v1222 = vld [vmem:[%s1160 + $0x99] sm:$0xff]
      %v1223 = vld [vmem:[%s1160 + $0xa9] sm:$0xff]
      %v1224 = vld [vmem:[%s1160 + $0xb1] sm:$0xff]
      %v1225 = vld [vmem:[%s1160 + $0xc1] sm:$0xff]
      %v1226 = vld [vmem:[%s1160 + $0xc9] sm:$0xff]
      %v1227 = vld [vmem:[%s1160 + $0xd9] sm:$0xff]
      %v1228 = vld [vmem:[%s1160 + $0xe1] sm:$0xff]
      %v1229 = vld [vmem:[%s1160 + $0xf1] sm:$0xff]
      %v1230 = vld [vmem:[%s1160 + $0xf9] sm:$0xff]
      %v1231 = vld [vmem:[%s1160 + $0x109] sm:$0xff]
      %v1232 = vld [vmem:[%s1160 + $0x111] sm:$0xff]
      %v1233 = vld [vmem:[%s1160 + $0x121] sm:$0xff]
      %v1234 = vld [vmem:[%s1160 + $0x129] sm:$0xff]
      %v1235 = vld [vmem:[%s1160 + $0x139] sm:$0xff]
      %v1236 = vld [vmem:[%s1160 + $0x141] sm:$0xff]
      %v1237 = vld [vmem:[%s1160 + $0x151] sm:$0xff]
      %v1238 = vld [vmem:[%s1160 + $0x159] sm:$0xff]
      %v1239 = vld [vmem:[%s1160 + $0x169] sm:$0xff]
      %v1240 = vld [vmem:[%s1160 + $0x171] sm:$0xff]
      %v1241 = vpack.c.bf16 %v1210, %v1209
      %v1242 = vpack.c.bf16 %v1212, %v1211
      %v1243 = vpack.c.bf16 %v1214, %v1213
      %v1244 = vpack.c.bf16 %v1216, %v1215
      %v1245 = vpack.c.bf16 %v1218, %v1217
      %v1246 = vpack.c.bf16 %v1220, %v1219
      %v1247 = vpack.c.bf16 %v1222, %v1221
      %v1248 = vpack.c.bf16 %v1224, %v1223
      %v1249 = vpack.c.bf16 %v1226, %v1225
      %v1250 = vpack.c.bf16 %v1228, %v1227
      %v1251 = vpack.c.bf16 %v1230, %v1229
      %v1252 = vpack.c.bf16 %v1232, %v1231
      %v1253 = vpack.c.bf16 %v1234, %v1233
      %v1254 = vpack.c.bf16 %v1236, %v1235
      %v1255 = vpack.c.bf16 %v1238, %v1237
      %v1256 = vpack.c.bf16 %v1240, %v1239
      %v1257 = vld [vmem:[%s1160 + $0x2] sm:$0xff]
      %v1258 = vld [vmem:[%s1160 + $0xa] sm:$0xff]
      %v1259 = vld [vmem:[%s1160 + $0x1a] sm:$0xff]
      %v1260 = vld [vmem:[%s1160 + $0x22] sm:$0xff]
      %v1261 = vld [vmem:[%s1160 + $0x32] sm:$0xff]
      %v1262 = vld [vmem:[%s1160 + $0x3a] sm:$0xff]
      %v1263 = vld [vmem:[%s1160 + $0x4a] sm:$0xff]
      %v1264 = vld [vmem:[%s1160 + $0x52] sm:$0xff]
      %v1265 = vld [vmem:[%s1160 + $0x62] sm:$0xff]
      %v1266 = vld [vmem:[%s1160 + $0x6a] sm:$0xff]
      %v1267 = vld [vmem:[%s1160 + $0x7a] sm:$0xff]
      %v1268 = vld [vmem:[%s1160 + $0x82] sm:$0xff]
      %v1269 = vld [vmem:[%s1160 + $0x92] sm:$0xff]
      %v1270 = vld [vmem:[%s1160 + $0x9a] sm:$0xff]
      %v1271 = vld [vmem:[%s1160 + $0xaa] sm:$0xff]
      %v1272 = vld [vmem:[%s1160 + $0xb2] sm:$0xff]
      %v1273 = vld [vmem:[%s1160 + $0xc2] sm:$0xff]
      %v1274 = vld [vmem:[%s1160 + $0xca] sm:$0xff]
      %v1275 = vld [vmem:[%s1160 + $0xda] sm:$0xff]
      %v1276 = vld [vmem:[%s1160 + $0xe2] sm:$0xff]
      %v1277 = vld [vmem:[%s1160 + $0xf2] sm:$0xff]
      %v1278 = vld [vmem:[%s1160 + $0xfa] sm:$0xff]
      %v1279 = vld [vmem:[%s1160 + $0x10a] sm:$0xff]
      %v1280 = vld [vmem:[%s1160 + $0x112] sm:$0xff]
      %v1281 = vld [vmem:[%s1160 + $0x122] sm:$0xff]
      %v1282 = vld [vmem:[%s1160 + $0x12a] sm:$0xff]
      %v1283 = vld [vmem:[%s1160 + $0x13a] sm:$0xff]
      %v1284 = vld [vmem:[%s1160 + $0x142] sm:$0xff]
      %v1285 = vld [vmem:[%s1160 + $0x152] sm:$0xff]
      %v1286 = vld [vmem:[%s1160 + $0x15a] sm:$0xff]
      %v1287 = vld [vmem:[%s1160 + $0x16a] sm:$0xff]
      %v1288 = vld [vmem:[%s1160 + $0x172] sm:$0xff]
      %v1289 = vpack.c.bf16 %v1258, %v1257
      %v1290 = vpack.c.bf16 %v1260, %v1259
      %v1291 = vpack.c.bf16 %v1262, %v1261
      %v1292 = vpack.c.bf16 %v1264, %v1263
      %v1293 = vpack.c.bf16 %v1266, %v1265
      %v1294 = vpack.c.bf16 %v1268, %v1267
      %v1295 = vpack.c.bf16 %v1270, %v1269
      %v1296 = vpack.c.bf16 %v1272, %v1271
      %v1297 = vpack.c.bf16 %v1274, %v1273
      %v1298 = vpack.c.bf16 %v1276, %v1275
      %v1299 = vpack.c.bf16 %v1278, %v1277
      %v1300 = vpack.c.bf16 %v1280, %v1279
      %v1301 = vpack.c.bf16 %v1282, %v1281
      %v1302 = vpack.c.bf16 %v1284, %v1283
      %v1303 = vpack.c.bf16 %v1286, %v1285
      %v1304 = vpack.c.bf16 %v1288, %v1287
      %s1305 = scalar_lea.vmem [#allocation2], 48
      %v1306 = vld [vmem:[%s1305] sm:$0xff]
      %v1307 = vld [vmem:[%s1305 + $0x8] sm:$0xff]
      %v1308 = vld [vmem:[%s1305 + $0x18] sm:$0xff]
      %v1309 = vld [vmem:[%s1305 + $0x20] sm:$0xff]
      %v1310 = vld [vmem:[%s1305 + $0x30] sm:$0xff]
      %v1311 = vld [vmem:[%s1305 + $0x38] sm:$0xff]
      %v1312 = vld [vmem:[%s1305 + $0x48] sm:$0xff]
      %v1313 = vld [vmem:[%s1305 + $0x50] sm:$0xff]
      %v1314 = vld [vmem:[%s1305 + $0x60] sm:$0xff]
      %v1315 = vld [vmem:[%s1305 + $0x68] sm:$0xff]
      %v1316 = vld [vmem:[%s1305 + $0x78] sm:$0xff]
      %v1317 = vld [vmem:[%s1305 + $0x80] sm:$0xff]
      %v1318 = vld [vmem:[%s1305 + $0x90] sm:$0xff]
      %v1319 = vld [vmem:[%s1305 + $0x98] sm:$0xff]
      %v1320 = vld [vmem:[%s1305 + $0xa8] sm:$0xff]
      %v1321 = vld [vmem:[%s1305 + $0xb0] sm:$0xff]
      %v1322 = vld [vmem:[%s1305 + $0xc0] sm:$0xff]
      %v1323 = vld [vmem:[%s1305 + $0xc8] sm:$0xff]
      %v1324 = vld [vmem:[%s1305 + $0xd8] sm:$0xff]
      %v1325 = vld [vmem:[%s1305 + $0xe0] sm:$0xff]
      %v1326 = vld [vmem:[%s1305 + $0xf0] sm:$0xff]
      %v1327 = vld [vmem:[%s1305 + $0xf8] sm:$0xff]
      %v1328 = vld [vmem:[%s1305 + $0x108] sm:$0xff]
      %v1329 = vld [vmem:[%s1305 + $0x110] sm:$0xff]
      %v1330 = vld [vmem:[%s1305 + $0x120] sm:$0xff]
      %v1331 = vld [vmem:[%s1305 + $0x128] sm:$0xff]
      %v1332 = vld [vmem:[%s1305 + $0x138] sm:$0xff]
      %v1333 = vld [vmem:[%s1305 + $0x140] sm:$0xff]
      %v1334 = vld [vmem:[%s1305 + $0x150] sm:$0xff]
      %v1335 = vld [vmem:[%s1305 + $0x158] sm:$0xff]
      %v1336 = vld [vmem:[%s1305 + $0x168] sm:$0xff]
      %v1337 = vld [vmem:[%s1305 + $0x170] sm:$0xff]
      %v1338 = vpack.c.bf16 %v1307, %v1306
      %v1339 = vpack.c.bf16 %v1309, %v1308
      %v1340 = vpack.c.bf16 %v1311, %v1310
      %v1341 = vpack.c.bf16 %v1313, %v1312
      %v1342 = vpack.c.bf16 %v1315, %v1314
      %v1343 = vpack.c.bf16 %v1317, %v1316
      %v1344 = vpack.c.bf16 %v1319, %v1318
      %v1345 = vpack.c.bf16 %v1321, %v1320
      %v1346 = vpack.c.bf16 %v1323, %v1322
      %v1347 = vpack.c.bf16 %v1325, %v1324
      %v1348 = vpack.c.bf16 %v1327, %v1326
      %v1349 = vpack.c.bf16 %v1329, %v1328
      %v1350 = vpack.c.bf16 %v1331, %v1330
      %v1351 = vpack.c.bf16 %v1333, %v1332
      %v1352 = vpack.c.bf16 %v1335, %v1334
      %v1353 = vpack.c.bf16 %v1337, %v1336
      %v1354 = vld [vmem:[%s1305 + $0x1] sm:$0xff]
      %v1355 = vld [vmem:[%s1305 + $0x9] sm:$0xff]
      %v1356 = vld [vmem:[%s1305 + $0x19] sm:$0xff]
      %v1357 = vld [vmem:[%s1305 + $0x21] sm:$0xff]
      %v1358 = vld [vmem:[%s1305 + $0x31] sm:$0xff]
      %v1359 = vld [vmem:[%s1305 + $0x39] sm:$0xff]
      %v1360 = vld [vmem:[%s1305 + $0x49] sm:$0xff]
      %v1361 = vld [vmem:[%s1305 + $0x51] sm:$0xff]
      %v1362 = vld [vmem:[%s1305 + $0x61] sm:$0xff]
      %v1363 = vld [vmem:[%s1305 + $0x69] sm:$0xff]
      %v1364 = vld [vmem:[%s1305 + $0x79] sm:$0xff]
      %v1365 = vld [vmem:[%s1305 + $0x81] sm:$0xff]
      %v1366 = vld [vmem:[%s1305 + $0x91] sm:$0xff]
      %v1367 = vld [vmem:[%s1305 + $0x99] sm:$0xff]
      %v1368 = vld [vmem:[%s1305 + $0xa9] sm:$0xff]
      %v1369 = vld [vmem:[%s1305 + $0xb1] sm:$0xff]
      %v1370 = vld [vmem:[%s1305 + $0xc1] sm:$0xff]
      %v1371 = vld [vmem:[%s1305 + $0xc9] sm:$0xff]
      %v1372 = vld [vmem:[%s1305 + $0xd9] sm:$0xff]
      %v1373 = vld [vmem:[%s1305 + $0xe1] sm:$0xff]
      %v1374 = vld [vmem:[%s1305 + $0xf1] sm:$0xff]
      %v1375 = vld [vmem:[%s1305 + $0xf9] sm:$0xff]
      %v1376 = vld [vmem:[%s1305 + $0x109] sm:$0xff]
      %v1377 = vld [vmem:[%s1305 + $0x111] sm:$0xff]
      %v1378 = vld [vmem:[%s1305 + $0x121] sm:$0xff]
      %v1379 = vld [vmem:[%s1305 + $0x129] sm:$0xff]
      %v1380 = vld [vmem:[%s1305 + $0x139] sm:$0xff]
      %v1381 = vld [vmem:[%s1305 + $0x141] sm:$0xff]
      %v1382 = vld [vmem:[%s1305 + $0x151] sm:$0xff]
      %v1383 = vld [vmem:[%s1305 + $0x159] sm:$0xff]
      %v1384 = vld [vmem:[%s1305 + $0x169] sm:$0xff]
      %v1385 = vld [vmem:[%s1305 + $0x171] sm:$0xff]
      %v1386 = vpack.c.bf16 %v1355, %v1354
      %v1387 = vpack.c.bf16 %v1357, %v1356
      %v1388 = vpack.c.bf16 %v1359, %v1358
      %v1389 = vpack.c.bf16 %v1361, %v1360
      %v1390 = vpack.c.bf16 %v1363, %v1362
      %v1391 = vpack.c.bf16 %v1365, %v1364
      %v1392 = vpack.c.bf16 %v1367, %v1366
      %v1393 = vpack.c.bf16 %v1369, %v1368
      %v1394 = vpack.c.bf16 %v1371, %v1370
      %v1395 = vpack.c.bf16 %v1373, %v1372
      %v1396 = vpack.c.bf16 %v1375, %v1374
      %v1397 = vpack.c.bf16 %v1377, %v1376
      %v1398 = vpack.c.bf16 %v1379, %v1378
      %v1399 = vpack.c.bf16 %v1381, %v1380
      %v1400 = vpack.c.bf16 %v1383, %v1382
      %v1401 = vpack.c.bf16 %v1385, %v1384
      %v1402 = vld [vmem:[%s1305 + $0x2] sm:$0xff]
      %v1403 = vld [vmem:[%s1305 + $0xa] sm:$0xff]
      %v1404 = vld [vmem:[%s1305 + $0x1a] sm:$0xff]
      %v1405 = vld [vmem:[%s1305 + $0x22] sm:$0xff]
      %v1406 = vld [vmem:[%s1305 + $0x32] sm:$0xff]
      %v1407 = vld [vmem:[%s1305 + $0x3a] sm:$0xff]
      %v1408 = vld [vmem:[%s1305 + $0x4a] sm:$0xff]
      %v1409 = vld [vmem:[%s1305 + $0x52] sm:$0xff]
      %v1410 = vld [vmem:[%s1305 + $0x62] sm:$0xff]
      %v1411 = vld [vmem:[%s1305 + $0x6a] sm:$0xff]
      %v1412 = vld [vmem:[%s1305 + $0x7a] sm:$0xff]
      %v1413 = vld [vmem:[%s1305 + $0x82] sm:$0xff]
      %v1414 = vld [vmem:[%s1305 + $0x92] sm:$0xff]
      %v1415 = vld [vmem:[%s1305 + $0x9a] sm:$0xff]
      %v1416 = vld [vmem:[%s1305 + $0xaa] sm:$0xff]
      %v1417 = vld [vmem:[%s1305 + $0xb2] sm:$0xff]
      %v1418 = vld [vmem:[%s1305 + $0xc2] sm:$0xff]
      %v1419 = vld [vmem:[%s1305 + $0xca] sm:$0xff]
      %v1420 = vld [vmem:[%s1305 + $0xda] sm:$0xff]
      %v1421 = vld [vmem:[%s1305 + $0xe2] sm:$0xff]
      %v1422 = vld [vmem:[%s1305 + $0xf2] sm:$0xff]
      %v1423 = vld [vmem:[%s1305 + $0xfa] sm:$0xff]
      %v1424 = vld [vmem:[%s1305 + $0x10a] sm:$0xff]
      %v1425 = vld [vmem:[%s1305 + $0x112] sm:$0xff]
      %v1426 = vld [vmem:[%s1305 + $0x122] sm:$0xff]
      %v1427 = vld [vmem:[%s1305 + $0x12a] sm:$0xff]
      %v1428 = vld [vmem:[%s1305 + $0x13a] sm:$0xff]
      %v1429 = vld [vmem:[%s1305 + $0x142] sm:$0xff]
      %v1430 = vld [vmem:[%s1305 + $0x152] sm:$0xff]
      %v1431 = vld [vmem:[%s1305 + $0x15a] sm:$0xff]
      %v1432 = vld [vmem:[%s1305 + $0x16a] sm:$0xff]
      %v1433 = vld [vmem:[%s1305 + $0x172] sm:$0xff]
      %v1434 = vpack.c.bf16 %v1403, %v1402
      %v1435 = vpack.c.bf16 %v1405, %v1404
      %v1436 = vpack.c.bf16 %v1407, %v1406
      %v1437 = vpack.c.bf16 %v1409, %v1408
      %v1438 = vpack.c.bf16 %v1411, %v1410
      %v1439 = vpack.c.bf16 %v1413, %v1412
      %v1440 = vpack.c.bf16 %v1415, %v1414
      %v1441 = vpack.c.bf16 %v1417, %v1416
      %v1442 = vpack.c.bf16 %v1419, %v1418
      %v1443 = vpack.c.bf16 %v1421, %v1420
      %v1444 = vpack.c.bf16 %v1423, %v1422
      %v1445 = vpack.c.bf16 %v1425, %v1424
      %v1446 = vpack.c.bf16 %v1427, %v1426
      %v1447 = vpack.c.bf16 %v1429, %v1428
      %v1448 = vpack.c.bf16 %v1431, %v1430
      %v1449 = vpack.c.bf16 %v1433, %v1432
      %v1450 = vld [vmem:[%s2] sm:$0xf]
      %v1451 = vld [vmem:[%s2 + $0x4] sm:$0xf]
      %v1452 = vld [vmem:[%s2 + $0x8] sm:$0xf]
      %v1453 = vld [vmem:[%s2 + $0xc] sm:$0xf]
      %v1454 = vld [vmem:[%s2 + $0x10] sm:$0xf]
      %v1455 = vld [vmem:[%s2 + $0x14] sm:$0xf]
      %v1456 = vld [vmem:[%s2 + $0x18] sm:$0xf]
      %v1457 = vld [vmem:[%s2 + $0x1c] sm:$0xf]
      %v1458 = vld [vmem:[%s2 + $0x20] sm:$0xf]
      %v1459 = vld [vmem:[%s2 + $0x24] sm:$0xf]
      %v1460 = vld [vmem:[%s2 + $0x28] sm:$0xf]
      %v1461 = vld [vmem:[%s2 + $0x2c] sm:$0xf]
      %v1462 = vld [vmem:[%s2 + $0x30] sm:$0xf]
      %v1463 = vld [vmem:[%s2 + $0x34] sm:$0xf]
      %v1464 = vld [vmem:[%s2 + $0x38] sm:$0xf]
      %v1465 = vld [vmem:[%s2 + $0x3c] sm:$0xf]
      %v1466 = vld [vmem:[%s2 + $0x40] sm:$0xf]
      %v1467 = vld [vmem:[%s2 + $0x44] sm:$0xf]
      %v1468 = vld [vmem:[%s2 + $0x48] sm:$0xf]
      %v1469 = vld [vmem:[%s2 + $0x4c] sm:$0xf]
      %v1470 = vld [vmem:[%s2 + $0x50] sm:$0xf]
      %v1471 = vld [vmem:[%s2 + $0x54] sm:$0xf]
      %v1472 = vld [vmem:[%s2 + $0x58] sm:$0xf]
      %v1473 = vld [vmem:[%s2 + $0x5c] sm:$0xf]
      %v1474 = vld [vmem:[%s2 + $0x60] sm:$0xf]
      %v1475 = vld [vmem:[%s2 + $0x64] sm:$0xf]
      %v1476 = vld [vmem:[%s2 + $0x68] sm:$0xf]
      %v1477 = vld [vmem:[%s2 + $0x6c] sm:$0xf]
      %v1478 = vld [vmem:[%s2 + $0x70] sm:$0xf]
      %v1479 = vld [vmem:[%s2 + $0x74] sm:$0xf]
      %v1480 = vld [vmem:[%s2 + $0x78] sm:$0xf]
      %v1481 = vld [vmem:[%s2 + $0x7c] sm:$0xf]
      %v1482 = vld [vmem:[%s2 + $0x80] sm:$0xf]
      %v1483 = vld [vmem:[%s2 + $0x84] sm:$0xf]
      %v1484 = vld [vmem:[%s2 + $0x88] sm:$0xf]
      %v1485 = vld [vmem:[%s2 + $0x8c] sm:$0xf]
      %v1486 = vld [vmem:[%s2 + $0x90] sm:$0xf]
      %v1487 = vld [vmem:[%s2 + $0x94] sm:$0xf]
      %v1488 = vld [vmem:[%s2 + $0x98] sm:$0xf]
      %v1489 = vld [vmem:[%s2 + $0x9c] sm:$0xf]
      %v1490 = vld [vmem:[%s2 + $0xa0] sm:$0xf]
      %v1491 = vld [vmem:[%s2 + $0xa4] sm:$0xf]
      %v1492 = vld [vmem:[%s2 + $0xa8] sm:$0xf]
      %v1493 = vld [vmem:[%s2 + $0xac] sm:$0xf]
      %v1494 = vld [vmem:[%s2 + $0xb0] sm:$0xf]
      %v1495 = vld [vmem:[%s2 + $0xb4] sm:$0xf]
      %v1496 = vld [vmem:[%s2 + $0xb8] sm:$0xf]
      %v1497 = vld [vmem:[%s2 + $0xbc] sm:$0xf]
      %v1498 = vld [vmem:[%s2 + $0xc0] sm:$0xf]
      %v1499 = vld [vmem:[%s2 + $0xc4] sm:$0xf]
      %v1500 = vld [vmem:[%s2 + $0xc8] sm:$0xf]
      %v1501 = vld [vmem:[%s2 + $0xcc] sm:$0xf]
      %v1502 = vld [vmem:[%s2 + $0xd0] sm:$0xf]
      %v1503 = vld [vmem:[%s2 + $0xd4] sm:$0xf]
      %v1504 = vld [vmem:[%s2 + $0xd8] sm:$0xf]
      %v1505 = vld [vmem:[%s2 + $0xdc] sm:$0xf]
      %v1506 = vld [vmem:[%s2 + $0xe0] sm:$0xf]
      %v1507 = vld [vmem:[%s2 + $0xe4] sm:$0xf]
      %v1508 = vld [vmem:[%s2 + $0xe8] sm:$0xf]
      %v1509 = vld [vmem:[%s2 + $0xec] sm:$0xf]
      %v1510 = vld [vmem:[%s2 + $0xf0] sm:$0xf]
      %v1511 = vld [vmem:[%s2 + $0xf4] sm:$0xf]
      %v1512 = vld [vmem:[%s2 + $0xf8] sm:$0xf]
      %v1513 = vld [vmem:[%s2 + $0xfc] sm:$0xf]
      %v1514 = vld [vmem:[%s2 + $0x100] sm:$0xf]
      %v1515 = vld [vmem:[%s2 + $0x104] sm:$0xf]
      %v1516 = vld [vmem:[%s2 + $0x108] sm:$0xf]
      %v1517 = vld [vmem:[%s2 + $0x10c] sm:$0xf]
      %v1518 = vld [vmem:[%s2 + $0x110] sm:$0xf]
      %v1519 = vld [vmem:[%s2 + $0x114] sm:$0xf]
      %v1520 = vld [vmem:[%s2 + $0x118] sm:$0xf]
      %v1521 = vld [vmem:[%s2 + $0x11c] sm:$0xf]
      %v1522 = vld [vmem:[%s2 + $0x120] sm:$0xf]
      %v1523 = vld [vmem:[%s2 + $0x124] sm:$0xf]
      %v1524 = vld [vmem:[%s2 + $0x128] sm:$0xf]
      %v1525 = vld [vmem:[%s2 + $0x12c] sm:$0xf]
      %v1526 = vld [vmem:[%s2 + $0x130] sm:$0xf]
      %v1527 = vld [vmem:[%s2 + $0x134] sm:$0xf]
      %v1528 = vld [vmem:[%s2 + $0x138] sm:$0xf]
      %v1529 = vld [vmem:[%s2 + $0x13c] sm:$0xf]
      %v1530 = vld [vmem:[%s2 + $0x140] sm:$0xf]
      %v1531 = vld [vmem:[%s2 + $0x144] sm:$0xf]
      %v1532 = vld [vmem:[%s2 + $0x148] sm:$0xf]
      %v1533 = vld [vmem:[%s2 + $0x14c] sm:$0xf]
      %v1534 = vld [vmem:[%s2 + $0x150] sm:$0xf]
      %v1535 = vld [vmem:[%s2 + $0x154] sm:$0xf]
      %v1536 = vld [vmem:[%s2 + $0x158] sm:$0xf]
      %v1537 = vld [vmem:[%s2 + $0x15c] sm:$0xf]
      %v1538 = vld [vmem:[%s2 + $0x160] sm:$0xf]
      %v1539 = vld [vmem:[%s2 + $0x164] sm:$0xf]
      %v1540 = vld [vmem:[%s2 + $0x168] sm:$0xf]
      %v1541 = vld [vmem:[%s2 + $0x16c] sm:$0xf]
      %v1542 = vld [vmem:[%s2 + $0x170] sm:$0xf]
      %v1543 = vld [vmem:[%s2 + $0x174] sm:$0xf]
      %v1544 = vld [vmem:[%s2 + $0x178] sm:$0xf]
      %v1545 = vld [vmem:[%s2 + $0x17c] sm:$0xf]
      %v1546 = vld [vmem:[%s2 + $0x180] sm:$0xf]
      %v1547 = vld [vmem:[%s2 + $0x184] sm:$0xf]
      %v1548 = vld [vmem:[%s2 + $0x188] sm:$0xf]
      %v1549 = vld [vmem:[%s2 + $0x18c] sm:$0xf]
      %v1550 = vld [vmem:[%s2 + $0x190] sm:$0xf]
      %v1551 = vld [vmem:[%s2 + $0x194] sm:$0xf]
      %v1552 = vld [vmem:[%s2 + $0x198] sm:$0xf]
      %v1553 = vld [vmem:[%s2 + $0x19c] sm:$0xf]
      %v1554 = vld [vmem:[%s2 + $0x1a0] sm:$0xf]
      %v1555 = vld [vmem:[%s2 + $0x1a4] sm:$0xf]
      %v1556 = vld [vmem:[%s2 + $0x1a8] sm:$0xf]
      %v1557 = vld [vmem:[%s2 + $0x1ac] sm:$0xf]
      %v1558 = vld [vmem:[%s2 + $0x1b0] sm:$0xf]
      %v1559 = vld [vmem:[%s2 + $0x1b4] sm:$0xf]
      %v1560 = vld [vmem:[%s2 + $0x1b8] sm:$0xf]
      %v1561 = vld [vmem:[%s2 + $0x1bc] sm:$0xf]
      %v1562 = vld [vmem:[%s2 + $0x1c0] sm:$0xf]
      %v1563 = vld [vmem:[%s2 + $0x1c4] sm:$0xf]
      %v1564 = vld [vmem:[%s2 + $0x1c8] sm:$0xf]
      %v1565 = vld [vmem:[%s2 + $0x1cc] sm:$0xf]
      %v1566 = vld [vmem:[%s2 + $0x1d0] sm:$0xf]
      %v1567 = vld [vmem:[%s2 + $0x1d4] sm:$0xf]
      %v1568 = vld [vmem:[%s2 + $0x1d8] sm:$0xf]
      %v1569 = vld [vmem:[%s2 + $0x1dc] sm:$0xf]
      %v1570 = vld [vmem:[%s2 + $0x1e0] sm:$0xf]
      %v1571 = vld [vmem:[%s2 + $0x1e4] sm:$0xf]
      %v1572 = vld [vmem:[%s2 + $0x1e8] sm:$0xf]
      %v1573 = vld [vmem:[%s2 + $0x1ec] sm:$0xf]
      %v1574 = vld [vmem:[%s2 + $0x1f0] sm:$0xf]
      %v1575 = vld [vmem:[%s2 + $0x1f4] sm:$0xf]
      %v1576 = vld [vmem:[%s2 + $0x1f8] sm:$0xf]
      %v1577 = vld [vmem:[%s2 + $0x1fc] sm:$0xf]
      %v1578 = vld [vmem:[%s2 + $0x200] sm:$0xf]
      %v1579 = vld [vmem:[%s2 + $0x204] sm:$0xf]
      %v1580 = vld [vmem:[%s2 + $0x208] sm:$0xf]
      %v1581 = vld [vmem:[%s2 + $0x20c] sm:$0xf]
      %v1582 = vld [vmem:[%s2 + $0x210] sm:$0xf]
      %v1583 = vld [vmem:[%s2 + $0x214] sm:$0xf]
      %v1584 = vld [vmem:[%s2 + $0x218] sm:$0xf]
      %v1585 = vld [vmem:[%s2 + $0x21c] sm:$0xf]
      %v1586 = vld [vmem:[%s2 + $0x220] sm:$0xf]
      %v1587 = vld [vmem:[%s2 + $0x224] sm:$0xf]
      %v1588 = vld [vmem:[%s2 + $0x228] sm:$0xf]
      %v1589 = vld [vmem:[%s2 + $0x22c] sm:$0xf]
      %v1590 = vld [vmem:[%s2 + $0x230] sm:$0xf]
      %v1591 = vld [vmem:[%s2 + $0x234] sm:$0xf]
      %v1592 = vld [vmem:[%s2 + $0x238] sm:$0xf]
      %v1593 = vld [vmem:[%s2 + $0x23c] sm:$0xf]
      %v1738 = vunpack.c.l.b16 %v1450
      %v1739 = vunpack.c.l.b16 %v1451
      %v1740 = vunpack.c.l.b16 %v1452
      %v1741 = vunpack.c.l.b16 %v1453
      %v1742 = vunpack.c.l.b16 %v1454
      %v1743 = vunpack.c.l.b16 %v1455
      %v1744 = vunpack.c.l.b16 %v1456
      %v1745 = vunpack.c.l.b16 %v1457
      %v1746 = vunpack.c.l.b16 %v1458
      %v1747 = vunpack.c.l.b16 %v1459
      %v1748 = vunpack.c.l.b16 %v1460
      %v1749 = vunpack.c.l.b16 %v1461
      %v1750 = vunpack.c.l.b16 %v1462
      %v1751 = vunpack.c.l.b16 %v1463
      %v1752 = vunpack.c.l.b16 %v1464
      %v1753 = vunpack.c.l.b16 %v1465
      %v1754 = vunpack.c.l.b16 %v1466
      %v1755 = vunpack.c.l.b16 %v1467
      %v1756 = vunpack.c.l.b16 %v1468
      %v1757 = vunpack.c.l.b16 %v1469
      %v1758 = vunpack.c.l.b16 %v1470
      %v1759 = vunpack.c.l.b16 %v1471
      %v1760 = vunpack.c.l.b16 %v1472
      %v1761 = vunpack.c.l.b16 %v1473
      %v1762 = vunpack.c.l.b16 %v1474
      %v1763 = vunpack.c.l.b16 %v1475
      %v1764 = vunpack.c.l.b16 %v1476
      %v1765 = vunpack.c.l.b16 %v1477
      %v1766 = vunpack.c.l.b16 %v1478
      %v1767 = vunpack.c.l.b16 %v1479
      %v1768 = vunpack.c.l.b16 %v1480
      %v1769 = vunpack.c.l.b16 %v1481
      %v1770 = vunpack.c.l.b16 %v1482
      %v1771 = vunpack.c.l.b16 %v1483
      %v1772 = vunpack.c.l.b16 %v1484
      %v1773 = vunpack.c.l.b16 %v1485
      %v1774 = vunpack.c.l.b16 %v1486
      %v1775 = vunpack.c.l.b16 %v1487
      %v1776 = vunpack.c.l.b16 %v1488
      %v1777 = vunpack.c.l.b16 %v1489
      %v1778 = vunpack.c.l.b16 %v1490
      %v1779 = vunpack.c.l.b16 %v1491
      %v1780 = vunpack.c.l.b16 %v1492
      %v1781 = vunpack.c.l.b16 %v1493
      %v1782 = vunpack.c.l.b16 %v1494
      %v1783 = vunpack.c.l.b16 %v1495
      %v1784 = vunpack.c.l.b16 %v1496
      %v1785 = vunpack.c.l.b16 %v1497
      %v1786 = vunpack.c.l.b16 %v1498
      %v1787 = vunpack.c.l.b16 %v1499
      %v1788 = vunpack.c.l.b16 %v1500
      %v1789 = vunpack.c.l.b16 %v1501
      %v1790 = vunpack.c.l.b16 %v1502
      %v1791 = vunpack.c.l.b16 %v1503
      %v1792 = vunpack.c.l.b16 %v1504
      %v1793 = vunpack.c.l.b16 %v1505
      %v1794 = vunpack.c.l.b16 %v1506
      %v1795 = vunpack.c.l.b16 %v1507
      %v1796 = vunpack.c.l.b16 %v1508
      %v1797 = vunpack.c.l.b16 %v1509
      %v1798 = vunpack.c.l.b16 %v1510
      %v1799 = vunpack.c.l.b16 %v1511
      %v1800 = vunpack.c.l.b16 %v1512
      %v1801 = vunpack.c.l.b16 %v1513
      %v1802 = vunpack.c.l.b16 %v1514
      %v1803 = vunpack.c.l.b16 %v1515
      %v1804 = vunpack.c.l.b16 %v1516
      %v1805 = vunpack.c.l.b16 %v1517
      %v1806 = vunpack.c.l.b16 %v1518
      %v1807 = vunpack.c.l.b16 %v1519
      %v1808 = vunpack.c.l.b16 %v1520
      %v1809 = vunpack.c.l.b16 %v1521
      %v1810 = vunpack.c.l.b16 %v1522
      %v1811 = vunpack.c.l.b16 %v1523
      %v1812 = vunpack.c.l.b16 %v1524
      %v1813 = vunpack.c.l.b16 %v1525
      %v1814 = vunpack.c.l.b16 %v1526
      %v1815 = vunpack.c.l.b16 %v1527
      %v1816 = vunpack.c.l.b16 %v1528
      %v1817 = vunpack.c.l.b16 %v1529
      %v1818 = vunpack.c.l.b16 %v1530
      %v1819 = vunpack.c.l.b16 %v1531
      %v1820 = vunpack.c.l.b16 %v1532
      %v1821 = vunpack.c.l.b16 %v1533
      %v1822 = vunpack.c.l.b16 %v1534
      %v1823 = vunpack.c.l.b16 %v1535
      %v1824 = vunpack.c.l.b16 %v1536
      %v1825 = vunpack.c.l.b16 %v1537
      %v1826 = vunpack.c.l.b16 %v1538
      %v1827 = vunpack.c.l.b16 %v1539
      %v1828 = vunpack.c.l.b16 %v1540
      %v1829 = vunpack.c.l.b16 %v1541
      %v1830 = vunpack.c.l.b16 %v1542
      %v1831 = vunpack.c.l.b16 %v1543
      %v1832 = vunpack.c.l.b16 %v1544
      %v1833 = vunpack.c.l.b16 %v1545
      %v1834 = vunpack.c.l.b16 %v1546
      %v1835 = vunpack.c.l.b16 %v1547
      %v1836 = vunpack.c.l.b16 %v1548
      %v1837 = vunpack.c.l.b16 %v1549
      %v1838 = vunpack.c.l.b16 %v1550
      %v1839 = vunpack.c.l.b16 %v1551
      %v1840 = vunpack.c.l.b16 %v1552
      %v1841 = vunpack.c.l.b16 %v1553
      %v1842 = vunpack.c.l.b16 %v1554
      %v1843 = vunpack.c.l.b16 %v1555
      %v1844 = vunpack.c.l.b16 %v1556
      %v1845 = vunpack.c.l.b16 %v1557
      %v1846 = vunpack.c.l.b16 %v1558
      %v1847 = vunpack.c.l.b16 %v1559
      %v1848 = vunpack.c.l.b16 %v1560
      %v1849 = vunpack.c.l.b16 %v1561
      %v1850 = vunpack.c.l.b16 %v1562
      %v1851 = vunpack.c.l.b16 %v1563
      %v1852 = vunpack.c.l.b16 %v1564
      %v1853 = vunpack.c.l.b16 %v1565
      %v1854 = vunpack.c.l.b16 %v1566
      %v1855 = vunpack.c.l.b16 %v1567
      %v1856 = vunpack.c.l.b16 %v1568
      %v1857 = vunpack.c.l.b16 %v1569
      %v1858 = vunpack.c.l.b16 %v1570
      %v1859 = vunpack.c.l.b16 %v1571
      %v1860 = vunpack.c.l.b16 %v1572
      %v1861 = vunpack.c.l.b16 %v1573
      %v1862 = vunpack.c.l.b16 %v1574
      %v1863 = vunpack.c.l.b16 %v1575
      %v1864 = vunpack.c.l.b16 %v1576
      %v1865 = vunpack.c.l.b16 %v1577
      %v1866 = vunpack.c.l.b16 %v1578
      %v1867 = vunpack.c.l.b16 %v1579
      %v1868 = vunpack.c.l.b16 %v1580
      %v1869 = vunpack.c.l.b16 %v1581
      %v1870 = vunpack.c.l.b16 %v1582
      %v1871 = vunpack.c.l.b16 %v1583
      %v1872 = vunpack.c.l.b16 %v1584
      %v1873 = vunpack.c.l.b16 %v1585
      %v1874 = vunpack.c.l.b16 %v1586
      %v1875 = vunpack.c.l.b16 %v1587
      %v1876 = vunpack.c.l.b16 %v1588
      %v1877 = vunpack.c.l.b16 %v1589
      %v1878 = vunpack.c.l.b16 %v1590
      %v1879 = vunpack.c.l.b16 %v1591
      %v1880 = vunpack.c.l.b16 %v1592
      %v1881 = vunpack.c.l.b16 %v1593
      %v1882 = vpack.c.b16 %v1739, %v1738
      %v1883 = vpack.c.b16 %v1741, %v1740
      %v1884 = vpack.c.b16 %v1743, %v1742
      %v1885 = vpack.c.b16 %v1745, %v1744
      %v1886 = vpack.c.b16 %v1747, %v1746
      %v1887 = vpack.c.b16 %v1749, %v1748
      %v1888 = vpack.c.b16 %v1751, %v1750
      %v1889 = vpack.c.b16 %v1753, %v1752
      %v1890 = vpack.c.b16 %v1755, %v1754
      %v1891 = vpack.c.b16 %v1757, %v1756
      %v1892 = vpack.c.b16 %v1759, %v1758
      %v1893 = vpack.c.b16 %v1761, %v1760
      %v1894 = vpack.c.b16 %v1763, %v1762
      %v1895 = vpack.c.b16 %v1765, %v1764
      %v1896 = vpack.c.b16 %v1767, %v1766
      %v1897 = vpack.c.b16 %v1769, %v1768
      %v1898 = vpack.c.b16 %v1771, %v1770
      %v1899 = vpack.c.b16 %v1773, %v1772
      %v1900 = vpack.c.b16 %v1775, %v1774
      %v1901 = vpack.c.b16 %v1777, %v1776
      %v1902 = vpack.c.b16 %v1779, %v1778
      %v1903 = vpack.c.b16 %v1781, %v1780
      %v1904 = vpack.c.b16 %v1783, %v1782
      %v1905 = vpack.c.b16 %v1785, %v1784
      %v1906 = vpack.c.b16 %v1787, %v1786
      %v1907 = vpack.c.b16 %v1789, %v1788
      %v1908 = vpack.c.b16 %v1791, %v1790
      %v1909 = vpack.c.b16 %v1793, %v1792
      %v1910 = vpack.c.b16 %v1795, %v1794
      %v1911 = vpack.c.b16 %v1797, %v1796
      %v1912 = vpack.c.b16 %v1799, %v1798
      %v1913 = vpack.c.b16 %v1801, %v1800
      %v1914 = vpack.c.b16 %v1803, %v1802
      %v1915 = vpack.c.b16 %v1805, %v1804
      %v1916 = vpack.c.b16 %v1807, %v1806
      %v1917 = vpack.c.b16 %v1809, %v1808
      %v1918 = vpack.c.b16 %v1811, %v1810
      %v1919 = vpack.c.b16 %v1813, %v1812
      %v1920 = vpack.c.b16 %v1815, %v1814
      %v1921 = vpack.c.b16 %v1817, %v1816
      %v1922 = vpack.c.b16 %v1819, %v1818
      %v1923 = vpack.c.b16 %v1821, %v1820
      %v1924 = vpack.c.b16 %v1823, %v1822
      %v1925 = vpack.c.b16 %v1825, %v1824
      %v1926 = vpack.c.b16 %v1827, %v1826
      %v1927 = vpack.c.b16 %v1829, %v1828
      %v1928 = vpack.c.b16 %v1831, %v1830
      %v1929 = vpack.c.b16 %v1833, %v1832
      %v1930 = vpack.c.b16 %v1835, %v1834
      %v1931 = vpack.c.b16 %v1837, %v1836
      %v1932 = vpack.c.b16 %v1839, %v1838
      %v1933 = vpack.c.b16 %v1841, %v1840
      %v1934 = vpack.c.b16 %v1843, %v1842
      %v1935 = vpack.c.b16 %v1845, %v1844
      %v1936 = vpack.c.b16 %v1847, %v1846
      %v1937 = vpack.c.b16 %v1849, %v1848
      %v1938 = vpack.c.b16 %v1851, %v1850
      %v1939 = vpack.c.b16 %v1853, %v1852
      %v1940 = vpack.c.b16 %v1855, %v1854
      %v1941 = vpack.c.b16 %v1857, %v1856
      %v1942 = vpack.c.b16 %v1859, %v1858
      %v1943 = vpack.c.b16 %v1861, %v1860
      %v1944 = vpack.c.b16 %v1863, %v1862
      %v1945 = vpack.c.b16 %v1865, %v1864
      %v1946 = vpack.c.b16 %v1867, %v1866
      %v1947 = vpack.c.b16 %v1869, %v1868
      %v1948 = vpack.c.b16 %v1871, %v1870
      %v1949 = vpack.c.b16 %v1873, %v1872
      %v1950 = vpack.c.b16 %v1875, %v1874
      %v1951 = vpack.c.b16 %v1877, %v1876
      %v1952 = vpack.c.b16 %v1879, %v1878
      %v1953 = vpack.c.b16 %v1881, %v1880
      %2026 = vmatprep.subr.bf16.mxu0 0
      %2027 = vmatpush1.bf16.msra.mxu0 %v1882
      %2028 = vmatprep.subr.bf16.mxu0 0
      %2029 = vmatpush1.bf16.msra.mxu0 %v1883
      %2030 = vmatprep.subr.bf16.mxu0 0
      %2031 = vmatpush1.bf16.msra.mxu0 %v1884
      %2032 = vmatprep.subr.bf16.mxu0 0
      %2033 = vmatpush1.bf16.msra.mxu0 %v1885
      %2034 = vmatprep.subr.bf16.mxu0 0
      %2035 = vmatpush1.bf16.msra.mxu0 %v1886
      %2036 = vmatprep.subr.bf16.mxu0 0
      %2037 = vmatpush1.bf16.msra.mxu0 %v1887
      %2038 = vmatprep.subr.bf16.mxu0 0
      %2039 = vmatpush1.bf16.msra.mxu0 %v1888
      %2040 = vmatprep.subr.bf16.mxu0 0
      %2041 = vmatpush1.bf16.msra.mxu0 %v1889
      %2042 = vmatprep.subr.bf16.mxu0 0
      %2043 = vmatpush1.bf16.msra.mxu0 %v1890
      %2044 = vmatprep.subr.bf16.mxu0 0
      %2045 = vmatpush1.bf16.msra.mxu0 %v1891
      %2046 = vmatprep.subr.bf16.mxu0 0
      %2047 = vmatpush1.bf16.msra.mxu0 %v1892
      %2048 = vmatprep.subr.bf16.mxu0 0
      %2049 = vmatpush1.bf16.msra.mxu0 %v1893
      %2050 = vmatprep.subr.bf16.mxu0 0
      %2051 = vmatpush1.bf16.msra.mxu0 %v1894
      %2052 = vmatprep.subr.bf16.mxu0 0
      %2053 = vmatpush1.bf16.msra.mxu0 %v1895
      %2054 = vmatprep.subr.bf16.mxu0 0
      %2055 = vmatpush1.bf16.msra.mxu0 %v1896
      %2056 = vmatprep.subr.bf16.mxu0 0
      %2057 = vmatpush1.bf16.msra.mxu0 %v1897
      %2058 = vmatprep.mubr.bf16.mxu0 %v1096
      %2059 = vmatmul.mubr.bf16.gmra.mrb[0].mxu0 %v1048
      %v2060 = vpop.f32.mrb[0].mxu0
      %v2061 = vadd.f32 0.0, %v2060
      %v2062 = vpop.f32.mrb[0].mxu0
      %v2063 = vpop.f32.mrb[0].mxu0
      %v2064 = vadd.f32 0.0, %v2063
      %v2065 = vpop.f32.mrb[0].mxu0
      %2066 = vmatprep.mubr.bf16.mxu0 %v1097
      %2067 = vmatmul.mubr.bf16.gmra.mrb[0].mxu0 %v1049
      %v2068 = vpop.f32.mrb[0].mxu0
      %v2069 = vadd.f32 0.0, %v2068
      %v2070 = vpop.f32.mrb[0].mxu0
      %v2071 = vpop.f32.mrb[0].mxu0
      %v2072 = vadd.f32 0.0, %v2071
      %v2073 = vpop.f32.mrb[0].mxu0
      %2074 = vmatprep.mubr.bf16.mxu0 %v1098
      %2075 = vmatmul.mubr.bf16.gmra.mrb[0].mxu0 %v1050
      %v2076 = vpop.f32.mrb[0].mxu0
      %v2077 = vadd.f32 0.0, %v2076
      %v2078 = vpop.f32.mrb[0].mxu0
      %v2079 = vpop.f32.mrb[0].mxu0
      %v2080 = vadd.f32 0.0, %v2079
      %v2081 = vpop.f32.mrb[0].mxu0
      %2082 = vmatprep.mubr.bf16.mxu0 %v1099
      %2083 = vmatmul.mubr.bf16.gmra.mrb[0].mxu0 %v1051
      %v2084 = vpop.f32.mrb[0].mxu0
      %v2085 = vadd.f32 0.0, %v2084
      %v2086 = vpop.f32.mrb[0].mxu0
      %v2087 = vpop.f32.mrb[0].mxu0
      %v2088 = vadd.f32 0.0, %v2087
      %v2089 = vpop.f32.mrb[0].mxu0
      %2090 = vmatprep.mubr.bf16.mxu0 %v1100
      %2091 = vmatmul.mubr.bf16.gmra.mrb[0].mxu0 %v1052
      %v2092 = vpop.f32.mrb[0].mxu0
      %v2093 = vadd.f32 0.0, %v2092
      %v2094 = vpop.f32.mrb[0].mxu0
      %v2095 = vpop.f32.mrb[0].mxu0
      %v2096 = vadd.f32 0.0, %v2095
      %v2097 = vpop.f32.mrb[0].mxu0
      %2098 = vmatprep.mubr.bf16.mxu0 %v1101
      %2099 = vmatmul.mubr.bf16.gmra.mrb[0].mxu0 %v1053
      %v2100 = vpop.f32.mrb[0].mxu0
      %v2101 = vadd.f32 0.0, %v2100
      %v2102 = vpop.f32.mrb[0].mxu0
      %v2103 = vpop.f32.mrb[0].mxu0
      %v2104 = vadd.f32 0.0, %v2103
      %v2105 = vpop.f32.mrb[0].mxu0
      %2106 = vmatprep.mubr.bf16.mxu0 %v1102
      %2107 = vmatmul.mubr.bf16.gmra.mrb[0].mxu0 %v1054
      %v2108 = vpop.f32.mrb[0].mxu0
      %v2109 = vadd.f32 0.0, %v2108
      %v2110 = vpop.f32.mrb[0].mxu0
      %v2111 = vpop.f32.mrb[0].mxu0
      %v2112 = vadd.f32 0.0, %v2111
      %v2113 = vpop.f32.mrb[0].mxu0
      %2114 = vmatprep.mubr.bf16.mxu0 %v1103
      %2115 = vmatmul.mubr.bf16.gmra.mrb[0].mxu0 %v1055
      %v2116 = vpop.f32.mrb[0].mxu0
      %v2117 = vadd.f32 0.0, %v2116
      %v2118 = vpop.f32.mrb[0].mxu0
      %v2119 = vpop.f32.mrb[0].mxu0
      %v2120 = vadd.f32 0.0, %v2119
      %v2121 = vpop.f32.mrb[0].mxu0
      %2122 = vmatprep.mubr.bf16.mxu0 %v1104
      %2123 = vmatmul.mubr.bf16.gmra.mrb[0].mxu0 %v1056
      %v2124 = vpop.f32.mrb[0].mxu0
      %v2125 = vadd.f32 0.0, %v2124
      %v2126 = vpop.f32.mrb[0].mxu0
      %v2127 = vpop.f32.mrb[0].mxu0
      %v2128 = vadd.f32 0.0, %v2127
      %v2129 = vpop.f32.mrb[0].mxu0
      %2130 = vmatprep.mubr.bf16.mxu0 %v1105
      %2131 = vmatmul.mubr.bf16.gmra.mrb[0].mxu0 %v1057
      %v2132 = vpop.f32.mrb[0].mxu0
      %v2133 = vadd.f32 0.0, %v2132
      %v2134 = vpop.f32.mrb[0].mxu0
      %v2135 = vpop.f32.mrb[0].mxu0
      %v2136 = vadd.f32 0.0, %v2135
      %v2137 = vpop.f32.mrb[0].mxu0
      %2138 = vmatprep.mubr.bf16.mxu0 %v1106
      %2139 = vmatmul.mubr.bf16.gmra.mrb[0].mxu0 %v1058
      %v2140 = vpop.f32.mrb[0].mxu0
      %v2141 = vadd.f32 0.0, %v2140
      %v2142 = vpop.f32.mrb[0].mxu0
      %v2143 = vpop.f32.mrb[0].mxu0
      %v2144 = vadd.f32 0.0, %v2143
      %v2145 = vpop.f32.mrb[0].mxu0
      %2146 = vmatprep.mubr.bf16.mxu0 %v1107
      %2147 = vmatmul.mubr.bf16.gmra.mrb[0].mxu0 %v1059
      %v2148 = vpop.f32.mrb[0].mxu0
      %v2149 = vadd.f32 0.0, %v2148
      %v2150 = vpop.f32.mrb[0].mxu0
      %v2151 = vpop.f32.mrb[0].mxu0
      %v2152 = vadd.f32 0.0, %v2151
      %v2153 = vpop.f32.mrb[0].mxu0
      %2154 = vmatprep.mubr.bf16.mxu0 %v1108
      %2155 = vmatmul.mubr.bf16.gmra.mrb[0].mxu0 %v1060
      %v2156 = vpop.f32.mrb[0].mxu0
      %v2157 = vadd.f32 0.0, %v2156
      %v2158 = vpop.f32.mrb[0].mxu0
      %v2159 = vpop.f32.mrb[0].mxu0
      %v2160 = vadd.f32 0.0, %v2159
      %v2161 = vpop.f32.mrb[0].mxu0
      %2162 = vmatprep.mubr.bf16.mxu0 %v1109
      %2163 = vmatmul.mubr.bf16.gmra.mrb[0].mxu0 %v1061
      %v2164 = vpop.f32.mrb[0].mxu0
      %v2165 = vadd.f32 0.0, %v2164
      %v2166 = vpop.f32.mrb[0].mxu0
      %v2167 = vpop.f32.mrb[0].mxu0
      %v2168 = vadd.f32 0.0, %v2167
      %v2169 = vpop.f32.mrb[0].mxu0
      %2170 = vmatprep.mubr.bf16.mxu0 %v1110
      %2171 = vmatmul.mubr.bf16.gmra.mrb[0].mxu0 %v1062
      %v2172 = vpop.f32.mrb[0].mxu0
      %v2173 = vadd.f32 0.0, %v2172
      %v2174 = vpop.f32.mrb[0].mxu0
      %v2175 = vpop.f32.mrb[0].mxu0
      %v2176 = vadd.f32 0.0, %v2175
      %v2177 = vpop.f32.mrb[0].mxu0
      %2178 = vmatprep.mubr.bf16.mxu0 %v1111
      %2179 = vmatmul.mubr.bf16.gmra.mrb[0].mxu0 %v1063
      %v2180 = vpop.f32.mrb[0].mxu0
      %v2181 = vadd.f32 0.0, %v2180
      %v2182 = vpop.f32.mrb[0].mxu0
      %v2183 = vpop.f32.mrb[0].mxu0
      %v2184 = vadd.f32 0.0, %v2183
      %v2185 = vpop.f32.mrb[0].mxu0
      %2186 = vdwg.mxu0
      %2187 = vmatprep.subr.bf16.mxu0 0
      %2188 = vmatpush1.bf16.msra.mxu0 %v1898
      %2189 = vmatprep.subr.bf16.mxu0 0
      %2190 = vmatpush1.bf16.msra.mxu0 %v1899
      %2191 = vmatprep.subr.bf16.mxu0 0
      %2192 = vmatpush1.bf16.msra.mxu0 %v1900
      %2193 = vmatprep.subr.bf16.mxu0 0
      %2194 = vmatpush1.bf16.msra.mxu0 %v1901
      %2195 = vmatprep.subr.bf16.mxu0 0
      %2196 = vmatpush1.bf16.msra.mxu0 %v1902
      %2197 = vmatprep.subr.bf16.mxu0 0
      %2198 = vmatpush1.bf16.msra.mxu0 %v1903
      %2199 = vmatprep.subr.bf16.mxu0 0
      %2200 = vmatpush1.bf16.msra.mxu0 %v1904
      %2201 = vmatprep.subr.bf16.mxu0 0
      %2202 = vmatpush1.bf16.msra.mxu0 %v1905
      %2203 = vmatprep.subr.bf16.mxu0 0
      %2204 = vmatpush1.bf16.msra.mxu0 %v1906
      %2205 = vmatprep.subr.bf16.mxu0 0
      %2206 = vmatpush1.bf16.msra.mxu0 %v1907
      %2207 = vmatprep.subr.bf16.mxu0 0
      %2208 = vmatpush1.bf16.msra.mxu0 %v1908
      %2209 = vmatprep.subr.bf16.mxu0 0
      %2210 = vmatpush1.bf16.msra.mxu0 %v1909
      %2211 = vmatprep.subr.bf16.mxu0 0
      %2212 = vmatpush1.bf16.msra.mxu0 %v1910
      %2213 = vmatprep.subr.bf16.mxu0 0
      %2214 = vmatpush1.bf16.msra.mxu0 %v1911
      %2215 = vmatprep.subr.bf16.mxu0 0
      %2216 = vmatpush1.bf16.msra.mxu0 %v1912
      %2217 = vmatprep.subr.bf16.mxu0 0
      %2218 = vmatpush1.bf16.msra.mxu0 %v1913
      %2219 = vmatprep.mubr.bf16.mxu0 %v1193
      %2220 = vmatmul.mubr.bf16.gmra.mrb[0].mxu0 %v1144
      %v2221 = vpop.f32.mrb[0].mxu0
      %v2222 = vadd.f32 %v2061, %v2221
      %v2223 = vpop.f32.mrb[0].mxu0
      %v2224 = vpop.f32.mrb[0].mxu0
      %v2225 = vadd.f32 %v2064, %v2224
      %v2226 = vpop.f32.mrb[0].mxu0
      %2227 = vmatprep.mubr.bf16.mxu0 %v1194
      %2228 = vmatmul.mubr.bf16.gmra.mrb[0].mxu0 %v1145
      %v2229 = vpop.f32.mrb[0].mxu0
      %v2230 = vadd.f32 %v2069, %v2229
      %v2231 = vpop.f32.mrb[0].mxu0
      %v2232 = vpop.f32.mrb[0].mxu0
      %v2233 = vadd.f32 %v2072, %v2232
      %v2234 = vpop.f32.mrb[0].mxu0
      %2235 = vmatprep.mubr.bf16.mxu0 %v1195
      %2236 = vmatmul.mubr.bf16.gmra.mrb[0].mxu0 %v1146
      %v2237 = vpop.f32.mrb[0].mxu0
      %v2238 = vadd.f32 %v2077, %v2237
      %v2239 = vpop.f32.mrb[0].mxu0
      %v2240 = vpop.f32.mrb[0].mxu0
      %v2241 = vadd.f32 %v2080, %v2240
      %v2242 = vpop.f32.mrb[0].mxu0
      %2243 = vmatprep.mubr.bf16.mxu0 %v1196
      %2244 = vmatmul.mubr.bf16.gmra.mrb[0].mxu0 %v1147
      %v2245 = vpop.f32.mrb[0].mxu0
      %v2246 = vadd.f32 %v2085, %v2245
      %v2247 = vpop.f32.mrb[0].mxu0
      %v2248 = vpop.f32.mrb[0].mxu0
      %v2249 = vadd.f32 %v2088, %v2248
      %v2250 = vpop.f32.mrb[0].mxu0
      %2251 = vmatprep.mubr.bf16.mxu0 %v1197
      %2252 = vmatmul.mubr.bf16.gmra.mrb[0].mxu0 %v1148
      %v2253 = vpop.f32.mrb[0].mxu0
      %v2254 = vadd.f32 %v2093, %v2253
      %v2255 = vpop.f32.mrb[0].mxu0
      %v2256 = vpop.f32.mrb[0].mxu0
      %v2257 = vadd.f32 %v2096, %v2256
      %v2258 = vpop.f32.mrb[0].mxu0
      %2259 = vmatprep.mubr.bf16.mxu0 %v1198
      %2260 = vmatmul.mubr.bf16.gmra.mrb[0].mxu0 %v1149
      %v2261 = vpop.f32.mrb[0].mxu0
      %v2262 = vadd.f32 %v2101, %v2261
      %v2263 = vpop.f32.mrb[0].mxu0
      %v2264 = vpop.f32.mrb[0].mxu0
      %v2265 = vadd.f32 %v2104, %v2264
      %v2266 = vpop.f32.mrb[0].mxu0
      %2267 = vmatprep.mubr.bf16.mxu0 %v1199
      %2268 = vmatmul.mubr.bf16.gmra.mrb[0].mxu0 %v1150
      %v2269 = vpop.f32.mrb[0].mxu0
      %v2270 = vadd.f32 %v2109, %v2269
      %v2271 = vpop.f32.mrb[0].mxu0
      %v2272 = vpop.f32.mrb[0].mxu0
      %v2273 = vadd.f32 %v2112, %v2272
      %v2274 = vpop.f32.mrb[0].mxu0
      %2275 = vmatprep.mubr.bf16.mxu0 %v1200
      %2276 = vmatmul.mubr.bf16.gmra.mrb[0].mxu0 %v1151
      %v2277 = vpop.f32.mrb[0].mxu0
      %v2278 = vadd.f32 %v2117, %v2277
      %v2279 = vpop.f32.mrb[0].mxu0
      %v2280 = vpop.f32.mrb[0].mxu0
      %v2281 = vadd.f32 %v2120, %v2280
      %v2282 = vpop.f32.mrb[0].mxu0
      %2283 = vmatprep.mubr.bf16.mxu0 %v1201
      %2284 = vmatmul.mubr.bf16.gmra.mrb[0].mxu0 %v1152
      %v2285 = vpop.f32.mrb[0].mxu0
      %v2286 = vadd.f32 %v2125, %v2285
      %v2287 = vpop.f32.mrb[0].mxu0
      %v2288 = vpop.f32.mrb[0].mxu0
      %v2289 = vadd.f32 %v2128, %v2288
      %v2290 = vpop.f32.mrb[0].mxu0
      %2291 = vmatprep.mubr.bf16.mxu0 %v1202
      %2292 = vmatmul.mubr.bf16.gmra.mrb[0].mxu0 %v1153
      %v2293 = vpop.f32.mrb[0].mxu0
      %v2294 = vadd.f32 %v2133, %v2293
      %v2295 = vpop.f32.mrb[0].mxu0
      %v2296 = vpop.f32.mrb[0].mxu0
      %v2297 = vadd.f32 %v2136, %v2296
      %v2298 = vpop.f32.mrb[0].mxu0
      %2299 = vmatprep.mubr.bf16.mxu0 %v1203
      %2300 = vmatmul.mubr.bf16.gmra.mrb[0].mxu0 %v1154
      %v2301 = vpop.f32.mrb[0].mxu0
      %v2302 = vadd.f32 %v2141, %v2301
      %v2303 = vpop.f32.mrb[0].mxu0
      %v2304 = vpop.f32.mrb[0].mxu0
      %v2305 = vadd.f32 %v2144, %v2304
      %v2306 = vpop.f32.mrb[0].mxu0
      %2307 = vmatprep.mubr.bf16.mxu0 %v1204
      %2308 = vmatmul.mubr.bf16.gmra.mrb[0].mxu0 %v1155
      %v2309 = vpop.f32.mrb[0].mxu0
      %v2310 = vadd.f32 %v2149, %v2309
      %v2311 = vpop.f32.mrb[0].mxu0
      %v2312 = vpop.f32.mrb[0].mxu0
      %v2313 = vadd.f32 %v2152, %v2312
      %v2314 = vpop.f32.mrb[0].mxu0
      %2315 = vmatprep.mubr.bf16.mxu0 %v1205
      %2316 = vmatmul.mubr.bf16.gmra.mrb[0].mxu0 %v1156
      %v2317 = vpop.f32.mrb[0].mxu0
      %v2318 = vadd.f32 %v2157, %v2317
      %v2319 = vpop.f32.mrb[0].mxu0
      %v2320 = vpop.f32.mrb[0].mxu0
      %v2321 = vadd.f32 %v2160, %v2320
      %v2322 = vpop.f32.mrb[0].mxu0
      %2323 = vmatprep.mubr.bf16.mxu0 %v1206
      %2324 = vmatmul.mubr.bf16.gmra.mrb[0].mxu0 %v1157
      %v2325 = vpop.f32.mrb[0].mxu0
      %v2326 = vadd.f32 %v2165, %v2325
      %v2327 = vpop.f32.mrb[0].mxu0
      %v2328 = vpop.f32.mrb[0].mxu0
      %v2329 = vadd.f32 %v2168, %v2328
      %v2330 = vpop.f32.mrb[0].mxu0
      %2331 = vmatprep.mubr.bf16.mxu0 %v1207
      %2332 = vmatmul.mubr.bf16.gmra.mrb[0].mxu0 %v1158
      %v2333 = vpop.f32.mrb[0].mxu0
      %v2334 = vadd.f32 %v2173, %v2333
      %v2335 = vpop.f32.mrb[0].mxu0
      %v2336 = vpop.f32.mrb[0].mxu0
      %v2337 = vadd.f32 %v2176, %v2336
      %v2338 = vpop.f32.mrb[0].mxu0
      %2339 = vmatprep.mubr.bf16.mxu0 %v1208
      %2340 = vmatmul.mubr.bf16.gmra.mrb[0].mxu0 %v1159
      %v2341 = vpop.f32.mrb[0].mxu0
      %v2342 = vadd.f32 %v2181, %v2341
      %v2343 = vpop.f32.mrb[0].mxu0
      %v2344 = vpop.f32.mrb[0].mxu0
      %v2345 = vadd.f32 %v2184, %v2344
      %v2346 = vpop.f32.mrb[0].mxu0
      %2347 = vdwg.mxu0
      %2348 = vmatprep.subr.bf16.mxu0 0
      %2349 = vmatpush1.bf16.msra.mxu0 %v1914
      %2350 = vmatprep.subr.bf16.mxu0 0
      %2351 = vmatpush1.bf16.msra.mxu0 %v1915
      %2352 = vmatprep.subr.bf16.mxu0 0
      %2353 = vmatpush1.bf16.msra.mxu0 %v1916
      %2354 = vmatprep.subr.bf16.mxu0 0
      %2355 = vmatpush1.bf16.msra.mxu0 %v1917
      %2356 = vmatprep.subr.bf16.mxu0 0
      %2357 = vmatpush1.bf16.msra.mxu0 %v1918
      %2358 = vmatprep.subr.bf16.mxu0 0
      %2359 = vmatpush1.bf16.msra.mxu0 %v1919
      %2360 = vmatprep.subr.bf16.mxu0 0
      %2361 = vmatpush1.bf16.msra.mxu0 %v1920
      %2362 = vmatprep.subr.bf16.mxu0 0
      %2363 = vmatpush1.bf16.msra.mxu0 %v1921
      %2364 = vmatprep.subr.bf16.mxu0 0
      %2365 = vmatpush1.bf16.msra.mxu0 %v1922
      %2366 = vmatprep.subr.bf16.mxu0 0
      %2367 = vmatpush1.bf16.msra.mxu0 %v1923
      %2368 = vmatprep.subr.bf16.mxu0 0
      %2369 = vmatpush1.bf16.msra.mxu0 %v1924
      %2370 = vmatprep.subr.bf16.mxu0 0
      %2371 = vmatpush1.bf16.msra.mxu0 %v1925
      %2372 = vmatprep.subr.bf16.mxu0 0
      %2373 = vmatpush1.bf16.msra.mxu0 %v1926
      %2374 = vmatprep.subr.bf16.mxu0 0
      %2375 = vmatpush1.bf16.msra.mxu0 %v1927
      %2376 = vmatprep.subr.bf16.mxu0 0
      %2377 = vmatpush1.bf16.msra.mxu0 %v1928
      %2378 = vmatprep.subr.bf16.mxu0 0
      %2379 = vmatpush1.bf16.msra.mxu0 %v1929
      %2380 = vmatprep.mubr.bf16.mxu0 %v1289
      %2381 = vmatmul.mubr.bf16.gmra.mrb[0].mxu0 %v1241
      %v2382 = vpop.f32.mrb[0].mxu0
      %v2383 = vadd.f32 %v2222, %v2382
      %v2384 = vpop.f32.mrb[0].mxu0
      %v2385 = vpop.f32.mrb[0].mxu0
      %v2386 = vadd.f32 %v2225, %v2385
      %v2387 = vpop.f32.mrb[0].mxu0
      %2388 = vmatprep.mubr.bf16.mxu0 %v1290
      %2389 = vmatmul.mubr.bf16.gmra.mrb[0].mxu0 %v1242
      %v2390 = vpop.f32.mrb[0].mxu0
      %v2391 = vadd.f32 %v2230, %v2390
      %v2392 = vpop.f32.mrb[0].mxu0
      %v2393 = vpop.f32.mrb[0].mxu0
      %v2394 = vadd.f32 %v2233, %v2393
      %v2395 = vpop.f32.mrb[0].mxu0
      %2396 = vmatprep.mubr.bf16.mxu0 %v1291
      %2397 = vmatmul.mubr.bf16.gmra.mrb[0].mxu0 %v1243
      %v2398 = vpop.f32.mrb[0].mxu0
      %v2399 = vadd.f32 %v2238, %v2398
      %v2400 = vpop.f32.mrb[0].mxu0
      %v2401 = vpop.f32.mrb[0].mxu0
      %v2402 = vadd.f32 %v2241, %v2401
      %v2403 = vpop.f32.mrb[0].mxu0
      %2404 = vmatprep.mubr.bf16.mxu0 %v1292
      %2405 = vmatmul.mubr.bf16.gmra.mrb[0].mxu0 %v1244
      %v2406 = vpop.f32.mrb[0].mxu0
      %v2407 = vadd.f32 %v2246, %v2406
      %v2408 = vpop.f32.mrb[0].mxu0
      %v2409 = vpop.f32.mrb[0].mxu0
      %v2410 = vadd.f32 %v2249, %v2409
      %v2411 = vpop.f32.mrb[0].mxu0
      %2412 = vmatprep.mubr.bf16.mxu0 %v1293
      %2413 = vmatmul.mubr.bf16.gmra.mrb[0].mxu0 %v1245
      %v2414 = vpop.f32.mrb[0].mxu0
      %v2415 = vadd.f32 %v2254, %v2414
      %v2416 = vpop.f32.mrb[0].mxu0
      %v2417 = vpop.f32.mrb[0].mxu0
      %v2418 = vadd.f32 %v2257, %v2417
      %v2419 = vpop.f32.mrb[0].mxu0
      %2420 = vmatprep.mubr.bf16.mxu0 %v1294
      %2421 = vmatmul.mubr.bf16.gmra.mrb[0].mxu0 %v1246
      %v2422 = vpop.f32.mrb[0].mxu0
      %v2423 = vadd.f32 %v2262, %v2422
      %v2424 = vpop.f32.mrb[0].mxu0
      %v2425 = vpop.f32.mrb[0].mxu0
      %v2426 = vadd.f32 %v2265, %v2425
      %v2427 = vpop.f32.mrb[0].mxu0
      %2428 = vmatprep.mubr.bf16.mxu0 %v1295
      %2429 = vmatmul.mubr.bf16.gmra.mrb[0].mxu0 %v1247
      %v2430 = vpop.f32.mrb[0].mxu0
      %v2431 = vadd.f32 %v2270, %v2430
      %v2432 = vpop.f32.mrb[0].mxu0
      %v2433 = vpop.f32.mrb[0].mxu0
      %v2434 = vadd.f32 %v2273, %v2433
      %v2435 = vpop.f32.mrb[0].mxu0
      %2436 = vmatprep.mubr.bf16.mxu0 %v1296
      %2437 = vmatmul.mubr.bf16.gmra.mrb[0].mxu0 %v1248
      %v2438 = vpop.f32.mrb[0].mxu0
      %v2439 = vadd.f32 %v2278, %v2438
      %v2440 = vpop.f32.mrb[0].mxu0
      %v2441 = vpop.f32.mrb[0].mxu0
      %v2442 = vadd.f32 %v2281, %v2441
      %v2443 = vpop.f32.mrb[0].mxu0
      %2444 = vmatprep.mubr.bf16.mxu0 %v1297
      %2445 = vmatmul.mubr.bf16.gmra.mrb[0].mxu0 %v1249
      %v2446 = vpop.f32.mrb[0].mxu0
      %v2447 = vadd.f32 %v2286, %v2446
      %v2448 = vpop.f32.mrb[0].mxu0
      %v2449 = vpop.f32.mrb[0].mxu0
      %v2450 = vadd.f32 %v2289, %v2449
      %v2451 = vpop.f32.mrb[0].mxu0
      %2452 = vmatprep.mubr.bf16.mxu0 %v1298
      %2453 = vmatmul.mubr.bf16.gmra.mrb[0].mxu0 %v1250
      %v2454 = vpop.f32.mrb[0].mxu0
      %v2455 = vadd.f32 %v2294, %v2454
      %v2456 = vpop.f32.mrb[0].mxu0
      %v2457 = vpop.f32.mrb[0].mxu0
      %v2458 = vadd.f32 %v2297, %v2457
      %v2459 = vpop.f32.mrb[0].mxu0
      %2460 = vmatprep.mubr.bf16.mxu0 %v1299
      %2461 = vmatmul.mubr.bf16.gmra.mrb[0].mxu0 %v1251
      %v2462 = vpop.f32.mrb[0].mxu0
      %v2463 = vadd.f32 %v2302, %v2462
      %v2464 = vpop.f32.mrb[0].mxu0
      %v2465 = vpop.f32.mrb[0].mxu0
      %v2466 = vadd.f32 %v2305, %v2465
      %v2467 = vpop.f32.mrb[0].mxu0
      %2468 = vmatprep.mubr.bf16.mxu0 %v1300
      %2469 = vmatmul.mubr.bf16.gmra.mrb[0].mxu0 %v1252
      %v2470 = vpop.f32.mrb[0].mxu0
      %v2471 = vadd.f32 %v2310, %v2470
      %v2472 = vpop.f32.mrb[0].mxu0
      %v2473 = vpop.f32.mrb[0].mxu0
      %v2474 = vadd.f32 %v2313, %v2473
      %v2475 = vpop.f32.mrb[0].mxu0
      %2476 = vmatprep.mubr.bf16.mxu0 %v1301
      %2477 = vmatmul.mubr.bf16.gmra.mrb[0].mxu0 %v1253
      %v2478 = vpop.f32.mrb[0].mxu0
      %v2479 = vadd.f32 %v2318, %v2478
      %v2480 = vpop.f32.mrb[0].mxu0
      %v2481 = vpop.f32.mrb[0].mxu0
      %v2482 = vadd.f32 %v2321, %v2481
      %v2483 = vpop.f32.mrb[0].mxu0
      %2484 = vmatprep.mubr.bf16.mxu0 %v1302
      %2485 = vmatmul.mubr.bf16.gmra.mrb[0].mxu0 %v1254
      %v2486 = vpop.f32.mrb[0].mxu0
      %v2487 = vadd.f32 %v2326, %v2486
      %v2488 = vpop.f32.mrb[0].mxu0
      %v2489 = vpop.f32.mrb[0].mxu0
      %v2490 = vadd.f32 %v2329, %v2489
      %v2491 = vpop.f32.mrb[0].mxu0
      %2492 = vmatprep.mubr.bf16.mxu0 %v1303
      %2493 = vmatmul.mubr.bf16.gmra.mrb[0].mxu0 %v1255
      %v2494 = vpop.f32.mrb[0].mxu0
      %v2495 = vadd.f32 %v2334, %v2494
      %v2496 = vpop.f32.mrb[0].mxu0
      %v2497 = vpop.f32.mrb[0].mxu0
      %v2498 = vadd.f32 %v2337, %v2497
      %v2499 = vpop.f32.mrb[0].mxu0
      %2500 = vmatprep.mubr.bf16.mxu0 %v1304
      %2501 = vmatmul.mubr.bf16.gmra.mrb[0].mxu0 %v1256
      %v2502 = vpop.f32.mrb[0].mxu0
      %v2503 = vadd.f32 %v2342, %v2502
      %v2504 = vpop.f32.mrb[0].mxu0
      %v2505 = vpop.f32.mrb[0].mxu0
      %v2506 = vadd.f32 %v2345, %v2505
      %v2507 = vpop.f32.mrb[0].mxu0
      %2508 = vdwg.mxu0
      %2509 = vmatprep.subr.bf16.mxu0 0
      %2510 = vmatpush1.bf16.msra.mxu0 %v1930
      %2511 = vmatprep.subr.bf16.mxu0 0
      %2512 = vmatpush1.bf16.msra.mxu0 %v1931
      %2513 = vmatprep.subr.bf16.mxu0 0
      %2514 = vmatpush1.bf16.msra.mxu0 %v1932
      %2515 = vmatprep.subr.bf16.mxu0 0
      %2516 = vmatpush1.bf16.msra.mxu0 %v1933
      %2517 = vmatprep.subr.bf16.mxu0 0
      %2518 = vmatpush1.bf16.msra.mxu0 %v1934
      %2519 = vmatprep.subr.bf16.mxu0 0
      %2520 = vmatpush1.bf16.msra.mxu0 %v1935
      %2521 = vmatprep.subr.bf16.mxu0 0
      %2522 = vmatpush1.bf16.msra.mxu0 %v1936
      %2523 = vmatprep.subr.bf16.mxu0 0
      %2524 = vmatpush1.bf16.msra.mxu0 %v1937
      %2525 = vmatprep.subr.bf16.mxu0 0
      %2526 = vmatpush1.bf16.msra.mxu0 %v1938
      %2527 = vmatprep.subr.bf16.mxu0 0
      %2528 = vmatpush1.bf16.msra.mxu0 %v1939
      %2529 = vmatprep.subr.bf16.mxu0 0
      %2530 = vmatpush1.bf16.msra.mxu0 %v1940
      %2531 = vmatprep.subr.bf16.mxu0 0
      %2532 = vmatpush1.bf16.msra.mxu0 %v1941
      %2533 = vmatprep.subr.bf16.mxu0 0
      %2534 = vmatpush1.bf16.msra.mxu0 %v1942
      %2535 = vmatprep.subr.bf16.mxu0 0
      %2536 = vmatpush1.bf16.msra.mxu0 %v1943
      %2537 = vmatprep.subr.bf16.mxu0 0
      %2538 = vmatpush1.bf16.msra.mxu0 %v1944
      %2539 = vmatprep.subr.bf16.mxu0 0
      %2540 = vmatpush1.bf16.msra.mxu0 %v1945
      %2541 = vmatprep.mubr.bf16.mxu0 %v1386
      %2542 = vmatmul.mubr.bf16.gmra.mrb[0].mxu0 %v1338
      %v2543 = vpop.f32.mrb[0].mxu0
      %v2544 = vadd.f32 %v2383, %v2543
      %v2545 = vpop.f32.mrb[0].mxu0
      %v2546 = vpop.f32.mrb[0].mxu0
      %v2547 = vadd.f32 %v2386, %v2546
      %v2548 = vpop.f32.mrb[0].mxu0
      %2549 = vmatprep.mubr.bf16.mxu0 %v1387
      %2550 = vmatmul.mubr.bf16.gmra.mrb[0].mxu0 %v1339
      %v2551 = vpop.f32.mrb[0].mxu0
      %v2552 = vadd.f32 %v2391, %v2551
      %v2553 = vpop.f32.mrb[0].mxu0
      %v2554 = vpop.f32.mrb[0].mxu0
      %v2555 = vadd.f32 %v2394, %v2554
      %v2556 = vpop.f32.mrb[0].mxu0
      %2557 = vmatprep.mubr.bf16.mxu0 %v1388
      %2558 = vmatmul.mubr.bf16.gmra.mrb[0].mxu0 %v1340
      %v2559 = vpop.f32.mrb[0].mxu0
      %v2560 = vadd.f32 %v2399, %v2559
      %v2561 = vpop.f32.mrb[0].mxu0
      %v2562 = vpop.f32.mrb[0].mxu0
      %v2563 = vadd.f32 %v2402, %v2562
      %v2564 = vpop.f32.mrb[0].mxu0
      %2565 = vmatprep.mubr.bf16.mxu0 %v1389
      %2566 = vmatmul.mubr.bf16.gmra.mrb[0].mxu0 %v1341
      %v2567 = vpop.f32.mrb[0].mxu0
      %v2568 = vadd.f32 %v2407, %v2567
      %v2569 = vpop.f32.mrb[0].mxu0
      %v2570 = vpop.f32.mrb[0].mxu0
      %v2571 = vadd.f32 %v2410, %v2570
      %v2572 = vpop.f32.mrb[0].mxu0
      %2573 = vmatprep.mubr.bf16.mxu0 %v1390
      %2574 = vmatmul.mubr.bf16.gmra.mrb[0].mxu0 %v1342
      %v2575 = vpop.f32.mrb[0].mxu0
      %v2576 = vadd.f32 %v2415, %v2575
      %v2577 = vpop.f32.mrb[0].mxu0
      %v2578 = vpop.f32.mrb[0].mxu0
      %v2579 = vadd.f32 %v2418, %v2578
      %v2580 = vpop.f32.mrb[0].mxu0
      %2581 = vmatprep.mubr.bf16.mxu0 %v1391
      %2582 = vmatmul.mubr.bf16.gmra.mrb[0].mxu0 %v1343
      %v2583 = vpop.f32.mrb[0].mxu0
      %v2584 = vadd.f32 %v2423, %v2583
      %v2585 = vpop.f32.mrb[0].mxu0
      %v2586 = vpop.f32.mrb[0].mxu0
      %v2587 = vadd.f32 %v2426, %v2586
      %v2588 = vpop.f32.mrb[0].mxu0
      %2589 = vmatprep.mubr.bf16.mxu0 %v1392
      %2590 = vmatmul.mubr.bf16.gmra.mrb[0].mxu0 %v1344
      %v2591 = vpop.f32.mrb[0].mxu0
      %v2592 = vadd.f32 %v2431, %v2591
      %v2593 = vpop.f32.mrb[0].mxu0
      %v2594 = vpop.f32.mrb[0].mxu0
      %v2595 = vadd.f32 %v2434, %v2594
      %v2596 = vpop.f32.mrb[0].mxu0
      %2597 = vmatprep.mubr.bf16.mxu0 %v1393
      %2598 = vmatmul.mubr.bf16.gmra.mrb[0].mxu0 %v1345
      %v2599 = vpop.f32.mrb[0].mxu0
      %v2600 = vadd.f32 %v2439, %v2599
      %v2601 = vpop.f32.mrb[0].mxu0
      %v2602 = vpop.f32.mrb[0].mxu0
      %v2603 = vadd.f32 %v2442, %v2602
      %v2604 = vpop.f32.mrb[0].mxu0
      %2605 = vmatprep.mubr.bf16.mxu0 %v1394
      %2606 = vmatmul.mubr.bf16.gmra.mrb[0].mxu0 %v1346
      %v2607 = vpop.f32.mrb[0].mxu0
      %v2608 = vadd.f32 %v2447, %v2607
      %v2609 = vpop.f32.mrb[0].mxu0
      %v2610 = vpop.f32.mrb[0].mxu0
      %v2611 = vadd.f32 %v2450, %v2610
      %v2612 = vpop.f32.mrb[0].mxu0
      %2613 = vmatprep.mubr.bf16.mxu0 %v1395
      %2614 = vmatmul.mubr.bf16.gmra.mrb[0].mxu0 %v1347
      %v2615 = vpop.f32.mrb[0].mxu0
      %v2616 = vadd.f32 %v2455, %v2615
      %v2617 = vpop.f32.mrb[0].mxu0
      %v2618 = vpop.f32.mrb[0].mxu0
      %v2619 = vadd.f32 %v2458, %v2618
      %v2620 = vpop.f32.mrb[0].mxu0
      %2621 = vmatprep.mubr.bf16.mxu0 %v1396
      %2622 = vmatmul.mubr.bf16.gmra.mrb[0].mxu0 %v1348
      %v2623 = vpop.f32.mrb[0].mxu0
      %v2624 = vadd.f32 %v2463, %v2623
      %v2625 = vpop.f32.mrb[0].mxu0
      %v2626 = vpop.f32.mrb[0].mxu0
      %v2627 = vadd.f32 %v2466, %v2626
      %v2628 = vpop.f32.mrb[0].mxu0
      %2629 = vmatprep.mubr.bf16.mxu0 %v1397
      %2630 = vmatmul.mubr.bf16.gmra.mrb[0].mxu0 %v1349
      %v2631 = vpop.f32.mrb[0].mxu0
      %v2632 = vadd.f32 %v2471, %v2631
      %v2633 = vpop.f32.mrb[0].mxu0
      %v2634 = vpop.f32.mrb[0].mxu0
      %v2635 = vadd.f32 %v2474, %v2634
      %v2636 = vpop.f32.mrb[0].mxu0
      %2637 = vmatprep.mubr.bf16.mxu0 %v1398
      %2638 = vmatmul.mubr.bf16.gmra.mrb[0].mxu0 %v1350
      %v2639 = vpop.f32.mrb[0].mxu0
      %v2640 = vadd.f32 %v2479, %v2639
      %v2641 = vpop.f32.mrb[0].mxu0
      %v2642 = vpop.f32.mrb[0].mxu0
      %v2643 = vadd.f32 %v2482, %v2642
      %v2644 = vpop.f32.mrb[0].mxu0
      %2645 = vmatprep.mubr.bf16.mxu0 %v1399
      %2646 = vmatmul.mubr.bf16.gmra.mrb[0].mxu0 %v1351
      %v2647 = vpop.f32.mrb[0].mxu0
      %v2648 = vadd.f32 %v2487, %v2647
      %v2649 = vpop.f32.mrb[0].mxu0
      %v2650 = vpop.f32.mrb[0].mxu0
      %v2651 = vadd.f32 %v2490, %v2650
      %v2652 = vpop.f32.mrb[0].mxu0
      %2653 = vmatprep.mubr.bf16.mxu0 %v1400
      %2654 = vmatmul.mubr.bf16.gmra.mrb[0].mxu0 %v1352
      %v2655 = vpop.f32.mrb[0].mxu0
      %v2656 = vadd.f32 %v2495, %v2655
      %v2657 = vpop.f32.mrb[0].mxu0
      %v2658 = vpop.f32.mrb[0].mxu0
      %v2659 = vadd.f32 %v2498, %v2658
      %v2660 = vpop.f32.mrb[0].mxu0
      %2661 = vmatprep.mubr.bf16.mxu0 %v1401
      %2662 = vmatmul.mubr.bf16.gmra.mrb[0].mxu0 %v1353
      %v2663 = vpop.f32.mrb[0].mxu0
      %v2664 = vadd.f32 %v2503, %v2663
      %v2665 = vpop.f32.mrb[0].mxu0
      %v2666 = vpop.f32.mrb[0].mxu0
      %v2667 = vadd.f32 %v2506, %v2666
      %v2668 = vpop.f32.mrb[0].mxu0
      %2669 = vdwg.mxu0
      %2670 = vmatprep.subr.bf16.mxu0 0
      %2671 = vmatpush1.bf16.msra.mxu0 %v1946
      %2672 = vmatprep.subr.bf16.mxu0 0
      %2673 = vmatpush1.bf16.msra.mxu0 %v1947
      %2674 = vmatprep.subr.bf16.mxu0 0
      %2675 = vmatpush1.bf16.msra.mxu0 %v1948
      %2676 = vmatprep.subr.bf16.mxu0 0
      %2677 = vmatpush1.bf16.msra.mxu0 %v1949
      %2678 = vmatprep.subr.bf16.mxu0 0
      %2679 = vmatpush1.bf16.msra.mxu0 %v1950
      %2680 = vmatprep.subr.bf16.mxu0 0
      %2681 = vmatpush1.bf16.msra.mxu0 %v1951
      %2682 = vmatprep.subr.bf16.mxu0 0
      %2683 = vmatpush1.bf16.msra.mxu0 %v1952
      %2684 = vmatprep.subr.bf16.mxu0 0
      %2685 = vmatpush1.bf16.msra.mxu0 %v1953
      %2686 = vmatprep.subr.bf16.mxu0 0
      %2687 = vmatpush1.bf16.msra.mxu0 0
      %2688 = vmatprep.subr.bf16.mxu0 0
      %2689 = vmatpush1.bf16.msra.mxu0 0
      %2690 = vmatprep.subr.bf16.mxu0 0
      %2691 = vmatpush1.bf16.msra.mxu0 0
      %2692 = vmatprep.subr.bf16.mxu0 0
      %2693 = vmatpush1.bf16.msra.mxu0 0
      %2694 = vmatprep.subr.bf16.mxu0 0
      %2695 = vmatpush1.bf16.msra.mxu0 0
      %2696 = vmatprep.subr.bf16.mxu0 0
      %2697 = vmatpush1.bf16.msra.mxu0 0
      %2698 = vmatprep.subr.bf16.mxu0 0
      %2699 = vmatpush1.bf16.msra.mxu0 0
      %2700 = vmatprep.subr.bf16.mxu0 0
      %2701 = vmatpush1.bf16.msra.mxu0 0
      %2702 = vmatprep.mubr.bf16.mxu0 0
      %2703 = vmatmul.mubr.bf16.gmra.mrb[0].mxu0 %v1434
      %v2704 = vpop.f32.mrb[0].mxu0
      %v2705 = vadd.f32 %v2544, %v2704
      %v2706 = vpop.f32.mrb[0].mxu0
      %v2707 = vpop.f32.mrb[0].mxu0
      %v2708 = vadd.f32 %v2547, %v2707
      %v2709 = vpop.f32.mrb[0].mxu0
      %2710 = vmatprep.mubr.bf16.mxu0 0
      %2711 = vmatmul.mubr.bf16.gmra.mrb[0].mxu0 %v1435
      %v2712 = vpop.f32.mrb[0].mxu0
      %v2713 = vadd.f32 %v2552, %v2712
      %v2714 = vpop.f32.mrb[0].mxu0
      %v2715 = vpop.f32.mrb[0].mxu0
      %v2716 = vadd.f32 %v2555, %v2715
      %v2717 = vpop.f32.mrb[0].mxu0
      %2718 = vmatprep.mubr.bf16.mxu0 0
      %2719 = vmatmul.mubr.bf16.gmra.mrb[0].mxu0 %v1436
      %v2720 = vpop.f32.mrb[0].mxu0
      %v2721 = vadd.f32 %v2560, %v2720
      %v2722 = vpop.f32.mrb[0].mxu0
      %v2723 = vpop.f32.mrb[0].mxu0
      %v2724 = vadd.f32 %v2563, %v2723
      %v2725 = vpop.f32.mrb[0].mxu0
      %2726 = vmatprep.mubr.bf16.mxu0 0
      %2727 = vmatmul.mubr.bf16.gmra.mrb[0].mxu0 %v1437
      %v2728 = vpop.f32.mrb[0].mxu0
      %v2729 = vadd.f32 %v2568, %v2728
      %v2730 = vpop.f32.mrb[0].mxu0
      %v2731 = vpop.f32.mrb[0].mxu0
      %v2732 = vadd.f32 %v2571, %v2731
      %v2733 = vpop.f32.mrb[0].mxu0
      %2734 = vmatprep.mubr.bf16.mxu0 0
      %2735 = vmatmul.mubr.bf16.gmra.mrb[0].mxu0 %v1438
      %v2736 = vpop.f32.mrb[0].mxu0
      %v2737 = vadd.f32 %v2576, %v2736
      %v2738 = vpop.f32.mrb[0].mxu0
      %v2739 = vpop.f32.mrb[0].mxu0
      %v2740 = vadd.f32 %v2579, %v2739
      %v2741 = vpop.f32.mrb[0].mxu0
      %2742 = vmatprep.mubr.bf16.mxu0 0
      %2743 = vmatmul.mubr.bf16.gmra.mrb[0].mxu0 %v1439
      %v2744 = vpop.f32.mrb[0].mxu0
      %v2745 = vadd.f32 %v2584, %v2744
      %v2746 = vpop.f32.mrb[0].mxu0
      %v2747 = vpop.f32.mrb[0].mxu0
      %v2748 = vadd.f32 %v2587, %v2747
      %v2749 = vpop.f32.mrb[0].mxu0
      %2750 = vmatprep.mubr.bf16.mxu0 0
      %2751 = vmatmul.mubr.bf16.gmra.mrb[0].mxu0 %v1440
      %v2752 = vpop.f32.mrb[0].mxu0
      %v2753 = vadd.f32 %v2592, %v2752
      %v2754 = vpop.f32.mrb[0].mxu0
      %v2755 = vpop.f32.mrb[0].mxu0
      %v2756 = vadd.f32 %v2595, %v2755
      %v2757 = vpop.f32.mrb[0].mxu0
      %2758 = vmatprep.mubr.bf16.mxu0 0
      %2759 = vmatmul.mubr.bf16.gmra.mrb[0].mxu0 %v1441
      %v2760 = vpop.f32.mrb[0].mxu0
      %v2761 = vadd.f32 %v2600, %v2760
      %v2762 = vpop.f32.mrb[0].mxu0
      %v2763 = vpop.f32.mrb[0].mxu0
      %v2764 = vadd.f32 %v2603, %v2763
      %v2765 = vpop.f32.mrb[0].mxu0
      %2766 = vmatprep.mubr.bf16.mxu0 0
      %2767 = vmatmul.mubr.bf16.gmra.mrb[0].mxu0 %v1442
      %v2768 = vpop.f32.mrb[0].mxu0
      %v2769 = vadd.f32 %v2608, %v2768
      %v2770 = vpop.f32.mrb[0].mxu0
      %v2771 = vpop.f32.mrb[0].mxu0
      %v2772 = vadd.f32 %v2611, %v2771
      %v2773 = vpop.f32.mrb[0].mxu0
      %2774 = vmatprep.mubr.bf16.mxu0 0
      %2775 = vmatmul.mubr.bf16.gmra.mrb[0].mxu0 %v1443
      %v2776 = vpop.f32.mrb[0].mxu0
      %v2777 = vadd.f32 %v2616, %v2776
      %v2778 = vpop.f32.mrb[0].mxu0
      %v2779 = vpop.f32.mrb[0].mxu0
      %v2780 = vadd.f32 %v2619, %v2779
      %v2781 = vpop.f32.mrb[0].mxu0
      %2782 = vmatprep.mubr.bf16.mxu0 0
      %2783 = vmatmul.mubr.bf16.gmra.mrb[0].mxu0 %v1444
      %v2784 = vpop.f32.mrb[0].mxu0
      %v2785 = vadd.f32 %v2624, %v2784
      %v2786 = vpop.f32.mrb[0].mxu0
      %v2787 = vpop.f32.mrb[0].mxu0
      %v2788 = vadd.f32 %v2627, %v2787
      %v2789 = vpop.f32.mrb[0].mxu0
      %2790 = vmatprep.mubr.bf16.mxu0 0
      %2791 = vmatmul.mubr.bf16.gmra.mrb[0].mxu0 %v1445
      %v2792 = vpop.f32.mrb[0].mxu0
      %v2793 = vadd.f32 %v2632, %v2792
      %v2794 = vpop.f32.mrb[0].mxu0
      %v2795 = vpop.f32.mrb[0].mxu0
      %v2796 = vadd.f32 %v2635, %v2795
      %v2797 = vpop.f32.mrb[0].mxu0
      %2798 = vmatprep.mubr.bf16.mxu0 0
      %2799 = vmatmul.mubr.bf16.gmra.mrb[0].mxu0 %v1446
      %v2800 = vpop.f32.mrb[0].mxu0
      %v2801 = vadd.f32 %v2640, %v2800
      %v2802 = vpop.f32.mrb[0].mxu0
      %v2803 = vpop.f32.mrb[0].mxu0
      %v2804 = vadd.f32 %v2643, %v2803
      %v2805 = vpop.f32.mrb[0].mxu0
      %2806 = vmatprep.mubr.bf16.mxu0 0
      %2807 = vmatmul.mubr.bf16.gmra.mrb[0].mxu0 %v1447
      %v2808 = vpop.f32.mrb[0].mxu0
      %v2809 = vadd.f32 %v2648, %v2808
      %v2810 = vpop.f32.mrb[0].mxu0
      %v2811 = vpop.f32.mrb[0].mxu0
      %v2812 = vadd.f32 %v2651, %v2811
      %v2813 = vpop.f32.mrb[0].mxu0
      %2814 = vmatprep.mubr.bf16.mxu0 0
      %2815 = vmatmul.mubr.bf16.gmra.mrb[0].mxu0 %v1448
      %v2816 = vpop.f32.mrb[0].mxu0
      %v2817 = vadd.f32 %v2656, %v2816
      %v2818 = vpop.f32.mrb[0].mxu0
      %v2819 = vpop.f32.mrb[0].mxu0
      %v2820 = vadd.f32 %v2659, %v2819
      %v2821 = vpop.f32.mrb[0].mxu0
      %2822 = vmatprep.mubr.bf16.mxu0 0
      %2823 = vmatmul.mubr.bf16.gmra.mrb[0].mxu0 %v1449
      %v2824 = vpop.f32.mrb[0].mxu0
      %v2825 = vadd.f32 %v2664, %v2824
      %v2826 = vpop.f32.mrb[0].mxu0
      %v2827 = vpop.f32.mrb[0].mxu0
      %v2828 = vadd.f32 %v2667, %v2827
      %v2829 = vpop.f32.mrb[0].mxu0
      %2830 = vdwg.mxu0
      %v2831 = vld [vmem:[%s6] sm:$0x1]
      %v2833 = vlaneseq
      %v2834 = vshrl.u32 %v2833, 7
      %v2835 = vsub.s32 0, %v2834
      %v2836 = vrot.slane %v2831, %v2835
      %v2838 = vmul.f32 %v2705, %v2836
      %v2839 = vmul.f32 %v2708, %v2836
      %v2840 = vmul.f32 %v2713, %v2836
      %v2841 = vmul.f32 %v2716, %v2836
      %v2842 = vmul.f32 %v2721, %v2836
      %v2843 = vmul.f32 %v2724, %v2836
      %v2844 = vmul.f32 %v2729, %v2836
      %v2845 = vmul.f32 %v2732, %v2836
      %v2846 = vmul.f32 %v2737, %v2836
      %v2847 = vmul.f32 %v2740, %v2836
      %v2848 = vmul.f32 %v2745, %v2836
      %v2849 = vmul.f32 %v2748, %v2836
      %v2850 = vmul.f32 %v2753, %v2836
      %v2851 = vmul.f32 %v2756, %v2836
      %v2852 = vmul.f32 %v2761, %v2836
      %v2853 = vmul.f32 %v2764, %v2836
      %v2854 = vmul.f32 %v2769, %v2836
      %v2855 = vmul.f32 %v2772, %v2836
      %v2856 = vmul.f32 %v2777, %v2836
      %v2857 = vmul.f32 %v2780, %v2836
      %v2858 = vmul.f32 %v2785, %v2836
      %v2859 = vmul.f32 %v2788, %v2836
      %v2860 = vmul.f32 %v2793, %v2836
      %v2861 = vmul.f32 %v2796, %v2836
      %v2862 = vmul.f32 %v2801, %v2836
      %v2863 = vmul.f32 %v2804, %v2836
      %v2864 = vmul.f32 %v2809, %v2836
      %v2865 = vmul.f32 %v2812, %v2836
      %v2866 = vmul.f32 %v2817, %v2836
      %v2867 = vmul.f32 %v2820, %v2836
      %v2868 = vmul.f32 %v2825, %v2836
      %v2869 = vmul.f32 %v2828, %v2836
      %v2870 = vld [vmem:[%s7] sm:$0x1]
      %v2872 = vlaneseq
      %v2873 = vshrl.u32 %v2872, 7
      %v2874 = vsub.s32 0, %v2873
      %v2875 = vrot.slane %v2870, %v2874
      %v2877 = vadd.f32 %v2838, %v2875
      %v2878 = vadd.f32 %v2839, %v2875
      %v2879 = vadd.f32 %v2840, %v2875
      %v2880 = vadd.f32 %v2841, %v2875
      %v2881 = vadd.f32 %v2842, %v2875
      %v2882 = vadd.f32 %v2843, %v2875
      %v2883 = vadd.f32 %v2844, %v2875
      %v2884 = vadd.f32 %v2845, %v2875
      %v2885 = vadd.f32 %v2846, %v2875
      %v2886 = vadd.f32 %v2847, %v2875
      %v2887 = vadd.f32 %v2848, %v2875
      %v2888 = vadd.f32 %v2849, %v2875
      %v2889 = vadd.f32 %v2850, %v2875
      %v2890 = vadd.f32 %v2851, %v2875
      %v2891 = vadd.f32 %v2852, %v2875
      %v2892 = vadd.f32 %v2853, %v2875
      %v2893 = vadd.f32 %v2854, %v2875
      %v2894 = vadd.f32 %v2855, %v2875
      %v2895 = vadd.f32 %v2856, %v2875
      %v2896 = vadd.f32 %v2857, %v2875
      %v2897 = vadd.f32 %v2858, %v2875
      %v2898 = vadd.f32 %v2859, %v2875
      %v2899 = vadd.f32 %v2860, %v2875
      %v2900 = vadd.f32 %v2861, %v2875
      %v2901 = vadd.f32 %v2862, %v2875
      %v2902 = vadd.f32 %v2863, %v2875
      %v2903 = vadd.f32 %v2864, %v2875
      %v2904 = vadd.f32 %v2865, %v2875
      %v2905 = vadd.f32 %v2866, %v2875
      %v2906 = vadd.f32 %v2867, %v2875
      %v2907 = vadd.f32 %v2868, %v2875
      %v2908 = vadd.f32 %v2869, %v2875
      %v2909 = vmax.f32 %v2877, 0.0
      %v2910 = vmax.f32 %v2878, 0.0
      %v2911 = vmax.f32 %v2879, 0.0
      %v2912 = vmax.f32 %v2880, 0.0
      %v2913 = vmax.f32 %v2881, 0.0
      %v2914 = vmax.f32 %v2882, 0.0
      %v2915 = vmax.f32 %v2883, 0.0
      %v2916 = vmax.f32 %v2884, 0.0
      %v2917 = vmax.f32 %v2885, 0.0
      %v2918 = vmax.f32 %v2886, 0.0
      %v2919 = vmax.f32 %v2887, 0.0
      %v2920 = vmax.f32 %v2888, 0.0
      %v2921 = vmax.f32 %v2889, 0.0
      %v2922 = vmax.f32 %v2890, 0.0
      %v2923 = vmax.f32 %v2891, 0.0
      %v2924 = vmax.f32 %v2892, 0.0
      %v2925 = vmax.f32 %v2893, 0.0
      %v2926 = vmax.f32 %v2894, 0.0
      %v2927 = vmax.f32 %v2895, 0.0
      %v2928 = vmax.f32 %v2896, 0.0
      %v2929 = vmax.f32 %v2897, 0.0
      %v2930 = vmax.f32 %v2898, 0.0
      %v2931 = vmax.f32 %v2899, 0.0
      %v2932 = vmax.f32 %v2900, 0.0
      %v2933 = vmax.f32 %v2901, 0.0
      %v2934 = vmax.f32 %v2902, 0.0
      %v2935 = vmax.f32 %v2903, 0.0
      %v2936 = vmax.f32 %v2904, 0.0
      %v2937 = vmax.f32 %v2905, 0.0
      %v2938 = vmax.f32 %v2906, 0.0
      %v2939 = vmax.f32 %v2907, 0.0
      %v2940 = vmax.f32 %v2908, 0.0
      %v2941 = vpack.c.bf16 %v2910, %v2909
      %v2942 = vpack.c.bf16 %v2912, %v2911
      %v2943 = vpack.c.bf16 %v2914, %v2913
      %v2944 = vpack.c.bf16 %v2916, %v2915
      %v2945 = vpack.c.bf16 %v2918, %v2917
      %v2946 = vpack.c.bf16 %v2920, %v2919
      %v2947 = vpack.c.bf16 %v2922, %v2921
      %v2948 = vpack.c.bf16 %v2924, %v2923
      %v2949 = vpack.c.bf16 %v2926, %v2925
      %v2950 = vpack.c.bf16 %v2928, %v2927
      %v2951 = vpack.c.bf16 %v2930, %v2929
      %v2952 = vpack.c.bf16 %v2932, %v2931
      %v2953 = vpack.c.bf16 %v2934, %v2933
      %v2954 = vpack.c.bf16 %v2936, %v2935
      %v2955 = vpack.c.bf16 %v2938, %v2937
      %v2956 = vpack.c.bf16 %v2940, %v2939
      %v2957 = vld [vmem:[%s3] sm:$0xf]
      %v2958 = vld [vmem:[%s3 + $0x4] sm:$0xf]
      %v2959 = vld [vmem:[%s3 + $0x8] sm:$0xf]
      %v2960 = vld [vmem:[%s3 + $0xc] sm:$0xf]
      %v2961 = vld [vmem:[%s3 + $0x10] sm:$0xf]
      %v2962 = vld [vmem:[%s3 + $0x14] sm:$0xf]
      %v2963 = vld [vmem:[%s3 + $0x18] sm:$0xf]
      %v2964 = vld [vmem:[%s3 + $0x1c] sm:$0xf]
      %v2965 = vld [vmem:[%s3 + $0x20] sm:$0xf]
      %v2966 = vld [vmem:[%s3 + $0x24] sm:$0xf]
      %v2967 = vld [vmem:[%s3 + $0x28] sm:$0xf]
      %v2968 = vld [vmem:[%s3 + $0x2c] sm:$0xf]
      %v2969 = vld [vmem:[%s3 + $0x30] sm:$0xf]
      %v2970 = vld [vmem:[%s3 + $0x34] sm:$0xf]
      %v2971 = vld [vmem:[%s3 + $0x38] sm:$0xf]
      %v2972 = vld [vmem:[%s3 + $0x3c] sm:$0xf]
      %v2989 = vunpack.c.l.b16 %v2957
      %v2990 = vunpack.c.l.b16 %v2958
      %v2991 = vunpack.c.l.b16 %v2959
      %v2992 = vunpack.c.l.b16 %v2960
      %v2993 = vunpack.c.l.b16 %v2961
      %v2994 = vunpack.c.l.b16 %v2962
      %v2995 = vunpack.c.l.b16 %v2963
      %v2996 = vunpack.c.l.b16 %v2964
      %v2997 = vunpack.c.l.b16 %v2965
      %v2998 = vunpack.c.l.b16 %v2966
      %v2999 = vunpack.c.l.b16 %v2967
      %v3000 = vunpack.c.l.b16 %v2968
      %v3001 = vunpack.c.l.b16 %v2969
      %v3002 = vunpack.c.l.b16 %v2970
      %v3003 = vunpack.c.l.b16 %v2971
      %v3004 = vunpack.c.l.b16 %v2972
      %v3005 = vpack.c.b16 %v2990, %v2989
      %v3006 = vpack.c.b16 %v2992, %v2991
      %v3007 = vpack.c.b16 %v2994, %v2993
      %v3008 = vpack.c.b16 %v2996, %v2995
      %v3009 = vpack.c.b16 %v2998, %v2997
      %v3010 = vpack.c.b16 %v3000, %v2999
      %v3011 = vpack.c.b16 %v3002, %v3001
      %v3012 = vpack.c.b16 %v3004, %v3003
      %3021 = vmatprep.subr.bf16.mxu0 0
      %3022 = vmatpush1.bf16.msra.mxu0 %v3005
      %3023 = vmatprep.subr.bf16.mxu0 0
      %3024 = vmatpush1.bf16.msra.mxu0 %v3006
      %3025 = vmatprep.subr.bf16.mxu0 0
      %3026 = vmatpush1.bf16.msra.mxu0 %v3007
      %3027 = vmatprep.subr.bf16.mxu0 0
      %3028 = vmatpush1.bf16.msra.mxu0 %v3008
      %3029 = vmatprep.subr.bf16.mxu0 0
      %3030 = vmatpush1.bf16.msra.mxu0 %v3009
      %3031 = vmatprep.subr.bf16.mxu0 0
      %3032 = vmatpush1.bf16.msra.mxu0 %v3010
      %3033 = vmatprep.subr.bf16.mxu0 0
      %3034 = vmatpush1.bf16.msra.mxu0 %v3011
      %3035 = vmatprep.subr.bf16.mxu0 0
      %3036 = vmatpush1.bf16.msra.mxu0 %v3012
      %3037 = vmatprep.subr.bf16.mxu0 0
      %3038 = vmatpush1.bf16.msra.mxu0 0
      %3039 = vmatprep.subr.bf16.mxu0 0
      %3040 = vmatpush1.bf16.msra.mxu0 0
      %3041 = vmatprep.subr.bf16.mxu0 0
      %3042 = vmatpush1.bf16.msra.mxu0 0
      %3043 = vmatprep.subr.bf16.mxu0 0
      %3044 = vmatpush1.bf16.msra.mxu0 0
      %3045 = vmatprep.subr.bf16.mxu0 0
      %3046 = vmatpush1.bf16.msra.mxu0 0
      %3047 = vmatprep.subr.bf16.mxu0 0
      %3048 = vmatpush1.bf16.msra.mxu0 0
      %3049 = vmatprep.subr.bf16.mxu0 0
      %3050 = vmatpush1.bf16.msra.mxu0 0
      %3051 = vmatprep.subr.bf16.mxu0 0
      %3052 = vmatpush1.bf16.msra.mxu0 0
      %3053 = vmatprep.mubr.bf16.mxu0 0
      %3054 = vmatmul.mubr.bf16.gmra.mrb[0].mxu0 %v2941
      %v3055 = vpop.f32.mrb[0].mxu0
      %v3056 = vadd.f32 0.0, %v3055
      %v3057 = vpop.f32.mrb[0].mxu0
      %v3058 = vpop.f32.mrb[0].mxu0
      %v3059 = vadd.f32 0.0, %v3058
      %v3060 = vpop.f32.mrb[0].mxu0
      %3061 = vmatprep.mubr.bf16.mxu0 0
      %3062 = vmatmul.mubr.bf16.gmra.mrb[0].mxu0 %v2942
      %v3063 = vpop.f32.mrb[0].mxu0
      %v3064 = vadd.f32 0.0, %v3063
      %v3065 = vpop.f32.mrb[0].mxu0
      %v3066 = vpop.f32.mrb[0].mxu0
      %v3067 = vadd.f32 0.0, %v3066
      %v3068 = vpop.f32.mrb[0].mxu0
      %3069 = vmatprep.mubr.bf16.mxu0 0
      %3070 = vmatmul.mubr.bf16.gmra.mrb[0].mxu0 %v2943
      %v3071 = vpop.f32.mrb[0].mxu0
      %v3072 = vadd.f32 0.0, %v3071
      %v3073 = vpop.f32.mrb[0].mxu0
      %v3074 = vpop.f32.mrb[0].mxu0
      %v3075 = vadd.f32 0.0, %v3074
      %v3076 = vpop.f32.mrb[0].mxu0
      %3077 = vmatprep.mubr.bf16.mxu0 0
      %3078 = vmatmul.mubr.bf16.gmra.mrb[0].mxu0 %v2944
      %v3079 = vpop.f32.mrb[0].mxu0
      %v3080 = vadd.f32 0.0, %v3079
      %v3081 = vpop.f32.mrb[0].mxu0
      %v3082 = vpop.f32.mrb[0].mxu0
      %v3083 = vadd.f32 0.0, %v3082
      %v3084 = vpop.f32.mrb[0].mxu0
      %3085 = vmatprep.mubr.bf16.mxu0 0
      %3086 = vmatmul.mubr.bf16.gmra.mrb[0].mxu0 %v2945
      %v3087 = vpop.f32.mrb[0].mxu0
      %v3088 = vadd.f32 0.0, %v3087
      %v3089 = vpop.f32.mrb[0].mxu0
      %v3090 = vpop.f32.mrb[0].mxu0
      %v3091 = vadd.f32 0.0, %v3090
      %v3092 = vpop.f32.mrb[0].mxu0
      %3093 = vmatprep.mubr.bf16.mxu0 0
      %3094 = vmatmul.mubr.bf16.gmra.mrb[0].mxu0 %v2946
      %v3095 = vpop.f32.mrb[0].mxu0
      %v3096 = vadd.f32 0.0, %v3095
      %v3097 = vpop.f32.mrb[0].mxu0
      %v3098 = vpop.f32.mrb[0].mxu0
      %v3099 = vadd.f32 0.0, %v3098
      %v3100 = vpop.f32.mrb[0].mxu0
      %3101 = vmatprep.mubr.bf16.mxu0 0
      %3102 = vmatmul.mubr.bf16.gmra.mrb[0].mxu0 %v2947
      %v3103 = vpop.f32.mrb[0].mxu0
      %v3104 = vadd.f32 0.0, %v3103
      %v3105 = vpop.f32.mrb[0].mxu0
      %v3106 = vpop.f32.mrb[0].mxu0
      %v3107 = vadd.f32 0.0, %v3106
      %v3108 = vpop.f32.mrb[0].mxu0
      %3109 = vmatprep.mubr.bf16.mxu0 0
      %3110 = vmatmul.mubr.bf16.gmra.mrb[0].mxu0 %v2948
      %v3111 = vpop.f32.mrb[0].mxu0
      %v3112 = vadd.f32 0.0, %v3111
      %v3113 = vpop.f32.mrb[0].mxu0
      %v3114 = vpop.f32.mrb[0].mxu0
      %v3115 = vadd.f32 0.0, %v3114
      %v3116 = vpop.f32.mrb[0].mxu0
      %3117 = vmatprep.mubr.bf16.mxu0 0
      %3118 = vmatmul.mubr.bf16.gmra.mrb[0].mxu0 %v2949
      %v3119 = vpop.f32.mrb[0].mxu0
      %v3120 = vadd.f32 0.0, %v3119
      %v3121 = vpop.f32.mrb[0].mxu0
      %v3122 = vpop.f32.mrb[0].mxu0
      %v3123 = vadd.f32 0.0, %v3122
      %v3124 = vpop.f32.mrb[0].mxu0
      %3125 = vmatprep.mubr.bf16.mxu0 0
      %3126 = vmatmul.mubr.bf16.gmra.mrb[0].mxu0 %v2950
      %v3127 = vpop.f32.mrb[0].mxu0
      %v3128 = vadd.f32 0.0, %v3127
      %v3129 = vpop.f32.mrb[0].mxu0
      %v3130 = vpop.f32.mrb[0].mxu0
      %v3131 = vadd.f32 0.0, %v3130
      %v3132 = vpop.f32.mrb[0].mxu0
      %3133 = vmatprep.mubr.bf16.mxu0 0
      %3134 = vmatmul.mubr.bf16.gmra.mrb[0].mxu0 %v2951
      %v3135 = vpop.f32.mrb[0].mxu0
      %v3136 = vadd.f32 0.0, %v3135
      %v3137 = vpop.f32.mrb[0].mxu0
      %v3138 = vpop.f32.mrb[0].mxu0
      %v3139 = vadd.f32 0.0, %v3138
      %v3140 = vpop.f32.mrb[0].mxu0
      %3141 = vmatprep.mubr.bf16.mxu0 0
      %3142 = vmatmul.mubr.bf16.gmra.mrb[0].mxu0 %v2952
      %v3143 = vpop.f32.mrb[0].mxu0
      %v3144 = vadd.f32 0.0, %v3143
      %v3145 = vpop.f32.mrb[0].mxu0
      %v3146 = vpop.f32.mrb[0].mxu0
      %v3147 = vadd.f32 0.0, %v3146
      %v3148 = vpop.f32.mrb[0].mxu0
      %3149 = vmatprep.mubr.bf16.mxu0 0
      %3150 = vmatmul.mubr.bf16.gmra.mrb[0].mxu0 %v2953
      %v3151 = vpop.f32.mrb[0].mxu0
      %v3152 = vadd.f32 0.0, %v3151
      %v3153 = vpop.f32.mrb[0].mxu0
      %v3154 = vpop.f32.mrb[0].mxu0
      %v3155 = vadd.f32 0.0, %v3154
      %v3156 = vpop.f32.mrb[0].mxu0
      %3157 = vmatprep.mubr.bf16.mxu0 0
      %3158 = vmatmul.mubr.bf16.gmra.mrb[0].mxu0 %v2954
      %v3159 = vpop.f32.mrb[0].mxu0
      %v3160 = vadd.f32 0.0, %v3159
      %v3161 = vpop.f32.mrb[0].mxu0
      %v3162 = vpop.f32.mrb[0].mxu0
      %v3163 = vadd.f32 0.0, %v3162
      %v3164 = vpop.f32.mrb[0].mxu0
      %3165 = vmatprep.mubr.bf16.mxu0 0
      %3166 = vmatmul.mubr.bf16.gmra.mrb[0].mxu0 %v2955
      %v3167 = vpop.f32.mrb[0].mxu0
      %v3168 = vadd.f32 0.0, %v3167
      %v3169 = vpop.f32.mrb[0].mxu0
      %v3170 = vpop.f32.mrb[0].mxu0
      %v3171 = vadd.f32 0.0, %v3170
      %v3172 = vpop.f32.mrb[0].mxu0
      %3173 = vmatprep.mubr.bf16.mxu0 0
      %3174 = vmatmul.mubr.bf16.gmra.mrb[0].mxu0 %v2956
      %v3175 = vpop.f32.mrb[0].mxu0
      %v3176 = vadd.f32 0.0, %v3175
      %v3177 = vpop.f32.mrb[0].mxu0
      %v3178 = vpop.f32.mrb[0].mxu0
      %v3179 = vadd.f32 0.0, %v3178
      %v3180 = vpop.f32.mrb[0].mxu0
      %3181 = vdwg.mxu0
      %v3182 = vld [vmem:[%s8] sm:$0x1]
      %v3184 = vlaneseq
      %v3185 = vshrl.u32 %v3184, 7
      %v3186 = vsub.s32 0, %v3185
      %v3187 = vrot.slane %v3182, %v3186
      %v3189 = vmul.f32 %v3056, %v3187
      %v3190 = vmul.f32 %v3059, %v3187
      %v3191 = vmul.f32 %v3064, %v3187
      %v3192 = vmul.f32 %v3067, %v3187
      %v3193 = vmul.f32 %v3072, %v3187
      %v3194 = vmul.f32 %v3075, %v3187
      %v3195 = vmul.f32 %v3080, %v3187
      %v3196 = vmul.f32 %v3083, %v3187
      %v3197 = vmul.f32 %v3088, %v3187
      %v3198 = vmul.f32 %v3091, %v3187
      %v3199 = vmul.f32 %v3096, %v3187
      %v3200 = vmul.f32 %v3099, %v3187
      %v3201 = vmul.f32 %v3104, %v3187
      %v3202 = vmul.f32 %v3107, %v3187
      %v3203 = vmul.f32 %v3112, %v3187
      %v3204 = vmul.f32 %v3115, %v3187
      %v3205 = vmul.f32 %v3120, %v3187
      %v3206 = vmul.f32 %v3123, %v3187
      %v3207 = vmul.f32 %v3128, %v3187
      %v3208 = vmul.f32 %v3131, %v3187
      %v3209 = vmul.f32 %v3136, %v3187
      %v3210 = vmul.f32 %v3139, %v3187
      %v3211 = vmul.f32 %v3144, %v3187
      %v3212 = vmul.f32 %v3147, %v3187
      %v3213 = vmul.f32 %v3152, %v3187
      %v3214 = vmul.f32 %v3155, %v3187
      %v3215 = vmul.f32 %v3160, %v3187
      %v3216 = vmul.f32 %v3163, %v3187
      %v3217 = vmul.f32 %v3168, %v3187
      %v3218 = vmul.f32 %v3171, %v3187
      %v3219 = vmul.f32 %v3176, %v3187
      %v3220 = vmul.f32 %v3179, %v3187
      %v3221 = vld [vmem:[%s9] sm:$0x1]
      %v3223 = vlaneseq
      %v3224 = vshrl.u32 %v3223, 7
      %v3225 = vsub.s32 0, %v3224
      %v3226 = vrot.slane %v3221, %v3225
      %v3228 = vadd.f32 %v3189, %v3226
      %v3229 = vadd.f32 %v3190, %v3226
      %v3230 = vadd.f32 %v3191, %v3226
      %v3231 = vadd.f32 %v3192, %v3226
      %v3232 = vadd.f32 %v3193, %v3226
      %v3233 = vadd.f32 %v3194, %v3226
      %v3234 = vadd.f32 %v3195, %v3226
      %v3235 = vadd.f32 %v3196, %v3226
      %v3236 = vadd.f32 %v3197, %v3226
      %v3237 = vadd.f32 %v3198, %v3226
      %v3238 = vadd.f32 %v3199, %v3226
      %v3239 = vadd.f32 %v3200, %v3226
      %v3240 = vadd.f32 %v3201, %v3226
      %v3241 = vadd.f32 %v3202, %v3226
      %v3242 = vadd.f32 %v3203, %v3226
      %v3243 = vadd.f32 %v3204, %v3226
      %v3244 = vadd.f32 %v3205, %v3226
      %v3245 = vadd.f32 %v3206, %v3226
      %v3246 = vadd.f32 %v3207, %v3226
      %v3247 = vadd.f32 %v3208, %v3226
      %v3248 = vadd.f32 %v3209, %v3226
      %v3249 = vadd.f32 %v3210, %v3226
      %v3250 = vadd.f32 %v3211, %v3226
      %v3251 = vadd.f32 %v3212, %v3226
      %v3252 = vadd.f32 %v3213, %v3226
      %v3253 = vadd.f32 %v3214, %v3226
      %v3254 = vadd.f32 %v3215, %v3226
      %v3255 = vadd.f32 %v3216, %v3226
      %v3256 = vadd.f32 %v3217, %v3226
      %v3257 = vadd.f32 %v3218, %v3226
      %v3258 = vadd.f32 %v3219, %v3226
      %v3259 = vadd.f32 %v3220, %v3226
      %v3260 = vunpack.c.l.bf16 %v361
      %v3261 = vunpack.c.l.bf16 %v362
      %v3262 = vunpack.c.l.bf16 %v363
      %v3263 = vunpack.c.l.bf16 %v364
      %v3264 = vunpack.c.l.bf16 %v365
      %v3265 = vunpack.c.l.bf16 %v366
      %v3266 = vunpack.c.l.bf16 %v367
      %v3267 = vunpack.c.l.bf16 %v368
      %v3268 = vunpack.c.l.bf16 %v369
      %v3269 = vunpack.c.l.bf16 %v370
      %v3270 = vunpack.c.l.bf16 %v371
      %v3271 = vunpack.c.l.bf16 %v372
      %v3272 = vunpack.c.l.bf16 %v373
      %v3273 = vunpack.c.l.bf16 %v374
      %v3274 = vunpack.c.l.bf16 %v375
      %v3275 = vunpack.c.l.bf16 %v376
      %v3276 = vunpack.c.l.bf16 %v377
      %v3277 = vunpack.c.l.bf16 %v378
      %v3278 = vunpack.c.l.bf16 %v379
      %v3279 = vunpack.c.l.bf16 %v380
      %v3280 = vunpack.c.l.bf16 %v381
      %v3281 = vunpack.c.l.bf16 %v382
      %v3282 = vunpack.c.l.bf16 %v383
      %v3283 = vunpack.c.l.bf16 %v384
      %v3284 = vunpack.c.l.bf16 %v385
      %v3285 = vunpack.c.l.bf16 %v386
      %v3286 = vunpack.c.l.bf16 %v387
      %v3287 = vunpack.c.l.bf16 %v388
      %v3288 = vunpack.c.l.bf16 %v389
      %v3289 = vunpack.c.l.bf16 %v390
      %v3290 = vunpack.c.l.bf16 %v391
      %v3291 = vunpack.c.l.bf16 %v392
      %v3292 = vadd.f32 %v3228, %v3260
      %v3293 = vadd.f32 %v3229, %v3261
      %v3294 = vadd.f32 %v3230, %v3262
      %v3295 = vadd.f32 %v3231, %v3263
      %v3296 = vadd.f32 %v3232, %v3264
      %v3297 = vadd.f32 %v3233, %v3265
      %v3298 = vadd.f32 %v3234, %v3266
      %v3299 = vadd.f32 %v3235, %v3267
      %v3300 = vadd.f32 %v3236, %v3268
      %v3301 = vadd.f32 %v3237, %v3269
      %v3302 = vadd.f32 %v3238, %v3270
      %v3303 = vadd.f32 %v3239, %v3271
      %v3304 = vadd.f32 %v3240, %v3272
      %v3305 = vadd.f32 %v3241, %v3273
      %v3306 = vadd.f32 %v3242, %v3274
      %v3307 = vadd.f32 %v3243, %v3275
      %v3308 = vadd.f32 %v3244, %v3276
      %v3309 = vadd.f32 %v3245, %v3277
      %v3310 = vadd.f32 %v3246, %v3278
      %v3311 = vadd.f32 %v3247, %v3279
      %v3312 = vadd.f32 %v3248, %v3280
      %v3313 = vadd.f32 %v3249, %v3281
      %v3314 = vadd.f32 %v3250, %v3282
      %v3315 = vadd.f32 %v3251, %v3283
      %v3316 = vadd.f32 %v3252, %v3284
      %v3317 = vadd.f32 %v3253, %v3285
      %v3318 = vadd.f32 %v3254, %v3286
      %v3319 = vadd.f32 %v3255, %v3287
      %v3320 = vadd.f32 %v3256, %v3288
      %v3321 = vadd.f32 %v3257, %v3289
      %v3322 = vadd.f32 %v3258, %v3290
      %v3323 = vadd.f32 %v3259, %v3291
      %v3324 = vmax.f32 %v3292, 0.0
      %v3325 = vmax.f32 %v3293, 0.0
      %v3326 = vmax.f32 %v3294, 0.0
      %v3327 = vmax.f32 %v3295, 0.0
      %v3328 = vmax.f32 %v3296, 0.0
      %v3329 = vmax.f32 %v3297, 0.0
      %v3330 = vmax.f32 %v3298, 0.0
      %v3331 = vmax.f32 %v3299, 0.0
      %v3332 = vmax.f32 %v3300, 0.0
      %v3333 = vmax.f32 %v3301, 0.0
      %v3334 = vmax.f32 %v3302, 0.0
      %v3335 = vmax.f32 %v3303, 0.0
      %v3336 = vmax.f32 %v3304, 0.0
      %v3337 = vmax.f32 %v3305, 0.0
      %v3338 = vmax.f32 %v3306, 0.0
      %v3339 = vmax.f32 %v3307, 0.0
      %v3340 = vmax.f32 %v3308, 0.0
      %v3341 = vmax.f32 %v3309, 0.0
      %v3342 = vmax.f32 %v3310, 0.0
      %v3343 = vmax.f32 %v3311, 0.0
      %v3344 = vmax.f32 %v3312, 0.0
      %v3345 = vmax.f32 %v3313, 0.0
      %v3346 = vmax.f32 %v3314, 0.0
      %v3347 = vmax.f32 %v3315, 0.0
      %v3348 = vmax.f32 %v3316, 0.0
      %v3349 = vmax.f32 %v3317, 0.0
      %v3350 = vmax.f32 %v3318, 0.0
      %v3351 = vmax.f32 %v3319, 0.0
      %v3352 = vmax.f32 %v3320, 0.0
      %v3353 = vmax.f32 %v3321, 0.0
      %v3354 = vmax.f32 %v3322, 0.0
      %v3355 = vmax.f32 %v3323, 0.0
      %3356 = vst.msk [vmem:[%s359] sm:$0xff] %vm481, %v3324
      %3357 = vst.msk [vmem:[%s359 + $0x8] sm:$0xff] %vm481, %v3325
      %3358 = vst.msk [vmem:[%s359 + $0x10] sm:$0xff] %vm481, %v3326
      %3359 = vst.msk [vmem:[%s359 + $0x18] sm:$0xff] %vm481, %v3327
      %3360 = vst.msk [vmem:[%s359 + $0x20] sm:$0xff] %vm481, %v3328
      %3361 = vst.msk [vmem:[%s359 + $0x28] sm:$0xff] %vm481, %v3329
      %3362 = vst.msk [vmem:[%s359 + $0x30] sm:$0xff] %vm481, %v3330
      %3363 = vst.msk [vmem:[%s359 + $0x38] sm:$0xff] %vm481, %v3331
      %3364 = vst.msk [vmem:[%s359 + $0x40] sm:$0xff] %vm481, %v3332
      %3365 = vst.msk [vmem:[%s359 + $0x48] sm:$0xff] %vm481, %v3333
      %3366 = vst.msk [vmem:[%s359 + $0x50] sm:$0xff] %vm481, %v3334
      %3367 = vst.msk [vmem:[%s359 + $0x58] sm:$0xff] %vm481, %v3335
      %3368 = vst.msk [vmem:[%s359 + $0x60] sm:$0xff] %vm481, %v3336
      %3369 = vst.msk [vmem:[%s359 + $0x68] sm:$0xff] %vm481, %v3337
      %3370 = vst.msk [vmem:[%s359 + $0x70] sm:$0xff] %vm481, %v3338
      %3371 = vst.msk [vmem:[%s359 + $0x78] sm:$0xff] %vm481, %v3339
      %3372 = vst.msk [vmem:[%s359 + $0x80] sm:$0xff] %vm481, %v3340
      %3373 = vst.msk [vmem:[%s359 + $0x88] sm:$0xff] %vm481, %v3341
      %3374 = vst.msk [vmem:[%s359 + $0x90] sm:$0xff] %vm481, %v3342
      %3375 = vst.msk [vmem:[%s359 + $0x98] sm:$0xff] %vm481, %v3343
      %3376 = vst.msk [vmem:[%s359 + $0xa0] sm:$0xff] %vm481, %v3344
      %3377 = vst.msk [vmem:[%s359 + $0xa8] sm:$0xff] %vm481, %v3345
      %3378 = vst.msk [vmem:[%s359 + $0xb0] sm:$0xff] %vm481, %v3346
      %3379 = vst.msk [vmem:[%s359 + $0xb8] sm:$0xff] %vm481, %v3347
      %3380 = vst.msk [vmem:[%s359 + $0xc0] sm:$0xff] %vm481, %v3348
      %3381 = vst.msk [vmem:[%s359 + $0xc8] sm:$0xff] %vm481, %v3349
      %3382 = vst.msk [vmem:[%s359 + $0xd0] sm:$0xff] %vm481, %v3350
      %3383 = vst.msk [vmem:[%s359 + $0xd8] sm:$0xff] %vm481, %v3351
      %3384 = vst.msk [vmem:[%s359 + $0xe0] sm:$0xff] %vm481, %v3352
      %3385 = vst.msk [vmem:[%s359 + $0xe8] sm:$0xff] %vm481, %v3353
      %3386 = vst.msk [vmem:[%s359 + $0xf0] sm:$0xff] %vm481, %v3354
      %3387 = vst.msk [vmem:[%s359 + $0xf8] sm:$0xff] %vm481, %v3355
      %p3388 = scmp.lt.s32.totalorder %s21, 1
      %s3389 = scalar_select %p3388, %s21, 1
      %s3390 = smul.addr %s3389, 32
      %s3391 = smul.addr %s3390, 8
      %s3392 = scalar_lea.vmem %s10, %s3391
      // Predicated region
      $region61: #{bottleneck_forward.1} parent=59 // pred_check
        %p3393 = pneg %p254
      $region62: #{bottleneck_forward.1} parent=59 // pred_check_branch
        %3395 = sbr.rel (%p3393) target = $region64
      $region63: #{bottleneck_forward.1} parent=59 // pred_region
        _
      $region64: #{bottleneck_forward.1} parent=59 // pred_fallthru
        _
    $region60: #{bottleneck_forward.1} parent=5 // pred_fallthru
      _
    %p3396 = scmp.le.s32.totalorder 2, %s16
    // Predicated region
    $region65: #{bottleneck_forward.1} parent=5 // pred_check
      %p3397 = pneg %p3396
    $region66: #{bottleneck_forward.1} parent=5 // pred_check_branch
      %3399 = sbr.rel (%p3397) target = $region68
    $region67: #{bottleneck_forward.1} parent=5 // pred_region
      %s3400 = ssub.s32 %s16, 2
      // Predicated region
      $region69: #{bottleneck_forward.1} parent=67 // pred_check
        %p3401 = pneg %p260
      $region70: #{bottleneck_forward.1} parent=67 // pred_check_branch
        %3403 = sbr.rel (%p3401) target = $region72
      $region71: #{bottleneck_forward.1} parent=67 // pred_region
        %p3404 = scmp.lt.s32.totalorder %s22, 1
        %s3405 = scalar_select %p3404, %s22, 1
        %s3406 = smul.addr %s3405, 32
        %s3407 = smul.addr %s3406, 8
        %s3408 = scalar_lea.vmem %s10, %s3407
      $region72: #{bottleneck_forward.1} parent=67 // pred_fallthru
        _
    $region68: #{bottleneck_forward.1} parent=5 // pred_fallthru
      _
  $region6: #{bottleneck_forward.1} parent=0 // loop_footer
    %s20 = sadd.s32 1, %s16
  $region7: #{bottleneck_forward.1} parent=0 // loop_footer_branch
    %15 = sbr.rel target = $region3
  $region8: #{bottleneck_forward.1} parent=0 // loop_exit
    _

</llo_original>
